<compile_context>
chip_gen: v5e
topology: v5e:2x2
jax: 0.10.0
libtpu: 0.0.40
codegen_flags: <defaults>
</compile_context>

<pallas_src>
import jax
import jax.numpy as jnp
from jax import lax
from jax.experimental import pallas as pl
from jax.experimental.pallas import tpu as pltpu

EPS = 1e-5


# -----------------------------------------------------------------------------
# Fully fused Bottleneck kernel (single grid step; everything resident in VMEM).
#   x_ref : (M, Cin)        flattened NHWC pixels, M = N*H*W
#   g1/b1 : (1, Cin)        BN1 gamma / beta
#   w1    : (Cin, Cmid)     1x1 conv weight
#   g2/b2 : (1, Cmid)       BN2 gamma / beta
#   w2    : (9, Cmid, G)    3x3 conv weight, tap-major (k = 3*dy + dx), HWIO order
#   o_ref : (M, G + Cin)    fused concat output: [:, :G] = conv2(y), [:, G:] = x
#   pad_ref: (N, H+2, W+2, Cmid) VMEM scratch for the zero-padded activation
# -----------------------------------------------------------------------------
def _bottleneck_kernel(x_ref, g1_ref, b1_ref, w1_ref, g2_ref, b2_ref, w2_ref,
                       o_ref, pad_ref):
    N = pad_ref.shape[0]
    H = pad_ref.shape[1] - 2
    W = pad_ref.shape[2] - 2
    Cmid = pad_ref.shape[3]
    M, Cin = x_ref.shape
    G = w2_ref.shape[2]

    x = x_ref[...]                                           # (M, Cin) f32

    # ---- BN1 (training mode, biased variance) + ReLU, fused as scale/shift ----
    mean1 = jnp.mean(x, axis=0, keepdims=True)               # (1, Cin)
    xc = x - mean1
    var1 = jnp.mean(xc * xc, axis=0, keepdims=True)
    scale1 = g1_ref[...] * lax.rsqrt(var1 + EPS)
    shift1 = b1_ref[...] - mean1 * scale1
    a1 = jnp.maximum(x * scale1 + shift1, 0.0)               # (M, Cin)

    # ---- 1x1 conv == plain matmul over flattened pixels ----
    y = jnp.dot(a1, w1_ref[...], preferred_element_type=jnp.float32)  # (M, Cmid)

    # ---- BN2 stats computed in-kernel (no extra HBM pass over y) ----
    mean2 = jnp.mean(y, axis=0, keepdims=True)               # (1, Cmid)
    yc = y - mean2
    var2 = jnp.mean(yc * yc, axis=0, keepdims=True)
    scale2 = g2_ref[...] * lax.rsqrt(var2 + EPS)
    shift2 = b2_ref[...] - mean2 * scale2
    a2 = jnp.maximum(y * scale2 + shift2, 0.0).reshape(N, H, W, Cmid)

    # ---- 3x3 conv, padding=1, stride=1 ----
    # Stage the zero-padded activation once in scratch, then build all 9 shifted
    # windows as value slices of a single full load (no strided ref reads).
    pad_ref[...] = jnp.zeros_like(pad_ref)
    for n in range(N):                                       # static, N is small
        pad_ref[n, 1:H + 1, 1:W + 1, :] = a2[n]
    ap = pad_ref[...]                                        # (N, H+2, W+2, Cmid)

    w2 = w2_ref[...]                                         # (9, Cmid, G)
    acc = jnp.zeros((M, G), jnp.float32)
    for dy in range(3):
        for dx in range(3):
            win = ap[:, dy:dy + H, dx:dx + W, :].reshape(M, Cmid)
            acc = acc + jnp.dot(win, w2[3 * dy + dx],
                                preferred_element_type=jnp.float32)

    # ---- fused channel concat: out[..., :G] = conv2 result, out[..., G:] = x ----
    o_ref[:, 0:G] = acc
    o_ref[:, G:G + Cin] = x


# -----------------------------------------------------------------------------
# Wrapper: flatten NHWC pixels, reshape weights, single fused pallas_call.
# -----------------------------------------------------------------------------
def bottleneck_forward(x_nhwc, params):
    N, H, W, Cin = x_nhwc.shape
    w1 = params["w1"]                     # (Cin, Cmid)
    w2 = params["w2"]                     # (3, 3, Cmid, G) HWIO
    Cmid = w1.shape[1]
    G = w2.shape[3]
    M = N * H * W

    x_flat = x_nhwc.reshape(M, Cin)
    w2_taps = w2.reshape(9, Cmid, G)      # tap-major: k = 3*dy + dx
    g1 = params["gamma1"].reshape(1, Cin)
    b1 = params["beta1"].reshape(1, Cin)
    g2 = params["gamma2"].reshape(1, Cmid)
    b2 = params["beta2"].reshape(1, Cmid)

    out_flat = pl.pallas_call(
        _bottleneck_kernel,
        out_shape=jax.ShapeDtypeStruct((M, G + Cin), jnp.float32),
        grid=(1,),
        in_specs=[
            pl.BlockSpec((M, Cin), lambda i: (0, 0)),
            pl.BlockSpec((1, Cin), lambda i: (0, 0)),
            pl.BlockSpec((1, Cin), lambda i: (0, 0)),
            pl.BlockSpec((Cin, Cmid), lambda i: (0, 0)),
            pl.BlockSpec((1, Cmid), lambda i: (0, 0)),
            pl.BlockSpec((1, Cmid), lambda i: (0, 0)),
            pl.BlockSpec((9, Cmid, G), lambda i: (0, 0, 0)),
        ],
        out_specs=pl.BlockSpec((M, G + Cin), lambda i: (0, 0)),
        scratch_shapes=[pltpu.VMEM((N, H + 2, W + 2, Cmid), jnp.float32)],
    )(x_flat, g1, b1, w1, g2, b2, w2_taps)

    return out_flat.reshape(N, H, W, G + Cin)


# Pure-JAX reference (correctness check only).
def bottleneck_reference(x_nhwc, params):
    g1, b1, w1 = params["gamma1"], params["beta1"], params["w1"]
    g2, b2, w2 = params["gamma2"], params["beta2"], params["w2"]
    mean1 = jnp.mean(x_nhwc, axis=(0, 1, 2))
    var1 = jnp.var(x_nhwc, axis=(0, 1, 2))
    a1 = jnp.maximum((x_nhwc - mean1) / jnp.sqrt(var1 + EPS) * g1 + b1, 0.0)
    y = lax.conv_general_dilated(
        a1, w1[None, None, :, :], (1, 1), "VALID",
        dimension_numbers=("NHWC", "HWIO", "NHWC"))
    mean2 = jnp.mean(y, axis=(0, 1, 2))
    var2 = jnp.var(y, axis=(0, 1, 2))
    a2 = jnp.maximum((y - mean2) / jnp.sqrt(var2 + EPS) * g2 + b2, 0.0)
    y2 = lax.conv_general_dilated(
        a2, w2, (1, 1), "SAME", dimension_numbers=("NHWC", "HWIO", "NHWC"))
    return jnp.concatenate([y2, x_nhwc], axis=-1)


if __name__ == "__main__":
    in_planes, growth_rate = 4, 8
    cmid = 4 * growth_rate
    N, H, W = 2, 16, 16

    key = jax.random.PRNGKey(0)
    kx, kw1, kw2 = jax.random.split(key, 3)

    # NHWC input; equivalent to the NCHW (2, 4, 16, 16) input of the torch module.
    x = jax.random.normal(kx, (N, H, W, in_planes), dtype=jnp.float32)

    params = {
        # BatchNorm2d default init: gamma=1, beta=0.
        "gamma1": jnp.ones((in_planes,), jnp.float32),
        "beta1": jnp.zeros((in_planes,), jnp.float32),
        # conv1: 1x1, (Cin, Cmid)  <-> torch weight (Cmid, Cin, 1, 1) transposed.
        "w1": 0.1 * jax.random.normal(kw1, (in_planes, cmid), dtype=jnp.float32),
        "gamma2": jnp.ones((cmid,), jnp.float32),
        "beta2": jnp.zeros((cmid,), jnp.float32),
        # conv2: 3x3 HWIO (3, 3, Cmid, G) <-> torch weight (G, Cmid, 3, 3) transposed.
        "w2": 0.1 * jax.random.normal(kw2, (3, 3, cmid, growth_rate), dtype=jnp.float32),
    }

    out = jax.block_until_ready(bottleneck_forward(x, params))
    ref = jax.block_until_ready(bottleneck_reference(x, params))

    assert out.shape == (N, H, W, growth_rate + in_planes), out.shape
    assert jnp.allclose(out, ref, atol=1e-4, rtol=1e-4), "mismatch vs reference"

    print("KERNEL_OK")
</pallas_src>

<mosaic_0001>
module attributes {stable_mosaic.version = 11 : i64} {
  func.func @_bottleneck_kernel(%arg0: i32, %arg1: memref<512x4xf32, #tpu.memory_space<vmem>>, %arg2: memref<1x4xf32, #tpu.memory_space<vmem>>, %arg3: memref<1x4xf32, #tpu.memory_space<vmem>>, %arg4: memref<4x32xf32, #tpu.memory_space<vmem>>, %arg5: memref<1x32xf32, #tpu.memory_space<vmem>>, %arg6: memref<1x32xf32, #tpu.memory_space<vmem>>, %arg7: memref<9x32x8xf32, #tpu.memory_space<vmem>>, %arg8: memref<512x12xf32, #tpu.memory_space<vmem>>, %arg9: memref<2x18x18x32xf32, #tpu.memory_space<vmem>>) attributes {dimension_semantics = [#tpu.dimension_semantics<arbitrary>], iteration_bounds = array<i64: 1>, scalar_prefetch = 0 : i64, scratch_operands = 1 : i64, tpu.core_type = #tpu.core_type<tc>, window_params = [{pipeline_mode = #tpu.pipeline_mode<synchronous>, transform_indices = @transform_0, window_bounds = array<i64: 512, 4>}, {pipeline_mode = #tpu.pipeline_mode<synchronous>, transform_indices = @transform_1, window_bounds = array<i64: 1, 4>}, {pipeline_mode = #tpu.pipeline_mode<synchronous>, transform_indices = @transform_2, window_bounds = array<i64: 1, 4>}, {pipeline_mode = #tpu.pipeline_mode<synchronous>, transform_indices = @transform_3, window_bounds = array<i64: 4, 32>}, {pipeline_mode = #tpu.pipeline_mode<synchronous>, transform_indices = @transform_4, window_bounds = array<i64: 1, 32>}, {pipeline_mode = #tpu.pipeline_mode<synchronous>, transform_indices = @transform_5, window_bounds = array<i64: 1, 32>}, {pipeline_mode = #tpu.pipeline_mode<synchronous>, transform_indices = @transform_6, window_bounds = array<i64: 9, 32, 8>}, {pipeline_mode = #tpu.pipeline_mode<synchronous>, transform_indices = @transform_7, window_bounds = array<i64: 512, 12>}]} {
    %c0 = arith.constant 0 : index
    %c0_0 = arith.constant 0 : index
    %0 = vector.load %arg1[%c0, %c0_0] : memref<512x4xf32, #tpu.memory_space<vmem>>, vector<512x4xf32>
    %cst = arith.constant dense<0.000000e+00> : vector<4xf32>
    %1 = vector.multi_reduction <add>, %0, %cst [0] : vector<512x4xf32> to vector<4xf32>
    %2 = vector.shape_cast %1 : vector<4xf32> to vector<1x4xf32>
    %cst_1 = arith.constant 5.120000e+02 : f32
    %3 = vector.broadcast %cst_1 : f32 to vector<1x4xf32>
    %4 = arith.divf %2, %3 : vector<1x4xf32>
    %5 = vector.broadcast %4 : vector<1x4xf32> to vector<512x4xf32>
    %6 = arith.subf %0, %5 : vector<512x4xf32>
    %7 = arith.mulf %6, %6 : vector<512x4xf32>
    %cst_2 = arith.constant dense<0.000000e+00> : vector<4xf32>
    %8 = vector.multi_reduction <add>, %7, %cst_2 [0] : vector<512x4xf32> to vector<4xf32>
    %9 = vector.shape_cast %8 : vector<4xf32> to vector<1x4xf32>
    %cst_3 = arith.constant 5.120000e+02 : f32
    %10 = vector.broadcast %cst_3 : f32 to vector<1x4xf32>
    %11 = arith.divf %9, %10 : vector<1x4xf32>
    %c0_4 = arith.constant 0 : index
    %c0_5 = arith.constant 0 : index
    %12 = vector.load %arg2[%c0_4, %c0_5] : memref<1x4xf32, #tpu.memory_space<vmem>>, vector<1x4xf32>
    %cst_6 = arith.constant 9.99999974E-6 : f32
    %13 = vector.broadcast %cst_6 : f32 to vector<1x4xf32>
    %14 = arith.addf %11, %13 : vector<1x4xf32>
    %15 = math.rsqrt %14 : vector<1x4xf32>
    %16 = arith.mulf %12, %15 : vector<1x4xf32>
    %c0_7 = arith.constant 0 : index
    %c0_8 = arith.constant 0 : index
    %17 = vector.load %arg3[%c0_7, %c0_8] : memref<1x4xf32, #tpu.memory_space<vmem>>, vector<1x4xf32>
    %18 = arith.mulf %4, %16 : vector<1x4xf32>
    %19 = arith.subf %17, %18 : vector<1x4xf32>
    %20 = vector.broadcast %16 : vector<1x4xf32> to vector<512x4xf32>
    %21 = arith.mulf %0, %20 : vector<512x4xf32>
    %22 = vector.broadcast %19 : vector<1x4xf32> to vector<512x4xf32>
    %23 = arith.addf %21, %22 : vector<512x4xf32>
    %cst_9 = arith.constant 0.000000e+00 : f32
    %24 = vector.broadcast %cst_9 : f32 to vector<512x4xf32>
    %25 = arith.maximumf %23, %24 : vector<512x4xf32>
    %c0_10 = arith.constant 0 : index
    %c0_11 = arith.constant 0 : index
    %26 = vector.load %arg4[%c0_10, %c0_11] : memref<4x32xf32, #tpu.memory_space<vmem>>, vector<4x32xf32>
    %cst_12 = arith.constant dense<0.000000e+00> : vector<512x32xf32>
    %27 = tpu.matmul %25, %26, %cst_12 {dimension_numbers = #tpu.dot_dimension_numbers<[1], [0], [0], [1], [0, 0, 1, 1], [], []>} : vector<512x4xf32>, vector<4x32xf32>, vector<512x32xf32> -> vector<512x32xf32>
    %cst_13 = arith.constant dense<0.000000e+00> : vector<32xf32>
    %28 = vector.multi_reduction <add>, %27, %cst_13 [0] : vector<512x32xf32> to vector<32xf32>
    %29 = vector.shape_cast %28 : vector<32xf32> to vector<1x32xf32>
    %cst_14 = arith.constant 5.120000e+02 : f32
    %30 = vector.broadcast %cst_14 : f32 to vector<1x32xf32>
    %31 = arith.divf %29, %30 : vector<1x32xf32>
    %32 = vector.broadcast %31 : vector<1x32xf32> to vector<512x32xf32>
    %33 = arith.subf %27, %32 : vector<512x32xf32>
    %34 = arith.mulf %33, %33 : vector<512x32xf32>
    %cst_15 = arith.constant dense<0.000000e+00> : vector<32xf32>
    %35 = vector.multi_reduction <add>, %34, %cst_15 [0] : vector<512x32xf32> to vector<32xf32>
    %36 = vector.shape_cast %35 : vector<32xf32> to vector<1x32xf32>
    %cst_16 = arith.constant 5.120000e+02 : f32
    %37 = vector.broadcast %cst_16 : f32 to vector<1x32xf32>
    %38 = arith.divf %36, %37 : vector<1x32xf32>
    %c0_17 = arith.constant 0 : index
    %c0_18 = arith.constant 0 : index
    %39 = vector.load %arg5[%c0_17, %c0_18] : memref<1x32xf32, #tpu.memory_space<vmem>>, vector<1x32xf32>
    %cst_19 = arith.constant 9.99999974E-6 : f32
    %40 = vector.broadcast %cst_19 : f32 to vector<1x32xf32>
    %41 = arith.addf %38, %40 : vector<1x32xf32>
    %42 = math.rsqrt %41 : vector<1x32xf32>
    %43 = arith.mulf %39, %42 : vector<1x32xf32>
    %c0_20 = arith.constant 0 : index
    %c0_21 = arith.constant 0 : index
    %44 = vector.load %arg6[%c0_20, %c0_21] : memref<1x32xf32, #tpu.memory_space<vmem>>, vector<1x32xf32>
    %45 = arith.mulf %31, %43 : vector<1x32xf32>
    %46 = arith.subf %44, %45 : vector<1x32xf32>
    %47 = vector.broadcast %43 : vector<1x32xf32> to vector<512x32xf32>
    %48 = arith.mulf %27, %47 : vector<512x32xf32>
    %49 = vector.broadcast %46 : vector<1x32xf32> to vector<512x32xf32>
    %50 = arith.addf %48, %49 : vector<512x32xf32>
    %cst_22 = arith.constant 0.000000e+00 : f32
    %51 = vector.broadcast %cst_22 : f32 to vector<512x32xf32>
    %52 = arith.maximumf %50, %51 : vector<512x32xf32>
    %53 = vector.shape_cast %52 : vector<512x32xf32> to vector<2x16x16x32xf32>
    %cst_23 = arith.constant 0.000000e+00 : f32
    %54 = vector.broadcast %cst_23 : f32 to vector<2x18x18x32xf32>
    %c0_24 = arith.constant 0 : index
    %c0_25 = arith.constant 0 : index
    %c0_26 = arith.constant 0 : index
    %c0_27 = arith.constant 0 : index
    %55 = vector.load %arg9[%c0_24, %c0_25, %c0_26, %c0_27] : memref<2x18x18x32xf32, #tpu.memory_space<vmem>>, vector<2x18x18x32xf32>
    tpu.vector_store %arg9[%c0_24, %c0_25, %c0_26, %c0_27], %54 {strides = array<i32>} : memref<2x18x18x32xf32, #tpu.memory_space<vmem>>, vector<2x18x18x32xf32>,
    %56 = vector.extract_strided_slice %53 {offsets = [0, 0, 0, 0], sizes = [1, 16, 16, 32], strides = [1, 1, 1, 1]} : vector<2x16x16x32xf32> to vector<1x16x16x32xf32>
    %57 = vector.shape_cast %56 : vector<1x16x16x32xf32> to vector<16x16x32xf32>
    %c0_28 = arith.constant 0 : index
    %c1 = arith.constant 1 : index
    %c1_29 = arith.constant 1 : index
    %c0_30 = arith.constant 0 : index
    %58 = vector.load %arg9[%c0_28, %c1, %c1_29, %c0_30] : memref<2x18x18x32xf32, #tpu.memory_space<vmem>>, vector<1x16x16x32xf32>
    %59 = vector.shape_cast %58 : vector<1x16x16x32xf32> to vector<16x16x32xf32>
    %60 = vector.shape_cast %57 : vector<16x16x32xf32> to vector<1x16x16x32xf32>
    tpu.vector_store %arg9[%c0_28, %c1, %c1_29, %c0_30], %60 {strides = array<i32>} : memref<2x18x18x32xf32, #tpu.memory_space<vmem>>, vector<1x16x16x32xf32>,
    %61 = vector.extract_strided_slice %53 {offsets = [1, 0, 0, 0], sizes = [1, 16, 16, 32], strides = [1, 1, 1, 1]} : vector<2x16x16x32xf32> to vector<1x16x16x32xf32>
    %62 = vector.shape_cast %61 : vector<1x16x16x32xf32> to vector<16x16x32xf32>
    %c1_31 = arith.constant 1 : index
    %c1_32 = arith.constant 1 : index
    %c1_33 = arith.constant 1 : index
    %c0_34 = arith.constant 0 : index
    %63 = vector.load %arg9[%c1_31, %c1_32, %c1_33, %c0_34] : memref<2x18x18x32xf32, #tpu.memory_space<vmem>>, vector<1x16x16x32xf32>
    %64 = vector.shape_cast %63 : vector<1x16x16x32xf32> to vector<16x16x32xf32>
    %65 = vector.shape_cast %62 : vector<16x16x32xf32> to vector<1x16x16x32xf32>
    tpu.vector_store %arg9[%c1_31, %c1_32, %c1_33, %c0_34], %65 {strides = array<i32>} : memref<2x18x18x32xf32, #tpu.memory_space<vmem>>, vector<1x16x16x32xf32>,
    %c0_35 = arith.constant 0 : index
    %c0_36 = arith.constant 0 : index
    %c0_37 = arith.constant 0 : index
    %c0_38 = arith.constant 0 : index
    %66 = vector.load %arg9[%c0_35, %c0_36, %c0_37, %c0_38] : memref<2x18x18x32xf32, #tpu.memory_space<vmem>>, vector<2x18x18x32xf32>
    %c0_39 = arith.constant 0 : index
    %c0_40 = arith.constant 0 : index
    %c0_41 = arith.constant 0 : index
    %67 = vector.load %arg7[%c0_39, %c0_40, %c0_41] : memref<9x32x8xf32, #tpu.memory_space<vmem>>, vector<9x32x8xf32>
    %cst_42 = arith.constant 0.000000e+00 : f32
    %68 = vector.broadcast %cst_42 : f32 to vector<512x8xf32>
    %69 = vector.extract_strided_slice %66 {offsets = [0, 0, 0, 0], sizes = [2, 16, 16, 32], strides = [1, 1, 1, 1]} : vector<2x18x18x32xf32> to vector<2x16x16x32xf32>
    %70 = vector.shape_cast %69 : vector<2x16x16x32xf32> to vector<512x32xf32>
    %71 = vector.extract_strided_slice %67 {offsets = [0, 0, 0], sizes = [1, 32, 8], strides = [1, 1, 1]} : vector<9x32x8xf32> to vector<1x32x8xf32>
    %72 = vector.shape_cast %71 : vector<1x32x8xf32> to vector<32x8xf32>
    %cst_43 = arith.constant dense<0.000000e+00> : vector<512x8xf32>
    %73 = tpu.matmul %70, %72, %cst_43 {dimension_numbers = #tpu.dot_dimension_numbers<[1], [0], [0], [1], [0, 0, 1, 1], [], []>} : vector<512x32xf32>, vector<32x8xf32>, vector<512x8xf32> -> vector<512x8xf32>
    %74 = arith.addf %68, %73 : vector<512x8xf32>
    %75 = vector.extract_strided_slice %66 {offsets = [0, 0, 1, 0], sizes = [2, 16, 16, 32], strides = [1, 1, 1, 1]} : vector<2x18x18x32xf32> to vector<2x16x16x32xf32>
    %76 = vector.shape_cast %75 : vector<2x16x16x32xf32> to vector<512x32xf32>
    %77 = vector.extract_strided_slice %67 {offsets = [1, 0, 0], sizes = [1, 32, 8], strides = [1, 1, 1]} : vector<9x32x8xf32> to vector<1x32x8xf32>
    %78 = vector.shape_cast %77 : vector<1x32x8xf32> to vector<32x8xf32>
    %cst_44 = arith.constant dense<0.000000e+00> : vector<512x8xf32>
    %79 = tpu.matmul %76, %78, %cst_44 {dimension_numbers = #tpu.dot_dimension_numbers<[1], [0], [0], [1], [0, 0, 1, 1], [], []>} : vector<512x32xf32>, vector<32x8xf32>, vector<512x8xf32> -> vector<512x8xf32>
    %80 = arith.addf %74, %79 : vector<512x8xf32>
    %81 = vector.extract_strided_slice %66 {offsets = [0, 0, 2, 0], sizes = [2, 16, 16, 32], strides = [1, 1, 1, 1]} : vector<2x18x18x32xf32> to vector<2x16x16x32xf32>
    %82 = vector.shape_cast %81 : vector<2x16x16x32xf32> to vector<512x32xf32>
    %83 = vector.extract_strided_slice %67 {offsets = [2, 0, 0], sizes = [1, 32, 8], strides = [1, 1, 1]} : vector<9x32x8xf32> to vector<1x32x8xf32>
    %84 = vector.shape_cast %83 : vector<1x32x8xf32> to vector<32x8xf32>
    %cst_45 = arith.constant dense<0.000000e+00> : vector<512x8xf32>
    %85 = tpu.matmul %82, %84, %cst_45 {dimension_numbers = #tpu.dot_dimension_numbers<[1], [0], [0], [1], [0, 0, 1, 1], [], []>} : vector<512x32xf32>, vector<32x8xf32>, vector<512x8xf32> -> vector<512x8xf32>
    %86 = arith.addf %80, %85 : vector<512x8xf32>
    %87 = vector.extract_strided_slice %66 {offsets = [0, 1, 0, 0], sizes = [2, 16, 16, 32], strides = [1, 1, 1, 1]} : vector<2x18x18x32xf32> to vector<2x16x16x32xf32>
    %88 = vector.shape_cast %87 : vector<2x16x16x32xf32> to vector<512x32xf32>
    %89 = vector.extract_strided_slice %67 {offsets = [3, 0, 0], sizes = [1, 32, 8], strides = [1, 1, 1]} : vector<9x32x8xf32> to vector<1x32x8xf32>
    %90 = vector.shape_cast %89 : vector<1x32x8xf32> to vector<32x8xf32>
    %cst_46 = arith.constant dense<0.000000e+00> : vector<512x8xf32>
    %91 = tpu.matmul %88, %90, %cst_46 {dimension_numbers = #tpu.dot_dimension_numbers<[1], [0], [0], [1], [0, 0, 1, 1], [], []>} : vector<512x32xf32>, vector<32x8xf32>, vector<512x8xf32> -> vector<512x8xf32>
    %92 = arith.addf %86, %91 : vector<512x8xf32>
    %93 = vector.extract_strided_slice %66 {offsets = [0, 1, 1, 0], sizes = [2, 16, 16, 32], strides = [1, 1, 1, 1]} : vector<2x18x18x32xf32> to vector<2x16x16x32xf32>
    %94 = vector.shape_cast %93 : vector<2x16x16x32xf32> to vector<512x32xf32>
    %95 = vector.extract_strided_slice %67 {offsets = [4, 0, 0], sizes = [1, 32, 8], strides = [1, 1, 1]} : vector<9x32x8xf32> to vector<1x32x8xf32>
    %96 = vector.shape_cast %95 : vector<1x32x8xf32> to vector<32x8xf32>
    %cst_47 = arith.constant dense<0.000000e+00> : vector<512x8xf32>
    %97 = tpu.matmul %94, %96, %cst_47 {dimension_numbers = #tpu.dot_dimension_numbers<[1], [0], [0], [1], [0, 0, 1, 1], [], []>} : vector<512x32xf32>, vector<32x8xf32>, vector<512x8xf32> -> vector<512x8xf32>
    %98 = arith.addf %92, %97 : vector<512x8xf32>
    %99 = vector.extract_strided_slice %66 {offsets = [0, 1, 2, 0], sizes = [2, 16, 16, 32], strides = [1, 1, 1, 1]} : vector<2x18x18x32xf32> to vector<2x16x16x32xf32>
    %100 = vector.shape_cast %99 : vector<2x16x16x32xf32> to vector<512x32xf32>
    %101 = vector.extract_strided_slice %67 {offsets = [5, 0, 0], sizes = [1, 32, 8], strides = [1, 1, 1]} : vector<9x32x8xf32> to vector<1x32x8xf32>
    %102 = vector.shape_cast %101 : vector<1x32x8xf32> to vector<32x8xf32>
    %cst_48 = arith.constant dense<0.000000e+00> : vector<512x8xf32>
    %103 = tpu.matmul %100, %102, %cst_48 {dimension_numbers = #tpu.dot_dimension_numbers<[1], [0], [0], [1], [0, 0, 1, 1], [], []>} : vector<512x32xf32>, vector<32x8xf32>, vector<512x8xf32> -> vector<512x8xf32>
    %104 = arith.addf %98, %103 : vector<512x8xf32>
    %105 = vector.extract_strided_slice %66 {offsets = [0, 2, 0, 0], sizes = [2, 16, 16, 32], strides = [1, 1, 1, 1]} : vector<2x18x18x32xf32> to vector<2x16x16x32xf32>
    %106 = vector.shape_cast %105 : vector<2x16x16x32xf32> to vector<512x32xf32>
    %107 = vector.extract_strided_slice %67 {offsets = [6, 0, 0], sizes = [1, 32, 8], strides = [1, 1, 1]} : vector<9x32x8xf32> to vector<1x32x8xf32>
    %108 = vector.shape_cast %107 : vector<1x32x8xf32> to vector<32x8xf32>
    %cst_49 = arith.constant dense<0.000000e+00> : vector<512x8xf32>
    %109 = tpu.matmul %106, %108, %cst_49 {dimension_numbers = #tpu.dot_dimension_numbers<[1], [0], [0], [1], [0, 0, 1, 1], [], []>} : vector<512x32xf32>, vector<32x8xf32>, vector<512x8xf32> -> vector<512x8xf32>
    %110 = arith.addf %104, %109 : vector<512x8xf32>
    %111 = vector.extract_strided_slice %66 {offsets = [0, 2, 1, 0], sizes = [2, 16, 16, 32], strides = [1, 1, 1, 1]} : vector<2x18x18x32xf32> to vector<2x16x16x32xf32>
    %112 = vector.shape_cast %111 : vector<2x16x16x32xf32> to vector<512x32xf32>
    %113 = vector.extract_strided_slice %67 {offsets = [7, 0, 0], sizes = [1, 32, 8], strides = [1, 1, 1]} : vector<9x32x8xf32> to vector<1x32x8xf32>
    %114 = vector.shape_cast %113 : vector<1x32x8xf32> to vector<32x8xf32>
    %cst_50 = arith.constant dense<0.000000e+00> : vector<512x8xf32>
    %115 = tpu.matmul %112, %114, %cst_50 {dimension_numbers = #tpu.dot_dimension_numbers<[1], [0], [0], [1], [0, 0, 1, 1], [], []>} : vector<512x32xf32>, vector<32x8xf32>, vector<512x8xf32> -> vector<512x8xf32>
    %116 = arith.addf %110, %115 : vector<512x8xf32>
    %117 = vector.extract_strided_slice %66 {offsets = [0, 2, 2, 0], sizes = [2, 16, 16, 32], strides = [1, 1, 1, 1]} : vector<2x18x18x32xf32> to vector<2x16x16x32xf32>
    %118 = vector.shape_cast %117 : vector<2x16x16x32xf32> to vector<512x32xf32>
    %119 = vector.extract_strided_slice %67 {offsets = [8, 0, 0], sizes = [1, 32, 8], strides = [1, 1, 1]} : vector<9x32x8xf32> to vector<1x32x8xf32>
    %120 = vector.shape_cast %119 : vector<1x32x8xf32> to vector<32x8xf32>
    %cst_51 = arith.constant dense<0.000000e+00> : vector<512x8xf32>
    %121 = tpu.matmul %118, %120, %cst_51 {dimension_numbers = #tpu.dot_dimension_numbers<[1], [0], [0], [1], [0, 0, 1, 1], [], []>} : vector<512x32xf32>, vector<32x8xf32>, vector<512x8xf32> -> vector<512x8xf32>
    %122 = arith.addf %116, %121 : vector<512x8xf32>
    %c0_52 = arith.constant 0 : index
    %c0_53 = arith.constant 0 : index
    %123 = vector.load %arg8[%c0_52, %c0_53] : memref<512x12xf32, #tpu.memory_space<vmem>>, vector<512x8xf32>
    tpu.vector_store %arg8[%c0_52, %c0_53], %122 {strides = array<i32>} : memref<512x12xf32, #tpu.memory_space<vmem>>, vector<512x8xf32>,
    %c0_54 = arith.constant 0 : index
    %c8 = arith.constant 8 : index
    %124 = vector.load %arg8[%c0_54, %c8] : memref<512x12xf32, #tpu.memory_space<vmem>>, vector<512x4xf32>
    tpu.vector_store %arg8[%c0_54, %c8], %0 {strides = array<i32>} : memref<512x12xf32, #tpu.memory_space<vmem>>, vector<512x4xf32>,
    return
  }
  func.func @transform_0(%arg0: i32) -> (i32, i32) {
    %c0_i32 = arith.constant 0 : i32
    %c0_i32_0 = arith.constant 0 : i32
    %c0_i32_1 = arith.constant 0 : i32
    return %c0_i32, %c0_i32_0 : i32, i32
  }
  func.func @transform_1(%arg0: i32) -> (i32, i32) {
    %c0_i32 = arith.constant 0 : i32
    %c0_i32_0 = arith.constant 0 : i32
    %c0_i32_1 = arith.constant 0 : i32
    return %c0_i32, %c0_i32_0 : i32, i32
  }
  func.func @transform_2(%arg0: i32) -> (i32, i32) {
    %c0_i32 = arith.constant 0 : i32
    %c0_i32_0 = arith.constant 0 : i32
    %c0_i32_1 = arith.constant 0 : i32
    return %c0_i32, %c0_i32_0 : i32, i32
  }
  func.func @transform_3(%arg0: i32) -> (i32, i32) {
    %c0_i32 = arith.constant 0 : i32
    %c0_i32_0 = arith.constant 0 : i32
    %c0_i32_1 = arith.constant 0 : i32
    return %c0_i32, %c0_i32_0 : i32, i32
  }
  func.func @transform_4(%arg0: i32) -> (i32, i32) {
    %c0_i32 = arith.constant 0 : i32
    %c0_i32_0 = arith.constant 0 : i32
    %c0_i32_1 = arith.constant 0 : i32
    return %c0_i32, %c0_i32_0 : i32, i32
  }
  func.func @transform_5(%arg0: i32) -> (i32, i32) {
    %c0_i32 = arith.constant 0 : i32
    %c0_i32_0 = arith.constant 0 : i32
    %c0_i32_1 = arith.constant 0 : i32
    return %c0_i32, %c0_i32_0 : i32, i32
  }
  func.func @transform_6(%arg0: i32) -> (i32, i32, i32) {
    %c0_i32 = arith.constant 0 : i32
    %c0_i32_0 = arith.constant 0 : i32
    %c0_i32_1 = arith.constant 0 : i32
    %c0_i32_2 = arith.constant 0 : i32
    return %c0_i32, %c0_i32_0, %c0_i32_1 : i32, i32, i32
  }
  func.func @transform_7(%arg0: i32) -> (i32, i32) {
    %c0_i32 = arith.constant 0 : i32
    %c0_i32_0 = arith.constant 0 : i32
    %c0_i32_1 = arith.constant 0 : i32
    return %c0_i32, %c0_i32_0 : i32, i32
  }
}

</mosaic_0001>

<llo_original>
// kernel: tpu_custom_call.1
$region0: #{tpu_custom_call.1}
  #allocation0 [shape = 'u32[]', space=smem, size = 0x4, offset = 0x4, fixed_abs, tag = 'smem constant byte address 0x4 - core index']
  #allocation1 [shape = 'u32[72,128]{1,0:T(1,128)}', space=vmem, size = 0x9000, scoped, tag = 'internal scratch']
  #allocation2 [shape = 'f32[2,18,18,32]{3,2,1,0:T(8,128)}', space=vmem, size = 0x6c000, scoped, tag = 'scratch operand']
  %s0 = inlined_call_operand.vmem [shape: f32[512,4], index: 0, kind: input, shape index: {}]
  %s1 = inlined_call_operand.vmem [shape: f32[1,4], index: 1, kind: input, shape index: {}]
  %s2 = inlined_call_operand.vmem [shape: f32[1,4], index: 2, kind: input, shape index: {}]
  %s3 = inlined_call_operand.vmem [shape: f32[4,32], index: 3, kind: input, shape index: {}]
  %s4 = inlined_call_operand.vmem [shape: f32[1,32], index: 4, kind: input, shape index: {}]
  %s5 = inlined_call_operand.vmem [shape: f32[1,32], index: 5, kind: input, shape index: {}]
  %s6 = inlined_call_operand.vmem [shape: f32[9,32,8], index: 6, kind: input, shape index: {}]
  %s7 = inlined_call_operand.vmem [shape: f32[512,12], index: 7, kind: output, shape index: {}]
  %s8 = sld [smem:[#allocation0]]
  $region38: #{tpu_custom_call.1} parent=0
    _
  %s10 = ssub.s32 1, %s8
  %s11 = scalar_select 0, %s10, %s8
  // Predicated region
  $region2: #{tpu_custom_call.1} parent=0 // pred_check
    _
  $region3: #{tpu_custom_call.1} parent=0 // pred_check_branch
    %13 = sbr.rel (0) target = $region5
  $region4: #{tpu_custom_call.1} parent=0 // pred_region
    _
  $region5: #{tpu_custom_call.1} parent=0 // pred_fallthru
    _
  // Predicated region
  $region6: #{tpu_custom_call.1} parent=0 // pred_check
    _
  $region7: #{tpu_custom_call.1} parent=0 // pred_check_branch
    %15 = sbr.rel (0) target = $region9
  $region8: #{tpu_custom_call.1} parent=0 // pred_region
    _
  $region9: #{tpu_custom_call.1} parent=0 // pred_fallthru
    _
  // Predicated region
  $region10: #{tpu_custom_call.1} parent=0 // pred_check
    _
  $region11: #{tpu_custom_call.1} parent=0 // pred_check_branch
    %17 = sbr.rel (0) target = $region13
  $region12: #{tpu_custom_call.1} parent=0 // pred_region
    _
  $region13: #{tpu_custom_call.1} parent=0 // pred_fallthru
    _
  // Predicated region
  $region14: #{tpu_custom_call.1} parent=0 // pred_check
    _
  $region15: #{tpu_custom_call.1} parent=0 // pred_check_branch
    %19 = sbr.rel (0) target = $region17
  $region16: #{tpu_custom_call.1} parent=0 // pred_region
    _
  $region17: #{tpu_custom_call.1} parent=0 // pred_fallthru
    _
  // Predicated region
  $region18: #{tpu_custom_call.1} parent=0 // pred_check
    _
  $region19: #{tpu_custom_call.1} parent=0 // pred_check_branch
    %21 = sbr.rel (0) target = $region21
  $region20: #{tpu_custom_call.1} parent=0 // pred_region
    _
  $region21: #{tpu_custom_call.1} parent=0 // pred_fallthru
    _
  // Predicated region
  $region22: #{tpu_custom_call.1} parent=0 // pred_check
    _
  $region23: #{tpu_custom_call.1} parent=0 // pred_check_branch
    %23 = sbr.rel (0) target = $region25
  $region24: #{tpu_custom_call.1} parent=0 // pred_region
    _
  $region25: #{tpu_custom_call.1} parent=0 // pred_fallthru
    _
  // Predicated region
  $region26: #{tpu_custom_call.1} parent=0 // pred_check
    _
  $region27: #{tpu_custom_call.1} parent=0 // pred_check_branch
    %25 = sbr.rel (0) target = $region29
  $region28: #{tpu_custom_call.1} parent=0 // pred_region
    _
  $region29: #{tpu_custom_call.1} parent=0 // pred_fallthru
    _
  %v26 = vld [vmem:[%s0] sm:$0xff]
  %v27 = vld [vmem:[%s0 + $0x8] sm:$0xff]
  %v28 = vld [vmem:[%s0 + $0x10] sm:$0xff]
  %v29 = vld [vmem:[%s0 + $0x18] sm:$0xff]
  %v30 = vld [vmem:[%s0 + $0x20] sm:$0xff]
  %v31 = vld [vmem:[%s0 + $0x28] sm:$0xff]
  %v32 = vld [vmem:[%s0 + $0x30] sm:$0xff]
  %v33 = vld [vmem:[%s0 + $0x38] sm:$0xff]
  %v34 = vld [vmem:[%s0 + $0x40] sm:$0xff]
  %v35 = vld [vmem:[%s0 + $0x48] sm:$0xff]
  %v36 = vld [vmem:[%s0 + $0x50] sm:$0xff]
  %v37 = vld [vmem:[%s0 + $0x58] sm:$0xff]
  %v38 = vld [vmem:[%s0 + $0x60] sm:$0xff]
  %v39 = vld [vmem:[%s0 + $0x68] sm:$0xff]
  %v40 = vld [vmem:[%s0 + $0x70] sm:$0xff]
  %v41 = vld [vmem:[%s0 + $0x78] sm:$0xff]
  %v42 = vld [vmem:[%s0 + $0x80] sm:$0xff]
  %v43 = vld [vmem:[%s0 + $0x88] sm:$0xff]
  %v44 = vld [vmem:[%s0 + $0x90] sm:$0xff]
  %v45 = vld [vmem:[%s0 + $0x98] sm:$0xff]
  %v46 = vld [vmem:[%s0 + $0xa0] sm:$0xff]
  %v47 = vld [vmem:[%s0 + $0xa8] sm:$0xff]
  %v48 = vld [vmem:[%s0 + $0xb0] sm:$0xff]
  %v49 = vld [vmem:[%s0 + $0xb8] sm:$0xff]
  %v50 = vld [vmem:[%s0 + $0xc0] sm:$0xff]
  %v51 = vld [vmem:[%s0 + $0xc8] sm:$0xff]
  %v52 = vld [vmem:[%s0 + $0xd0] sm:$0xff]
  %v53 = vld [vmem:[%s0 + $0xd8] sm:$0xff]
  %v54 = vld [vmem:[%s0 + $0xe0] sm:$0xff]
  %v55 = vld [vmem:[%s0 + $0xe8] sm:$0xff]
  %v56 = vld [vmem:[%s0 + $0xf0] sm:$0xff]
  %v57 = vld [vmem:[%s0 + $0xf8] sm:$0xff]
  %v58 = vld [vmem:[%s0 + $0x100] sm:$0xff]
  %v59 = vld [vmem:[%s0 + $0x108] sm:$0xff]
  %v60 = vld [vmem:[%s0 + $0x110] sm:$0xff]
  %v61 = vld [vmem:[%s0 + $0x118] sm:$0xff]
  %v62 = vld [vmem:[%s0 + $0x120] sm:$0xff]
  %v63 = vld [vmem:[%s0 + $0x128] sm:$0xff]
  %v64 = vld [vmem:[%s0 + $0x130] sm:$0xff]
  %v65 = vld [vmem:[%s0 + $0x138] sm:$0xff]
  %v66 = vld [vmem:[%s0 + $0x140] sm:$0xff]
  %v67 = vld [vmem:[%s0 + $0x148] sm:$0xff]
  %v68 = vld [vmem:[%s0 + $0x150] sm:$0xff]
  %v69 = vld [vmem:[%s0 + $0x158] sm:$0xff]
  %v70 = vld [vmem:[%s0 + $0x160] sm:$0xff]
  %v71 = vld [vmem:[%s0 + $0x168] sm:$0xff]
  %v72 = vld [vmem:[%s0 + $0x170] sm:$0xff]
  %v73 = vld [vmem:[%s0 + $0x178] sm:$0xff]
  %v74 = vld [vmem:[%s0 + $0x180] sm:$0xff]
  %v75 = vld [vmem:[%s0 + $0x188] sm:$0xff]
  %v76 = vld [vmem:[%s0 + $0x190] sm:$0xff]
  %v77 = vld [vmem:[%s0 + $0x198] sm:$0xff]
  %v78 = vld [vmem:[%s0 + $0x1a0] sm:$0xff]
  %v79 = vld [vmem:[%s0 + $0x1a8] sm:$0xff]
  %v80 = vld [vmem:[%s0 + $0x1b0] sm:$0xff]
  %v81 = vld [vmem:[%s0 + $0x1b8] sm:$0xff]
  %v82 = vld [vmem:[%s0 + $0x1c0] sm:$0xff]
  %v83 = vld [vmem:[%s0 + $0x1c8] sm:$0xff]
  %v84 = vld [vmem:[%s0 + $0x1d0] sm:$0xff]
  %v85 = vld [vmem:[%s0 + $0x1d8] sm:$0xff]
  %v86 = vld [vmem:[%s0 + $0x1e0] sm:$0xff]
  %v87 = vld [vmem:[%s0 + $0x1e8] sm:$0xff]
  %v88 = vld [vmem:[%s0 + $0x1f0] sm:$0xff]
  %v89 = vld [vmem:[%s0 + $0x1f8] sm:$0xff]
  %vm90 = vcmask 31744
  %v91 = vsel %vm90, %v26, 0.0
  %v92 = vsel %vm90, %v27, 0.0
  %v93 = vadd.f32 %v91, %v92
  %v94 = vsel %vm90, %v28, 0.0
  %v95 = vadd.f32 %v93, %v94
  %v96 = vsel %vm90, %v29, 0.0
  %v97 = vadd.f32 %v95, %v96
  %v98 = vsel %vm90, %v30, 0.0
  %v99 = vadd.f32 %v97, %v98
  %v100 = vsel %vm90, %v31, 0.0
  %v101 = vadd.f32 %v99, %v100
  %v102 = vsel %vm90, %v32, 0.0
  %v103 = vadd.f32 %v101, %v102
  %v104 = vsel %vm90, %v33, 0.0
  %v105 = vadd.f32 %v103, %v104
  %v106 = vsel %vm90, %v34, 0.0
  %v107 = vadd.f32 %v105, %v106
  %v108 = vsel %vm90, %v35, 0.0
  %v109 = vadd.f32 %v107, %v108
  %v110 = vsel %vm90, %v36, 0.0
  %v111 = vadd.f32 %v109, %v110
  %v112 = vsel %vm90, %v37, 0.0
  %v113 = vadd.f32 %v111, %v112
  %v114 = vsel %vm90, %v38, 0.0
  %v115 = vadd.f32 %v113, %v114
  %v116 = vsel %vm90, %v39, 0.0
  %v117 = vadd.f32 %v115, %v116
  %v118 = vsel %vm90, %v40, 0.0
  %v119 = vadd.f32 %v117, %v118
  %v120 = vsel %vm90, %v41, 0.0
  %v121 = vadd.f32 %v119, %v120
  %v122 = vsel %vm90, %v42, 0.0
  %v123 = vadd.f32 %v121, %v122
  %v124 = vsel %vm90, %v43, 0.0
  %v125 = vadd.f32 %v123, %v124
  %v126 = vsel %vm90, %v44, 0.0
  %v127 = vadd.f32 %v125, %v126
  %v128 = vsel %vm90, %v45, 0.0
  %v129 = vadd.f32 %v127, %v128
  %v130 = vsel %vm90, %v46, 0.0
  %v131 = vadd.f32 %v129, %v130
  %v132 = vsel %vm90, %v47, 0.0
  %v133 = vadd.f32 %v131, %v132
  %v134 = vsel %vm90, %v48, 0.0
  %v135 = vadd.f32 %v133, %v134
  %v136 = vsel %vm90, %v49, 0.0
  %v137 = vadd.f32 %v135, %v136
  %v138 = vsel %vm90, %v50, 0.0
  %v139 = vadd.f32 %v137, %v138
  %v140 = vsel %vm90, %v51, 0.0
  %v141 = vadd.f32 %v139, %v140
  %v142 = vsel %vm90, %v52, 0.0
  %v143 = vadd.f32 %v141, %v142
  %v144 = vsel %vm90, %v53, 0.0
  %v145 = vadd.f32 %v143, %v144
  %v146 = vsel %vm90, %v54, 0.0
  %v147 = vadd.f32 %v145, %v146
  %v148 = vsel %vm90, %v55, 0.0
  %v149 = vadd.f32 %v147, %v148
  %v150 = vsel %vm90, %v56, 0.0
  %v151 = vadd.f32 %v149, %v150
  %v152 = vsel %vm90, %v57, 0.0
  %v153 = vadd.f32 %v151, %v152
  %v154 = vsel %vm90, %v58, 0.0
  %v155 = vadd.f32 %v153, %v154
  %v156 = vsel %vm90, %v59, 0.0
  %v157 = vadd.f32 %v155, %v156
  %v158 = vsel %vm90, %v60, 0.0
  %v159 = vadd.f32 %v157, %v158
  %v160 = vsel %vm90, %v61, 0.0
  %v161 = vadd.f32 %v159, %v160
  %v162 = vsel %vm90, %v62, 0.0
  %v163 = vadd.f32 %v161, %v162
  %v164 = vsel %vm90, %v63, 0.0
  %v165 = vadd.f32 %v163, %v164
  %v166 = vsel %vm90, %v64, 0.0
  %v167 = vadd.f32 %v165, %v166
  %v168 = vsel %vm90, %v65, 0.0
  %v169 = vadd.f32 %v167, %v168
  %v170 = vsel %vm90, %v66, 0.0
  %v171 = vadd.f32 %v169, %v170
  %v172 = vsel %vm90, %v67, 0.0
  %v173 = vadd.f32 %v171, %v172
  %v174 = vsel %vm90, %v68, 0.0
  %v175 = vadd.f32 %v173, %v174
  %v176 = vsel %vm90, %v69, 0.0
  %v177 = vadd.f32 %v175, %v176
  %v178 = vsel %vm90, %v70, 0.0
  %v179 = vadd.f32 %v177, %v178
  %v180 = vsel %vm90, %v71, 0.0
  %v181 = vadd.f32 %v179, %v180
  %v182 = vsel %vm90, %v72, 0.0
  %v183 = vadd.f32 %v181, %v182
  %v184 = vsel %vm90, %v73, 0.0
  %v185 = vadd.f32 %v183, %v184
  %v186 = vsel %vm90, %v74, 0.0
  %v187 = vadd.f32 %v185, %v186
  %v188 = vsel %vm90, %v75, 0.0
  %v189 = vadd.f32 %v187, %v188
  %v190 = vsel %vm90, %v76, 0.0
  %v191 = vadd.f32 %v189, %v190
  %v192 = vsel %vm90, %v77, 0.0
  %v193 = vadd.f32 %v191, %v192
  %v194 = vsel %vm90, %v78, 0.0
  %v195 = vadd.f32 %v193, %v194
  %v196 = vsel %vm90, %v79, 0.0
  %v197 = vadd.f32 %v195, %v196
  %v198 = vsel %vm90, %v80, 0.0
  %v199 = vadd.f32 %v197, %v198
  %v200 = vsel %vm90, %v81, 0.0
  %v201 = vadd.f32 %v199, %v200
  %v202 = vsel %vm90, %v82, 0.0
  %v203 = vadd.f32 %v201, %v202
  %v204 = vsel %vm90, %v83, 0.0
  %v205 = vadd.f32 %v203, %v204
  %v206 = vsel %vm90, %v84, 0.0
  %v207 = vadd.f32 %v205, %v206
  %v208 = vsel %vm90, %v85, 0.0
  %v209 = vadd.f32 %v207, %v208
  %v210 = vsel %vm90, %v86, 0.0
  %v211 = vadd.f32 %v209, %v210
  %v212 = vsel %vm90, %v87, 0.0
  %v213 = vadd.f32 %v211, %v212
  %v214 = vsel %vm90, %v88, 0.0
  %v215 = vadd.f32 %v213, %v214
  %v216 = vsel %vm90, %v89, 0.0
  %v217 = vadd.f32 %v215, %v216
  %v218 = vrot.slane %v217, 4
  %v219 = vadd.f32 %v217, %v218
  %v220 = vrot.slane %v219, 2
  %v221 = vadd.f32 %v219, %v220
  %v222 = vrot.slane %v221, 1
  %v223 = vadd.f32 %v221, %v222
  %v224 = vrcp.pop 512.0
  %v225 = vmul.f32 512.0, %v224
  %v226 = vsub.f32 1.0, %v225
  %v227 = vmul.f32 %v224, %v226
  %v228 = vadd.f32 %v224, %v227
  %vm229 = vweird.f32 %v224
  %v230 = vsel %vm229, %v224, %v228
  %v231 = vmul.f32 %v223, %v230
  %v232 = vsub.f32 %v26, %v231
  %v233 = vsub.f32 %v27, %v231
  %v234 = vsub.f32 %v28, %v231
  %v235 = vsub.f32 %v29, %v231
  %v236 = vsub.f32 %v30, %v231
  %v237 = vsub.f32 %v31, %v231
  %v238 = vsub.f32 %v32, %v231
  %v239 = vsub.f32 %v33, %v231
  %v240 = vsub.f32 %v34, %v231
  %v241 = vsub.f32 %v35, %v231
  %v242 = vsub.f32 %v36, %v231
  %v243 = vsub.f32 %v37, %v231
  %v244 = vsub.f32 %v38, %v231
  %v245 = vsub.f32 %v39, %v231
  %v246 = vsub.f32 %v40, %v231
  %v247 = vsub.f32 %v41, %v231
  %v248 = vsub.f32 %v42, %v231
  %v249 = vsub.f32 %v43, %v231
  %v250 = vsub.f32 %v44, %v231
  %v251 = vsub.f32 %v45, %v231
  %v252 = vsub.f32 %v46, %v231
  %v253 = vsub.f32 %v47, %v231
  %v254 = vsub.f32 %v48, %v231
  %v255 = vsub.f32 %v49, %v231
  %v256 = vsub.f32 %v50, %v231
  %v257 = vsub.f32 %v51, %v231
  %v258 = vsub.f32 %v52, %v231
  %v259 = vsub.f32 %v53, %v231
  %v260 = vsub.f32 %v54, %v231
  %v261 = vsub.f32 %v55, %v231
  %v262 = vsub.f32 %v56, %v231
  %v263 = vsub.f32 %v57, %v231
  %v264 = vsub.f32 %v58, %v231
  %v265 = vsub.f32 %v59, %v231
  %v266 = vsub.f32 %v60, %v231
  %v267 = vsub.f32 %v61, %v231
  %v268 = vsub.f32 %v62, %v231
  %v269 = vsub.f32 %v63, %v231
  %v270 = vsub.f32 %v64, %v231
  %v271 = vsub.f32 %v65, %v231
  %v272 = vsub.f32 %v66, %v231
  %v273 = vsub.f32 %v67, %v231
  %v274 = vsub.f32 %v68, %v231
  %v275 = vsub.f32 %v69, %v231
  %v276 = vsub.f32 %v70, %v231
  %v277 = vsub.f32 %v71, %v231
  %v278 = vsub.f32 %v72, %v231
  %v279 = vsub.f32 %v73, %v231
  %v280 = vsub.f32 %v74, %v231
  %v281 = vsub.f32 %v75, %v231
  %v282 = vsub.f32 %v76, %v231
  %v283 = vsub.f32 %v77, %v231
  %v284 = vsub.f32 %v78, %v231
  %v285 = vsub.f32 %v79, %v231
  %v286 = vsub.f32 %v80, %v231
  %v287 = vsub.f32 %v81, %v231
  %v288 = vsub.f32 %v82, %v231
  %v289 = vsub.f32 %v83, %v231
  %v290 = vsub.f32 %v84, %v231
  %v291 = vsub.f32 %v85, %v231
  %v292 = vsub.f32 %v86, %v231
  %v293 = vsub.f32 %v87, %v231
  %v294 = vsub.f32 %v88, %v231
  %v295 = vsub.f32 %v89, %v231
  %v296 = vmul.f32 %v232, %v232
  %v297 = vmul.f32 %v233, %v233
  %v298 = vmul.f32 %v234, %v234
  %v299 = vmul.f32 %v235, %v235
  %v300 = vmul.f32 %v236, %v236
  %v301 = vmul.f32 %v237, %v237
  %v302 = vmul.f32 %v238, %v238
  %v303 = vmul.f32 %v239, %v239
  %v304 = vmul.f32 %v240, %v240
  %v305 = vmul.f32 %v241, %v241
  %v306 = vmul.f32 %v242, %v242
  %v307 = vmul.f32 %v243, %v243
  %v308 = vmul.f32 %v244, %v244
  %v309 = vmul.f32 %v245, %v245
  %v310 = vmul.f32 %v246, %v246
  %v311 = vmul.f32 %v247, %v247
  %v312 = vmul.f32 %v248, %v248
  %v313 = vmul.f32 %v249, %v249
  %v314 = vmul.f32 %v250, %v250
  %v315 = vmul.f32 %v251, %v251
  %v316 = vmul.f32 %v252, %v252
  %v317 = vmul.f32 %v253, %v253
  %v318 = vmul.f32 %v254, %v254
  %v319 = vmul.f32 %v255, %v255
  %v320 = vmul.f32 %v256, %v256
  %v321 = vmul.f32 %v257, %v257
  %v322 = vmul.f32 %v258, %v258
  %v323 = vmul.f32 %v259, %v259
  %v324 = vmul.f32 %v260, %v260
  %v325 = vmul.f32 %v261, %v261
  %v326 = vmul.f32 %v262, %v262
  %v327 = vmul.f32 %v263, %v263
  %v328 = vmul.f32 %v264, %v264
  %v329 = vmul.f32 %v265, %v265
  %v330 = vmul.f32 %v266, %v266
  %v331 = vmul.f32 %v267, %v267
  %v332 = vmul.f32 %v268, %v268
  %v333 = vmul.f32 %v269, %v269
  %v334 = vmul.f32 %v270, %v270
  %v335 = vmul.f32 %v271, %v271
  %v336 = vmul.f32 %v272, %v272
  %v337 = vmul.f32 %v273, %v273
  %v338 = vmul.f32 %v274, %v274
  %v339 = vmul.f32 %v275, %v275
  %v340 = vmul.f32 %v276, %v276
  %v341 = vmul.f32 %v277, %v277
  %v342 = vmul.f32 %v278, %v278
  %v343 = vmul.f32 %v279, %v279
  %v344 = vmul.f32 %v280, %v280
  %v345 = vmul.f32 %v281, %v281
  %v346 = vmul.f32 %v282, %v282
  %v347 = vmul.f32 %v283, %v283
  %v348 = vmul.f32 %v284, %v284
  %v349 = vmul.f32 %v285, %v285
  %v350 = vmul.f32 %v286, %v286
  %v351 = vmul.f32 %v287, %v287
  %v352 = vmul.f32 %v288, %v288
  %v353 = vmul.f32 %v289, %v289
  %v354 = vmul.f32 %v290, %v290
  %v355 = vmul.f32 %v291, %v291
  %v356 = vmul.f32 %v292, %v292
  %v357 = vmul.f32 %v293, %v293
  %v358 = vmul.f32 %v294, %v294
  %v359 = vmul.f32 %v295, %v295
  %v360 = vsel %vm90, %v296, 0.0
  %v361 = vsel %vm90, %v297, 0.0
  %v362 = vadd.f32 %v360, %v361
  %v363 = vsel %vm90, %v298, 0.0
  %v364 = vadd.f32 %v362, %v363
  %v365 = vsel %vm90, %v299, 0.0
  %v366 = vadd.f32 %v364, %v365
  %v367 = vsel %vm90, %v300, 0.0
  %v368 = vadd.f32 %v366, %v367
  %v369 = vsel %vm90, %v301, 0.0
  %v370 = vadd.f32 %v368, %v369
  %v371 = vsel %vm90, %v302, 0.0
  %v372 = vadd.f32 %v370, %v371
  %v373 = vsel %vm90, %v303, 0.0
  %v374 = vadd.f32 %v372, %v373
  %v375 = vsel %vm90, %v304, 0.0
  %v376 = vadd.f32 %v374, %v375
  %v377 = vsel %vm90, %v305, 0.0
  %v378 = vadd.f32 %v376, %v377
  %v379 = vsel %vm90, %v306, 0.0
  %v380 = vadd.f32 %v378, %v379
  %v381 = vsel %vm90, %v307, 0.0
  %v382 = vadd.f32 %v380, %v381
  %v383 = vsel %vm90, %v308, 0.0
  %v384 = vadd.f32 %v382, %v383
  %v385 = vsel %vm90, %v309, 0.0
  %v386 = vadd.f32 %v384, %v385
  %v387 = vsel %vm90, %v310, 0.0
  %v388 = vadd.f32 %v386, %v387
  %v389 = vsel %vm90, %v311, 0.0
  %v390 = vadd.f32 %v388, %v389
  %v391 = vsel %vm90, %v312, 0.0
  %v392 = vadd.f32 %v390, %v391
  %v393 = vsel %vm90, %v313, 0.0
  %v394 = vadd.f32 %v392, %v393
  %v395 = vsel %vm90, %v314, 0.0
  %v396 = vadd.f32 %v394, %v395
  %v397 = vsel %vm90, %v315, 0.0
  %v398 = vadd.f32 %v396, %v397
  %v399 = vsel %vm90, %v316, 0.0
  %v400 = vadd.f32 %v398, %v399
  %v401 = vsel %vm90, %v317, 0.0
  %v402 = vadd.f32 %v400, %v401
  %v403 = vsel %vm90, %v318, 0.0
  %v404 = vadd.f32 %v402, %v403
  %v405 = vsel %vm90, %v319, 0.0
  %v406 = vadd.f32 %v404, %v405
  %v407 = vsel %vm90, %v320, 0.0
  %v408 = vadd.f32 %v406, %v407
  %v409 = vsel %vm90, %v321, 0.0
  %v410 = vadd.f32 %v408, %v409
  %v411 = vsel %vm90, %v322, 0.0
  %v412 = vadd.f32 %v410, %v411
  %v413 = vsel %vm90, %v323, 0.0
  %v414 = vadd.f32 %v412, %v413
  %v415 = vsel %vm90, %v324, 0.0
  %v416 = vadd.f32 %v414, %v415
  %v417 = vsel %vm90, %v325, 0.0
  %v418 = vadd.f32 %v416, %v417
  %v419 = vsel %vm90, %v326, 0.0
  %v420 = vadd.f32 %v418, %v419
  %v421 = vsel %vm90, %v327, 0.0
  %v422 = vadd.f32 %v420, %v421
  %v423 = vsel %vm90, %v328, 0.0
  %v424 = vadd.f32 %v422, %v423
  %v425 = vsel %vm90, %v329, 0.0
  %v426 = vadd.f32 %v424, %v425
  %v427 = vsel %vm90, %v330, 0.0
  %v428 = vadd.f32 %v426, %v427
  %v429 = vsel %vm90, %v331, 0.0
  %v430 = vadd.f32 %v428, %v429
  %v431 = vsel %vm90, %v332, 0.0
  %v432 = vadd.f32 %v430, %v431
  %v433 = vsel %vm90, %v333, 0.0
  %v434 = vadd.f32 %v432, %v433
  %v435 = vsel %vm90, %v334, 0.0
  %v436 = vadd.f32 %v434, %v435
  %v437 = vsel %vm90, %v335, 0.0
  %v438 = vadd.f32 %v436, %v437
  %v439 = vsel %vm90, %v336, 0.0
  %v440 = vadd.f32 %v438, %v439
  %v441 = vsel %vm90, %v337, 0.0
  %v442 = vadd.f32 %v440, %v441
  %v443 = vsel %vm90, %v338, 0.0
  %v444 = vadd.f32 %v442, %v443
  %v445 = vsel %vm90, %v339, 0.0
  %v446 = vadd.f32 %v444, %v445
  %v447 = vsel %vm90, %v340, 0.0
  %v448 = vadd.f32 %v446, %v447
  %v449 = vsel %vm90, %v341, 0.0
  %v450 = vadd.f32 %v448, %v449
  %v451 = vsel %vm90, %v342, 0.0
  %v452 = vadd.f32 %v450, %v451
  %v453 = vsel %vm90, %v343, 0.0
  %v454 = vadd.f32 %v452, %v453
  %v455 = vsel %vm90, %v344, 0.0
  %v456 = vadd.f32 %v454, %v455
  %v457 = vsel %vm90, %v345, 0.0
  %v458 = vadd.f32 %v456, %v457
  %v459 = vsel %vm90, %v346, 0.0
  %v460 = vadd.f32 %v458, %v459
  %v461 = vsel %vm90, %v347, 0.0
  %v462 = vadd.f32 %v460, %v461
  %v463 = vsel %vm90, %v348, 0.0
  %v464 = vadd.f32 %v462, %v463
  %v465 = vsel %vm90, %v349, 0.0
  %v466 = vadd.f32 %v464, %v465
  %v467 = vsel %vm90, %v350, 0.0
  %v468 = vadd.f32 %v466, %v467
  %v469 = vsel %vm90, %v351, 0.0
  %v470 = vadd.f32 %v468, %v469
  %v471 = vsel %vm90, %v352, 0.0
  %v472 = vadd.f32 %v470, %v471
  %v473 = vsel %vm90, %v353, 0.0
  %v474 = vadd.f32 %v472, %v473
  %v475 = vsel %vm90, %v354, 0.0
  %v476 = vadd.f32 %v474, %v475
  %v477 = vsel %vm90, %v355, 0.0
  %v478 = vadd.f32 %v476, %v477
  %v479 = vsel %vm90, %v356, 0.0
  %v480 = vadd.f32 %v478, %v479
  %v481 = vsel %vm90, %v357, 0.0
  %v482 = vadd.f32 %v480, %v481
  %v483 = vsel %vm90, %v358, 0.0
  %v484 = vadd.f32 %v482, %v483
  %v485 = vsel %vm90, %v359, 0.0
  %v486 = vadd.f32 %v484, %v485
  %v487 = vrot.slane %v486, 4
  %v488 = vadd.f32 %v486, %v487
  %v489 = vrot.slane %v488, 2
  %v490 = vadd.f32 %v488, %v489
  %v491 = vrot.slane %v490, 1
  %v492 = vadd.f32 %v490, %v491
  %v493 = vmul.f32 %v492, %v230
  %v494 = vld [vmem:[%s1] sm:$0x1]
  %v495 = vadd.f32 %v493, 1e-05
  %v496 = vrsqrt.pop %v495
  %v497 = vmul.f32 %v496, %v495
  %v498 = vmul.f32 %v497, %v496
  %v499 = vmul.f32 0.5, %v498
  %v500 = vsub.f32 1.5, %v499
  %v501 = vmul.f32 %v496, %v500
  %vm502 = vweird.f32 %v495
  %vm503 = vweird.f32 %v496
  %vm504 = vmor %vm502, %vm503
  %v505 = vsel %vm504, %v496, %v501
  %v506 = vmul.f32 %v494, %v505
  %v507 = vld [vmem:[%s2] sm:$0x1]
  %v508 = vmul.f32 %v231, %v506
  %v509 = vsub.f32 %v507, %v508
  %v511 = vperm.slane %v506, 0
  %v513 = vmul.f32 %v26, %v511
  %v514 = vmul.f32 %v27, %v511
  %v515 = vmul.f32 %v28, %v511
  %v516 = vmul.f32 %v29, %v511
  %v517 = vmul.f32 %v30, %v511
  %v518 = vmul.f32 %v31, %v511
  %v519 = vmul.f32 %v32, %v511
  %v520 = vmul.f32 %v33, %v511
  %v521 = vmul.f32 %v34, %v511
  %v522 = vmul.f32 %v35, %v511
  %v523 = vmul.f32 %v36, %v511
  %v524 = vmul.f32 %v37, %v511
  %v525 = vmul.f32 %v38, %v511
  %v526 = vmul.f32 %v39, %v511
  %v527 = vmul.f32 %v40, %v511
  %v528 = vmul.f32 %v41, %v511
  %v529 = vmul.f32 %v42, %v511
  %v530 = vmul.f32 %v43, %v511
  %v531 = vmul.f32 %v44, %v511
  %v532 = vmul.f32 %v45, %v511
  %v533 = vmul.f32 %v46, %v511
  %v534 = vmul.f32 %v47, %v511
  %v535 = vmul.f32 %v48, %v511
  %v536 = vmul.f32 %v49, %v511
  %v537 = vmul.f32 %v50, %v511
  %v538 = vmul.f32 %v51, %v511
  %v539 = vmul.f32 %v52, %v511
  %v540 = vmul.f32 %v53, %v511
  %v541 = vmul.f32 %v54, %v511
  %v542 = vmul.f32 %v55, %v511
  %v543 = vmul.f32 %v56, %v511
  %v544 = vmul.f32 %v57, %v511
  %v545 = vmul.f32 %v58, %v511
  %v546 = vmul.f32 %v59, %v511
  %v547 = vmul.f32 %v60, %v511
  %v548 = vmul.f32 %v61, %v511
  %v549 = vmul.f32 %v62, %v511
  %v550 = vmul.f32 %v63, %v511
  %v551 = vmul.f32 %v64, %v511
  %v552 = vmul.f32 %v65, %v511
  %v553 = vmul.f32 %v66, %v511
  %v554 = vmul.f32 %v67, %v511
  %v555 = vmul.f32 %v68, %v511
  %v556 = vmul.f32 %v69, %v511
  %v557 = vmul.f32 %v70, %v511
  %v558 = vmul.f32 %v71, %v511
  %v559 = vmul.f32 %v72, %v511
  %v560 = vmul.f32 %v73, %v511
  %v561 = vmul.f32 %v74, %v511
  %v562 = vmul.f32 %v75, %v511
  %v563 = vmul.f32 %v76, %v511
  %v564 = vmul.f32 %v77, %v511
  %v565 = vmul.f32 %v78, %v511
  %v566 = vmul.f32 %v79, %v511
  %v567 = vmul.f32 %v80, %v511
  %v568 = vmul.f32 %v81, %v511
  %v569 = vmul.f32 %v82, %v511
  %v570 = vmul.f32 %v83, %v511
  %v571 = vmul.f32 %v84, %v511
  %v572 = vmul.f32 %v85, %v511
  %v573 = vmul.f32 %v86, %v511
  %v574 = vmul.f32 %v87, %v511
  %v575 = vmul.f32 %v88, %v511
  %v576 = vmul.f32 %v89, %v511
  %v578 = vperm.slane %v509, 0
  %v580 = vadd.f32 %v513, %v578
  %v581 = vadd.f32 %v514, %v578
  %v582 = vadd.f32 %v515, %v578
  %v583 = vadd.f32 %v516, %v578
  %v584 = vadd.f32 %v517, %v578
  %v585 = vadd.f32 %v518, %v578
  %v586 = vadd.f32 %v519, %v578
  %v587 = vadd.f32 %v520, %v578
  %v588 = vadd.f32 %v521, %v578
  %v589 = vadd.f32 %v522, %v578
  %v590 = vadd.f32 %v523, %v578
  %v591 = vadd.f32 %v524, %v578
  %v592 = vadd.f32 %v525, %v578
  %v593 = vadd.f32 %v526, %v578
  %v594 = vadd.f32 %v527, %v578
  %v595 = vadd.f32 %v528, %v578
  %v596 = vadd.f32 %v529, %v578
  %v597 = vadd.f32 %v530, %v578
  %v598 = vadd.f32 %v531, %v578
  %v599 = vadd.f32 %v532, %v578
  %v600 = vadd.f32 %v533, %v578
  %v601 = vadd.f32 %v534, %v578
  %v602 = vadd.f32 %v535, %v578
  %v603 = vadd.f32 %v536, %v578
  %v604 = vadd.f32 %v537, %v578
  %v605 = vadd.f32 %v538, %v578
  %v606 = vadd.f32 %v539, %v578
  %v607 = vadd.f32 %v540, %v578
  %v608 = vadd.f32 %v541, %v578
  %v609 = vadd.f32 %v542, %v578
  %v610 = vadd.f32 %v543, %v578
  %v611 = vadd.f32 %v544, %v578
  %v612 = vadd.f32 %v545, %v578
  %v613 = vadd.f32 %v546, %v578
  %v614 = vadd.f32 %v547, %v578
  %v615 = vadd.f32 %v548, %v578
  %v616 = vadd.f32 %v549, %v578
  %v617 = vadd.f32 %v550, %v578
  %v618 = vadd.f32 %v551, %v578
  %v619 = vadd.f32 %v552, %v578
  %v620 = vadd.f32 %v553, %v578
  %v621 = vadd.f32 %v554, %v578
  %v622 = vadd.f32 %v555, %v578
  %v623 = vadd.f32 %v556, %v578
  %v624 = vadd.f32 %v557, %v578
  %v625 = vadd.f32 %v558, %v578
  %v626 = vadd.f32 %v559, %v578
  %v627 = vadd.f32 %v560, %v578
  %v628 = vadd.f32 %v561, %v578
  %v629 = vadd.f32 %v562, %v578
  %v630 = vadd.f32 %v563, %v578
  %v631 = vadd.f32 %v564, %v578
  %v632 = vadd.f32 %v565, %v578
  %v633 = vadd.f32 %v566, %v578
  %v634 = vadd.f32 %v567, %v578
  %v635 = vadd.f32 %v568, %v578
  %v636 = vadd.f32 %v569, %v578
  %v637 = vadd.f32 %v570, %v578
  %v638 = vadd.f32 %v571, %v578
  %v639 = vadd.f32 %v572, %v578
  %v640 = vadd.f32 %v573, %v578
  %v641 = vadd.f32 %v574, %v578
  %v642 = vadd.f32 %v575, %v578
  %v643 = vadd.f32 %v576, %v578
  %v644 = vmax.f32 %v580, 0.0
  %v645 = vmax.f32 %v581, 0.0
  %v646 = vmax.f32 %v582, 0.0
  %v647 = vmax.f32 %v583, 0.0
  %v648 = vmax.f32 %v584, 0.0
  %v649 = vmax.f32 %v585, 0.0
  %v650 = vmax.f32 %v586, 0.0
  %v651 = vmax.f32 %v587, 0.0
  %v652 = vmax.f32 %v588, 0.0
  %v653 = vmax.f32 %v589, 0.0
  %v654 = vmax.f32 %v590, 0.0
  %v655 = vmax.f32 %v591, 0.0
  %v656 = vmax.f32 %v592, 0.0
  %v657 = vmax.f32 %v593, 0.0
  %v658 = vmax.f32 %v594, 0.0
  %v659 = vmax.f32 %v595, 0.0
  %v660 = vmax.f32 %v596, 0.0
  %v661 = vmax.f32 %v597, 0.0
  %v662 = vmax.f32 %v598, 0.0
  %v663 = vmax.f32 %v599, 0.0
  %v664 = vmax.f32 %v600, 0.0
  %v665 = vmax.f32 %v601, 0.0
  %v666 = vmax.f32 %v602, 0.0
  %v667 = vmax.f32 %v603, 0.0
  %v668 = vmax.f32 %v604, 0.0
  %v669 = vmax.f32 %v605, 0.0
  %v670 = vmax.f32 %v606, 0.0
  %v671 = vmax.f32 %v607, 0.0
  %v672 = vmax.f32 %v608, 0.0
  %v673 = vmax.f32 %v609, 0.0
  %v674 = vmax.f32 %v610, 0.0
  %v675 = vmax.f32 %v611, 0.0
  %v676 = vmax.f32 %v612, 0.0
  %v677 = vmax.f32 %v613, 0.0
  %v678 = vmax.f32 %v614, 0.0
  %v679 = vmax.f32 %v615, 0.0
  %v680 = vmax.f32 %v616, 0.0
  %v681 = vmax.f32 %v617, 0.0
  %v682 = vmax.f32 %v618, 0.0
  %v683 = vmax.f32 %v619, 0.0
  %v684 = vmax.f32 %v620, 0.0
  %v685 = vmax.f32 %v621, 0.0
  %v686 = vmax.f32 %v622, 0.0
  %v687 = vmax.f32 %v623, 0.0
  %v688 = vmax.f32 %v624, 0.0
  %v689 = vmax.f32 %v625, 0.0
  %v690 = vmax.f32 %v626, 0.0
  %v691 = vmax.f32 %v627, 0.0
  %v692 = vmax.f32 %v628, 0.0
  %v693 = vmax.f32 %v629, 0.0
  %v694 = vmax.f32 %v630, 0.0
  %v695 = vmax.f32 %v631, 0.0
  %v696 = vmax.f32 %v632, 0.0
  %v697 = vmax.f32 %v633, 0.0
  %v698 = vmax.f32 %v634, 0.0
  %v699 = vmax.f32 %v635, 0.0
  %v700 = vmax.f32 %v636, 0.0
  %v701 = vmax.f32 %v637, 0.0
  %v702 = vmax.f32 %v638, 0.0
  %v703 = vmax.f32 %v639, 0.0
  %v704 = vmax.f32 %v640, 0.0
  %v705 = vmax.f32 %v641, 0.0
  %v706 = vmax.f32 %v642, 0.0
  %v707 = vmax.f32 %v643, 0.0
  %v708 = vld [vmem:[%s3] sm:$0xf]
  %v710 = vsel %vm90, %v644, 0
  %v713 = vsel %vm90, %v645, 0
  %v716 = vsel %vm90, %v646, 0
  %v719 = vsel %vm90, %v647, 0
  %v722 = vsel %vm90, %v648, 0
  %v725 = vsel %vm90, %v649, 0
  %v728 = vsel %vm90, %v650, 0
  %v731 = vsel %vm90, %v651, 0
  %v734 = vsel %vm90, %v652, 0
  %v737 = vsel %vm90, %v653, 0
  %v740 = vsel %vm90, %v654, 0
  %v743 = vsel %vm90, %v655, 0
  %v746 = vsel %vm90, %v656, 0
  %v749 = vsel %vm90, %v657, 0
  %v752 = vsel %vm90, %v658, 0
  %v755 = vsel %vm90, %v659, 0
  %v758 = vsel %vm90, %v660, 0
  %v761 = vsel %vm90, %v661, 0
  %v764 = vsel %vm90, %v662, 0
  %v767 = vsel %vm90, %v663, 0
  %v770 = vsel %vm90, %v664, 0
  %v773 = vsel %vm90, %v665, 0
  %v776 = vsel %vm90, %v666, 0
  %v779 = vsel %vm90, %v667, 0
  %v782 = vsel %vm90, %v668, 0
  %v785 = vsel %vm90, %v669, 0
  %v788 = vsel %vm90, %v670, 0
  %v791 = vsel %vm90, %v671, 0
  %v794 = vsel %vm90, %v672, 0
  %v797 = vsel %vm90, %v673, 0
  %v800 = vsel %vm90, %v674, 0
  %v803 = vsel %vm90, %v675, 0
  %v806 = vsel %vm90, %v676, 0
  %v809 = vsel %vm90, %v677, 0
  %v812 = vsel %vm90, %v678, 0
  %v815 = vsel %vm90, %v679, 0
  %v818 = vsel %vm90, %v680, 0
  %v821 = vsel %vm90, %v681, 0
  %v824 = vsel %vm90, %v682, 0
  %v827 = vsel %vm90, %v683, 0
  %v830 = vsel %vm90, %v684, 0
  %v833 = vsel %vm90, %v685, 0
  %v836 = vsel %vm90, %v686, 0
  %v839 = vsel %vm90, %v687, 0
  %v842 = vsel %vm90, %v688, 0
  %v845 = vsel %vm90, %v689, 0
  %v848 = vsel %vm90, %v690, 0
  %v851 = vsel %vm90, %v691, 0
  %v854 = vsel %vm90, %v692, 0
  %v857 = vsel %vm90, %v693, 0
  %v860 = vsel %vm90, %v694, 0
  %v863 = vsel %vm90, %v695, 0
  %v866 = vsel %vm90, %v696, 0
  %v869 = vsel %vm90, %v697, 0
  %v872 = vsel %vm90, %v698, 0
  %v875 = vsel %vm90, %v699, 0
  %v878 = vsel %vm90, %v700, 0
  %v881 = vsel %vm90, %v701, 0
  %v884 = vsel %vm90, %v702, 0
  %v887 = vsel %vm90, %v703, 0
  %v890 = vsel %vm90, %v704, 0
  %v893 = vsel %vm90, %v705, 0
  %v896 = vsel %vm90, %v706, 0
  %v899 = vsel %vm90, %v707, 0
  %vm901 = vcmask 1043456
  %v903 = vsel %vm901, %v708, 0
  %905 = vmatpush.msra.mxu0 0.0
  %906 = vmatpush.msra.mxu0 0.0
  %907 = vmatpush.msra.mxu0 0.0
  %908 = vmatpush.msra.mxu0 0.0
  %909 = vmatpush.msra.mxu0 0.0
  %910 = vmatpush.msra.mxu0 0.0
  %911 = vmatpush.msra.mxu0 0.0
  %912 = vmatpush.msra.mxu0 0.0
  %913 = vmatpush.msra.mxu0 0.0
  %914 = vmatpush.msra.mxu0 0.0
  %915 = vmatpush.msra.mxu0 0.0
  %916 = vmatpush.msra.mxu0 0.0
  %917 = vmatpush.msra.mxu0 0.0
  %918 = vmatpush.msra.mxu0 0.0
  %919 = vmatpush.msra.mxu0 0.0
  %920 = vmatpush.msra.mxu0 %v903
  %921 = vmatmul.f32.gmra.mxu0 %v710
  %v922 = vpop.f32.mrf.mxu0
  %v923 = vadd.f32 0.0, %v922
  %924 = vmatmul.f32.gmra.mxu0 %v713
  %v925 = vpop.f32.mrf.mxu0
  %v926 = vadd.f32 0.0, %v925
  %927 = vmatmul.f32.gmra.mxu0 %v716
  %v928 = vpop.f32.mrf.mxu0
  %v929 = vadd.f32 0.0, %v928
  %930 = vmatmul.f32.gmra.mxu0 %v719
  %v931 = vpop.f32.mrf.mxu0
  %v932 = vadd.f32 0.0, %v931
  %933 = vmatmul.f32.gmra.mxu0 %v722
  %v934 = vpop.f32.mrf.mxu0
  %v935 = vadd.f32 0.0, %v934
  %936 = vmatmul.f32.gmra.mxu0 %v725
  %v937 = vpop.f32.mrf.mxu0
  %v938 = vadd.f32 0.0, %v937
  %939 = vmatmul.f32.gmra.mxu0 %v728
  %v940 = vpop.f32.mrf.mxu0
  %v941 = vadd.f32 0.0, %v940
  %942 = vmatmul.f32.gmra.mxu0 %v731
  %v943 = vpop.f32.mrf.mxu0
  %v944 = vadd.f32 0.0, %v943
  %945 = vmatmul.f32.gmra.mxu0 %v734
  %v946 = vpop.f32.mrf.mxu0
  %v947 = vadd.f32 0.0, %v946
  %948 = vmatmul.f32.gmra.mxu0 %v737
  %v949 = vpop.f32.mrf.mxu0
  %v950 = vadd.f32 0.0, %v949
  %951 = vmatmul.f32.gmra.mxu0 %v740
  %v952 = vpop.f32.mrf.mxu0
  %v953 = vadd.f32 0.0, %v952
  %954 = vmatmul.f32.gmra.mxu0 %v743
  %v955 = vpop.f32.mrf.mxu0
  %v956 = vadd.f32 0.0, %v955
  %957 = vmatmul.f32.gmra.mxu0 %v746
  %v958 = vpop.f32.mrf.mxu0
  %v959 = vadd.f32 0.0, %v958
  %960 = vmatmul.f32.gmra.mxu0 %v749
  %v961 = vpop.f32.mrf.mxu0
  %v962 = vadd.f32 0.0, %v961
  %963 = vmatmul.f32.gmra.mxu0 %v752
  %v964 = vpop.f32.mrf.mxu0
  %v965 = vadd.f32 0.0, %v964
  %966 = vmatmul.f32.gmra.mxu0 %v755
  %v967 = vpop.f32.mrf.mxu0
  %v968 = vadd.f32 0.0, %v967
  %969 = vmatmul.f32.gmra.mxu0 %v758
  %v970 = vpop.f32.mrf.mxu0
  %v971 = vadd.f32 0.0, %v970
  %972 = vmatmul.f32.gmra.mxu0 %v761
  %v973 = vpop.f32.mrf.mxu0
  %v974 = vadd.f32 0.0, %v973
  %975 = vmatmul.f32.gmra.mxu0 %v764
  %v976 = vpop.f32.mrf.mxu0
  %v977 = vadd.f32 0.0, %v976
  %978 = vmatmul.f32.gmra.mxu0 %v767
  %v979 = vpop.f32.mrf.mxu0
  %v980 = vadd.f32 0.0, %v979
  %981 = vmatmul.f32.gmra.mxu0 %v770
  %v982 = vpop.f32.mrf.mxu0
  %v983 = vadd.f32 0.0, %v982
  %984 = vmatmul.f32.gmra.mxu0 %v773
  %v985 = vpop.f32.mrf.mxu0
  %v986 = vadd.f32 0.0, %v985
  %987 = vmatmul.f32.gmra.mxu0 %v776
  %v988 = vpop.f32.mrf.mxu0
  %v989 = vadd.f32 0.0, %v988
  %990 = vmatmul.f32.gmra.mxu0 %v779
  %v991 = vpop.f32.mrf.mxu0
  %v992 = vadd.f32 0.0, %v991
  %993 = vmatmul.f32.gmra.mxu0 %v782
  %v994 = vpop.f32.mrf.mxu0
  %v995 = vadd.f32 0.0, %v994
  %996 = vmatmul.f32.gmra.mxu0 %v785
  %v997 = vpop.f32.mrf.mxu0
  %v998 = vadd.f32 0.0, %v997
  %999 = vmatmul.f32.gmra.mxu0 %v788
  %v1000 = vpop.f32.mrf.mxu0
  %v1001 = vadd.f32 0.0, %v1000
  %1002 = vmatmul.f32.gmra.mxu0 %v791
  %v1003 = vpop.f32.mrf.mxu0
  %v1004 = vadd.f32 0.0, %v1003
  %1005 = vmatmul.f32.gmra.mxu0 %v794
  %v1006 = vpop.f32.mrf.mxu0
  %v1007 = vadd.f32 0.0, %v1006
  %1008 = vmatmul.f32.gmra.mxu0 %v797
  %v1009 = vpop.f32.mrf.mxu0
  %v1010 = vadd.f32 0.0, %v1009
  %1011 = vmatmul.f32.gmra.mxu0 %v800
  %v1012 = vpop.f32.mrf.mxu0
  %v1013 = vadd.f32 0.0, %v1012
  %1014 = vmatmul.f32.gmra.mxu0 %v803
  %v1015 = vpop.f32.mrf.mxu0
  %v1016 = vadd.f32 0.0, %v1015
  %1017 = vmatmul.f32.gmra.mxu0 %v806
  %v1018 = vpop.f32.mrf.mxu0
  %v1019 = vadd.f32 0.0, %v1018
  %1020 = vmatmul.f32.gmra.mxu0 %v809
  %v1021 = vpop.f32.mrf.mxu0
  %v1022 = vadd.f32 0.0, %v1021
  %1023 = vmatmul.f32.gmra.mxu0 %v812
  %v1024 = vpop.f32.mrf.mxu0
  %v1025 = vadd.f32 0.0, %v1024
  %1026 = vmatmul.f32.gmra.mxu0 %v815
  %v1027 = vpop.f32.mrf.mxu0
  %v1028 = vadd.f32 0.0, %v1027
  %1029 = vmatmul.f32.gmra.mxu0 %v818
  %v1030 = vpop.f32.mrf.mxu0
  %v1031 = vadd.f32 0.0, %v1030
  %1032 = vmatmul.f32.gmra.mxu0 %v821
  %v1033 = vpop.f32.mrf.mxu0
  %v1034 = vadd.f32 0.0, %v1033
  %1035 = vmatmul.f32.gmra.mxu0 %v824
  %v1036 = vpop.f32.mrf.mxu0
  %v1037 = vadd.f32 0.0, %v1036
  %1038 = vmatmul.f32.gmra.mxu0 %v827
  %v1039 = vpop.f32.mrf.mxu0
  %v1040 = vadd.f32 0.0, %v1039
  %1041 = vmatmul.f32.gmra.mxu0 %v830
  %v1042 = vpop.f32.mrf.mxu0
  %v1043 = vadd.f32 0.0, %v1042
  %1044 = vmatmul.f32.gmra.mxu0 %v833
  %v1045 = vpop.f32.mrf.mxu0
  %v1046 = vadd.f32 0.0, %v1045
  %1047 = vmatmul.f32.gmra.mxu0 %v836
  %v1048 = vpop.f32.mrf.mxu0
  %v1049 = vadd.f32 0.0, %v1048
  %1050 = vmatmul.f32.gmra.mxu0 %v839
  %v1051 = vpop.f32.mrf.mxu0
  %v1052 = vadd.f32 0.0, %v1051
  %1053 = vmatmul.f32.gmra.mxu0 %v842
  %v1054 = vpop.f32.mrf.mxu0
  %v1055 = vadd.f32 0.0, %v1054
  %1056 = vmatmul.f32.gmra.mxu0 %v845
  %v1057 = vpop.f32.mrf.mxu0
  %v1058 = vadd.f32 0.0, %v1057
  %1059 = vmatmul.f32.gmra.mxu0 %v848
  %v1060 = vpop.f32.mrf.mxu0
  %v1061 = vadd.f32 0.0, %v1060
  %1062 = vmatmul.f32.gmra.mxu0 %v851
  %v1063 = vpop.f32.mrf.mxu0
  %v1064 = vadd.f32 0.0, %v1063
  %1065 = vmatmul.f32.gmra.mxu0 %v854
  %v1066 = vpop.f32.mrf.mxu0
  %v1067 = vadd.f32 0.0, %v1066
  %1068 = vmatmul.f32.gmra.mxu0 %v857
  %v1069 = vpop.f32.mrf.mxu0
  %v1070 = vadd.f32 0.0, %v1069
  %1071 = vmatmul.f32.gmra.mxu0 %v860
  %v1072 = vpop.f32.mrf.mxu0
  %v1073 = vadd.f32 0.0, %v1072
  %1074 = vmatmul.f32.gmra.mxu0 %v863
  %v1075 = vpop.f32.mrf.mxu0
  %v1076 = vadd.f32 0.0, %v1075
  %1077 = vmatmul.f32.gmra.mxu0 %v866
  %v1078 = vpop.f32.mrf.mxu0
  %v1079 = vadd.f32 0.0, %v1078
  %1080 = vmatmul.f32.gmra.mxu0 %v869
  %v1081 = vpop.f32.mrf.mxu0
  %v1082 = vadd.f32 0.0, %v1081
  %1083 = vmatmul.f32.gmra.mxu0 %v872
  %v1084 = vpop.f32.mrf.mxu0
  %v1085 = vadd.f32 0.0, %v1084
  %1086 = vmatmul.f32.gmra.mxu0 %v875
  %v1087 = vpop.f32.mrf.mxu0
  %v1088 = vadd.f32 0.0, %v1087
  %1089 = vmatmul.f32.gmra.mxu0 %v878
  %v1090 = vpop.f32.mrf.mxu0
  %v1091 = vadd.f32 0.0, %v1090
  %1092 = vmatmul.f32.gmra.mxu0 %v881
  %v1093 = vpop.f32.mrf.mxu0
  %v1094 = vadd.f32 0.0, %v1093
  %1095 = vmatmul.f32.gmra.mxu0 %v884
  %v1096 = vpop.f32.mrf.mxu0
  %v1097 = vadd.f32 0.0, %v1096
  %1098 = vmatmul.f32.gmra.mxu0 %v887
  %v1099 = vpop.f32.mrf.mxu0
  %v1100 = vadd.f32 0.0, %v1099
  %1101 = vmatmul.f32.gmra.mxu0 %v890
  %v1102 = vpop.f32.mrf.mxu0
  %v1103 = vadd.f32 0.0, %v1102
  %1104 = vmatmul.f32.gmra.mxu0 %v893
  %v1105 = vpop.f32.mrf.mxu0
  %v1106 = vadd.f32 0.0, %v1105
  %1107 = vmatmul.f32.gmra.mxu0 %v896
  %v1108 = vpop.f32.mrf.mxu0
  %v1109 = vadd.f32 0.0, %v1108
  %1110 = vmatmul.f32.gmra.mxu0 %v899
  %v1111 = vpop.f32.mrf.mxu0
  %v1112 = vadd.f32 0.0, %v1111
  %1113 = vdwg.mxu0
  %vm1114 = vcmask 261120
  %v1115 = vsel %vm1114, %v923, 0.0
  %v1116 = vsel %vm1114, %v926, 0.0
  %v1117 = vadd.f32 %v1115, %v1116
  %v1118 = vsel %vm1114, %v929, 0.0
  %v1119 = vadd.f32 %v1117, %v1118
  %v1120 = vsel %vm1114, %v932, 0.0
  %v1121 = vadd.f32 %v1119, %v1120
  %v1122 = vsel %vm1114, %v935, 0.0
  %v1123 = vadd.f32 %v1121, %v1122
  %v1124 = vsel %vm1114, %v938, 0.0
  %v1125 = vadd.f32 %v1123, %v1124
  %v1126 = vsel %vm1114, %v941, 0.0
  %v1127 = vadd.f32 %v1125, %v1126
  %v1128 = vsel %vm1114, %v944, 0.0
  %v1129 = vadd.f32 %v1127, %v1128
  %v1130 = vsel %vm1114, %v947, 0.0
  %v1131 = vadd.f32 %v1129, %v1130
  %v1132 = vsel %vm1114, %v950, 0.0
  %v1133 = vadd.f32 %v1131, %v1132
  %v1134 = vsel %vm1114, %v953, 0.0
  %v1135 = vadd.f32 %v1133, %v1134
  %v1136 = vsel %vm1114, %v956, 0.0
  %v1137 = vadd.f32 %v1135, %v1136
  %v1138 = vsel %vm1114, %v959, 0.0
  %v1139 = vadd.f32 %v1137, %v1138
  %v1140 = vsel %vm1114, %v962, 0.0
  %v1141 = vadd.f32 %v1139, %v1140
  %v1142 = vsel %vm1114, %v965, 0.0
  %v1143 = vadd.f32 %v1141, %v1142
  %v1144 = vsel %vm1114, %v968, 0.0
  %v1145 = vadd.f32 %v1143, %v1144
  %v1146 = vsel %vm1114, %v971, 0.0
  %v1147 = vadd.f32 %v1145, %v1146
  %v1148 = vsel %vm1114, %v974, 0.0
  %v1149 = vadd.f32 %v1147, %v1148
  %v1150 = vsel %vm1114, %v977, 0.0
  %v1151 = vadd.f32 %v1149, %v1150
  %v1152 = vsel %vm1114, %v980, 0.0
  %v1153 = vadd.f32 %v1151, %v1152
  %v1154 = vsel %vm1114, %v983, 0.0
  %v1155 = vadd.f32 %v1153, %v1154
  %v1156 = vsel %vm1114, %v986, 0.0
  %v1157 = vadd.f32 %v1155, %v1156
  %v1158 = vsel %vm1114, %v989, 0.0
  %v1159 = vadd.f32 %v1157, %v1158
  %v1160 = vsel %vm1114, %v992, 0.0
  %v1161 = vadd.f32 %v1159, %v1160
  %v1162 = vsel %vm1114, %v995, 0.0
  %v1163 = vadd.f32 %v1161, %v1162
  %v1164 = vsel %vm1114, %v998, 0.0
  %v1165 = vadd.f32 %v1163, %v1164
  %v1166 = vsel %vm1114, %v1001, 0.0
  %v1167 = vadd.f32 %v1165, %v1166
  %v1168 = vsel %vm1114, %v1004, 0.0
  %v1169 = vadd.f32 %v1167, %v1168
  %v1170 = vsel %vm1114, %v1007, 0.0
  %v1171 = vadd.f32 %v1169, %v1170
  %v1172 = vsel %vm1114, %v1010, 0.0
  %v1173 = vadd.f32 %v1171, %v1172
  %v1174 = vsel %vm1114, %v1013, 0.0
  %v1175 = vadd.f32 %v1173, %v1174
  %v1176 = vsel %vm1114, %v1016, 0.0
  %v1177 = vadd.f32 %v1175, %v1176
  %v1178 = vsel %vm1114, %v1019, 0.0
  %v1179 = vadd.f32 %v1177, %v1178
  %v1180 = vsel %vm1114, %v1022, 0.0
  %v1181 = vadd.f32 %v1179, %v1180
  %v1182 = vsel %vm1114, %v1025, 0.0
  %v1183 = vadd.f32 %v1181, %v1182
  %v1184 = vsel %vm1114, %v1028, 0.0
  %v1185 = vadd.f32 %v1183, %v1184
  %v1186 = vsel %vm1114, %v1031, 0.0
  %v1187 = vadd.f32 %v1185, %v1186
  %v1188 = vsel %vm1114, %v1034, 0.0
  %v1189 = vadd.f32 %v1187, %v1188
  %v1190 = vsel %vm1114, %v1037, 0.0
  %v1191 = vadd.f32 %v1189, %v1190
  %v1192 = vsel %vm1114, %v1040, 0.0
  %v1193 = vadd.f32 %v1191, %v1192
  %v1194 = vsel %vm1114, %v1043, 0.0
  %v1195 = vadd.f32 %v1193, %v1194
  %v1196 = vsel %vm1114, %v1046, 0.0
  %v1197 = vadd.f32 %v1195, %v1196
  %v1198 = vsel %vm1114, %v1049, 0.0
  %v1199 = vadd.f32 %v1197, %v1198
  %v1200 = vsel %vm1114, %v1052, 0.0
  %v1201 = vadd.f32 %v1199, %v1200
  %v1202 = vsel %vm1114, %v1055, 0.0
  %v1203 = vadd.f32 %v1201, %v1202
  %v1204 = vsel %vm1114, %v1058, 0.0
  %v1205 = vadd.f32 %v1203, %v1204
  %v1206 = vsel %vm1114, %v1061, 0.0
  %v1207 = vadd.f32 %v1205, %v1206
  %v1208 = vsel %vm1114, %v1064, 0.0
  %v1209 = vadd.f32 %v1207, %v1208
  %v1210 = vsel %vm1114, %v1067, 0.0
  %v1211 = vadd.f32 %v1209, %v1210
  %v1212 = vsel %vm1114, %v1070, 0.0
  %v1213 = vadd.f32 %v1211, %v1212
  %v1214 = vsel %vm1114, %v1073, 0.0
  %v1215 = vadd.f32 %v1213, %v1214
  %v1216 = vsel %vm1114, %v1076, 0.0
  %v1217 = vadd.f32 %v1215, %v1216
  %v1218 = vsel %vm1114, %v1079, 0.0
  %v1219 = vadd.f32 %v1217, %v1218
  %v1220 = vsel %vm1114, %v1082, 0.0
  %v1221 = vadd.f32 %v1219, %v1220
  %v1222 = vsel %vm1114, %v1085, 0.0
  %v1223 = vadd.f32 %v1221, %v1222
  %v1224 = vsel %vm1114, %v1088, 0.0
  %v1225 = vadd.f32 %v1223, %v1224
  %v1226 = vsel %vm1114, %v1091, 0.0
  %v1227 = vadd.f32 %v1225, %v1226
  %v1228 = vsel %vm1114, %v1094, 0.0
  %v1229 = vadd.f32 %v1227, %v1228
  %v1230 = vsel %vm1114, %v1097, 0.0
  %v1231 = vadd.f32 %v1229, %v1230
  %v1232 = vsel %vm1114, %v1100, 0.0
  %v1233 = vadd.f32 %v1231, %v1232
  %v1234 = vsel %vm1114, %v1103, 0.0
  %v1235 = vadd.f32 %v1233, %v1234
  %v1236 = vsel %vm1114, %v1106, 0.0
  %v1237 = vadd.f32 %v1235, %v1236
  %v1238 = vsel %vm1114, %v1109, 0.0
  %v1239 = vadd.f32 %v1237, %v1238
  %v1240 = vsel %vm1114, %v1112, 0.0
  %v1241 = vadd.f32 %v1239, %v1240
  %v1242 = vrot.slane %v1241, 4
  %v1243 = vadd.f32 %v1241, %v1242
  %v1244 = vrot.slane %v1243, 2
  %v1245 = vadd.f32 %v1243, %v1244
  %v1246 = vrot.slane %v1245, 1
  %v1247 = vadd.f32 %v1245, %v1246
  %v1248 = vmul.f32 %v1247, %v230
  %v1249 = vsub.f32 %v923, %v1248
  %v1250 = vsub.f32 %v926, %v1248
  %v1251 = vsub.f32 %v929, %v1248
  %v1252 = vsub.f32 %v932, %v1248
  %v1253 = vsub.f32 %v935, %v1248
  %v1254 = vsub.f32 %v938, %v1248
  %v1255 = vsub.f32 %v941, %v1248
  %v1256 = vsub.f32 %v944, %v1248
  %v1257 = vsub.f32 %v947, %v1248
  %v1258 = vsub.f32 %v950, %v1248
  %v1259 = vsub.f32 %v953, %v1248
  %v1260 = vsub.f32 %v956, %v1248
  %v1261 = vsub.f32 %v959, %v1248
  %v1262 = vsub.f32 %v962, %v1248
  %v1263 = vsub.f32 %v965, %v1248
  %v1264 = vsub.f32 %v968, %v1248
  %v1265 = vsub.f32 %v971, %v1248
  %v1266 = vsub.f32 %v974, %v1248
  %v1267 = vsub.f32 %v977, %v1248
  %v1268 = vsub.f32 %v980, %v1248
  %v1269 = vsub.f32 %v983, %v1248
  %v1270 = vsub.f32 %v986, %v1248
  %v1271 = vsub.f32 %v989, %v1248
  %v1272 = vsub.f32 %v992, %v1248
  %v1273 = vsub.f32 %v995, %v1248
  %v1274 = vsub.f32 %v998, %v1248
  %v1275 = vsub.f32 %v1001, %v1248
  %v1276 = vsub.f32 %v1004, %v1248
  %v1277 = vsub.f32 %v1007, %v1248
  %v1278 = vsub.f32 %v1010, %v1248
  %v1279 = vsub.f32 %v1013, %v1248
  %v1280 = vsub.f32 %v1016, %v1248
  %v1281 = vsub.f32 %v1019, %v1248
  %v1282 = vsub.f32 %v1022, %v1248
  %v1283 = vsub.f32 %v1025, %v1248
  %v1284 = vsub.f32 %v1028, %v1248
  %v1285 = vsub.f32 %v1031, %v1248
  %v1286 = vsub.f32 %v1034, %v1248
  %v1287 = vsub.f32 %v1037, %v1248
  %v1288 = vsub.f32 %v1040, %v1248
  %v1289 = vsub.f32 %v1043, %v1248
  %v1290 = vsub.f32 %v1046, %v1248
  %v1291 = vsub.f32 %v1049, %v1248
  %v1292 = vsub.f32 %v1052, %v1248
  %v1293 = vsub.f32 %v1055, %v1248
  %v1294 = vsub.f32 %v1058, %v1248
  %v1295 = vsub.f32 %v1061, %v1248
  %v1296 = vsub.f32 %v1064, %v1248
  %v1297 = vsub.f32 %v1067, %v1248
  %v1298 = vsub.f32 %v1070, %v1248
  %v1299 = vsub.f32 %v1073, %v1248
  %v1300 = vsub.f32 %v1076, %v1248
  %v1301 = vsub.f32 %v1079, %v1248
  %v1302 = vsub.f32 %v1082, %v1248
  %v1303 = vsub.f32 %v1085, %v1248
  %v1304 = vsub.f32 %v1088, %v1248
  %v1305 = vsub.f32 %v1091, %v1248
  %v1306 = vsub.f32 %v1094, %v1248
  %v1307 = vsub.f32 %v1097, %v1248
  %v1308 = vsub.f32 %v1100, %v1248
  %v1309 = vsub.f32 %v1103, %v1248
  %v1310 = vsub.f32 %v1106, %v1248
  %v1311 = vsub.f32 %v1109, %v1248
  %v1312 = vsub.f32 %v1112, %v1248
  %v1313 = vmul.f32 %v1249, %v1249
  %v1314 = vmul.f32 %v1250, %v1250
  %v1315 = vmul.f32 %v1251, %v1251
  %v1316 = vmul.f32 %v1252, %v1252
  %v1317 = vmul.f32 %v1253, %v1253
  %v1318 = vmul.f32 %v1254, %v1254
  %v1319 = vmul.f32 %v1255, %v1255
  %v1320 = vmul.f32 %v1256, %v1256
  %v1321 = vmul.f32 %v1257, %v1257
  %v1322 = vmul.f32 %v1258, %v1258
  %v1323 = vmul.f32 %v1259, %v1259
  %v1324 = vmul.f32 %v1260, %v1260
  %v1325 = vmul.f32 %v1261, %v1261
  %v1326 = vmul.f32 %v1262, %v1262
  %v1327 = vmul.f32 %v1263, %v1263
  %v1328 = vmul.f32 %v1264, %v1264
  %v1329 = vmul.f32 %v1265, %v1265
  %v1330 = vmul.f32 %v1266, %v1266
  %v1331 = vmul.f32 %v1267, %v1267
  %v1332 = vmul.f32 %v1268, %v1268
  %v1333 = vmul.f32 %v1269, %v1269
  %v1334 = vmul.f32 %v1270, %v1270
  %v1335 = vmul.f32 %v1271, %v1271
  %v1336 = vmul.f32 %v1272, %v1272
  %v1337 = vmul.f32 %v1273, %v1273
  %v1338 = vmul.f32 %v1274, %v1274
  %v1339 = vmul.f32 %v1275, %v1275
  %v1340 = vmul.f32 %v1276, %v1276
  %v1341 = vmul.f32 %v1277, %v1277
  %v1342 = vmul.f32 %v1278, %v1278
  %v1343 = vmul.f32 %v1279, %v1279
  %v1344 = vmul.f32 %v1280, %v1280
  %v1345 = vmul.f32 %v1281, %v1281
  %v1346 = vmul.f32 %v1282, %v1282
  %v1347 = vmul.f32 %v1283, %v1283
  %v1348 = vmul.f32 %v1284, %v1284
  %v1349 = vmul.f32 %v1285, %v1285
  %v1350 = vmul.f32 %v1286, %v1286
  %v1351 = vmul.f32 %v1287, %v1287
  %v1352 = vmul.f32 %v1288, %v1288
  %v1353 = vmul.f32 %v1289, %v1289
  %v1354 = vmul.f32 %v1290, %v1290
  %v1355 = vmul.f32 %v1291, %v1291
  %v1356 = vmul.f32 %v1292, %v1292
  %v1357 = vmul.f32 %v1293, %v1293
  %v1358 = vmul.f32 %v1294, %v1294
  %v1359 = vmul.f32 %v1295, %v1295
  %v1360 = vmul.f32 %v1296, %v1296
  %v1361 = vmul.f32 %v1297, %v1297
  %v1362 = vmul.f32 %v1298, %v1298
  %v1363 = vmul.f32 %v1299, %v1299
  %v1364 = vmul.f32 %v1300, %v1300
  %v1365 = vmul.f32 %v1301, %v1301
  %v1366 = vmul.f32 %v1302, %v1302
  %v1367 = vmul.f32 %v1303, %v1303
  %v1368 = vmul.f32 %v1304, %v1304
  %v1369 = vmul.f32 %v1305, %v1305
  %v1370 = vmul.f32 %v1306, %v1306
  %v1371 = vmul.f32 %v1307, %v1307
  %v1372 = vmul.f32 %v1308, %v1308
  %v1373 = vmul.f32 %v1309, %v1309
  %v1374 = vmul.f32 %v1310, %v1310
  %v1375 = vmul.f32 %v1311, %v1311
  %v1376 = vmul.f32 %v1312, %v1312
  %v1377 = vsel %vm1114, %v1313, 0.0
  %v1378 = vsel %vm1114, %v1314, 0.0
  %v1379 = vadd.f32 %v1377, %v1378
  %v1380 = vsel %vm1114, %v1315, 0.0
  %v1381 = vadd.f32 %v1379, %v1380
  %v1382 = vsel %vm1114, %v1316, 0.0
  %v1383 = vadd.f32 %v1381, %v1382
  %v1384 = vsel %vm1114, %v1317, 0.0
  %v1385 = vadd.f32 %v1383, %v1384
  %v1386 = vsel %vm1114, %v1318, 0.0
  %v1387 = vadd.f32 %v1385, %v1386
  %v1388 = vsel %vm1114, %v1319, 0.0
  %v1389 = vadd.f32 %v1387, %v1388
  %v1390 = vsel %vm1114, %v1320, 0.0
  %v1391 = vadd.f32 %v1389, %v1390
  %v1392 = vsel %vm1114, %v1321, 0.0
  %v1393 = vadd.f32 %v1391, %v1392
  %v1394 = vsel %vm1114, %v1322, 0.0
  %v1395 = vadd.f32 %v1393, %v1394
  %v1396 = vsel %vm1114, %v1323, 0.0
  %v1397 = vadd.f32 %v1395, %v1396
  %v1398 = vsel %vm1114, %v1324, 0.0
  %v1399 = vadd.f32 %v1397, %v1398
  %v1400 = vsel %vm1114, %v1325, 0.0
  %v1401 = vadd.f32 %v1399, %v1400
  %v1402 = vsel %vm1114, %v1326, 0.0
  %v1403 = vadd.f32 %v1401, %v1402
  %v1404 = vsel %vm1114, %v1327, 0.0
  %v1405 = vadd.f32 %v1403, %v1404
  %v1406 = vsel %vm1114, %v1328, 0.0
  %v1407 = vadd.f32 %v1405, %v1406
  %v1408 = vsel %vm1114, %v1329, 0.0
  %v1409 = vadd.f32 %v1407, %v1408
  %v1410 = vsel %vm1114, %v1330, 0.0
  %v1411 = vadd.f32 %v1409, %v1410
  %v1412 = vsel %vm1114, %v1331, 0.0
  %v1413 = vadd.f32 %v1411, %v1412
  %v1414 = vsel %vm1114, %v1332, 0.0
  %v1415 = vadd.f32 %v1413, %v1414
  %v1416 = vsel %vm1114, %v1333, 0.0
  %v1417 = vadd.f32 %v1415, %v1416
  %v1418 = vsel %vm1114, %v1334, 0.0
  %v1419 = vadd.f32 %v1417, %v1418
  %v1420 = vsel %vm1114, %v1335, 0.0
  %v1421 = vadd.f32 %v1419, %v1420
  %v1422 = vsel %vm1114, %v1336, 0.0
  %v1423 = vadd.f32 %v1421, %v1422
  %v1424 = vsel %vm1114, %v1337, 0.0
  %v1425 = vadd.f32 %v1423, %v1424
  %v1426 = vsel %vm1114, %v1338, 0.0
  %v1427 = vadd.f32 %v1425, %v1426
  %v1428 = vsel %vm1114, %v1339, 0.0
  %v1429 = vadd.f32 %v1427, %v1428
  %v1430 = vsel %vm1114, %v1340, 0.0
  %v1431 = vadd.f32 %v1429, %v1430
  %v1432 = vsel %vm1114, %v1341, 0.0
  %v1433 = vadd.f32 %v1431, %v1432
  %v1434 = vsel %vm1114, %v1342, 0.0
  %v1435 = vadd.f32 %v1433, %v1434
  %v1436 = vsel %vm1114, %v1343, 0.0
  %v1437 = vadd.f32 %v1435, %v1436
  %v1438 = vsel %vm1114, %v1344, 0.0
  %v1439 = vadd.f32 %v1437, %v1438
  %v1440 = vsel %vm1114, %v1345, 0.0
  %v1441 = vadd.f32 %v1439, %v1440
  %v1442 = vsel %vm1114, %v1346, 0.0
  %v1443 = vadd.f32 %v1441, %v1442
  %v1444 = vsel %vm1114, %v1347, 0.0
  %v1445 = vadd.f32 %v1443, %v1444
  %v1446 = vsel %vm1114, %v1348, 0.0
  %v1447 = vadd.f32 %v1445, %v1446
  %v1448 = vsel %vm1114, %v1349, 0.0
  %v1449 = vadd.f32 %v1447, %v1448
  %v1450 = vsel %vm1114, %v1350, 0.0
  %v1451 = vadd.f32 %v1449, %v1450
  %v1452 = vsel %vm1114, %v1351, 0.0
  %v1453 = vadd.f32 %v1451, %v1452
  %v1454 = vsel %vm1114, %v1352, 0.0
  %v1455 = vadd.f32 %v1453, %v1454
  %v1456 = vsel %vm1114, %v1353, 0.0
  %v1457 = vadd.f32 %v1455, %v1456
  %v1458 = vsel %vm1114, %v1354, 0.0
  %v1459 = vadd.f32 %v1457, %v1458
  %v1460 = vsel %vm1114, %v1355, 0.0
  %v1461 = vadd.f32 %v1459, %v1460
  %v1462 = vsel %vm1114, %v1356, 0.0
  %v1463 = vadd.f32 %v1461, %v1462
  %v1464 = vsel %vm1114, %v1357, 0.0
  %v1465 = vadd.f32 %v1463, %v1464
  %v1466 = vsel %vm1114, %v1358, 0.0
  %v1467 = vadd.f32 %v1465, %v1466
  %v1468 = vsel %vm1114, %v1359, 0.0
  %v1469 = vadd.f32 %v1467, %v1468
  %v1470 = vsel %vm1114, %v1360, 0.0
  %v1471 = vadd.f32 %v1469, %v1470
  %v1472 = vsel %vm1114, %v1361, 0.0
  %v1473 = vadd.f32 %v1471, %v1472
  %v1474 = vsel %vm1114, %v1362, 0.0
  %v1475 = vadd.f32 %v1473, %v1474
  %v1476 = vsel %vm1114, %v1363, 0.0
  %v1477 = vadd.f32 %v1475, %v1476
  %v1478 = vsel %vm1114, %v1364, 0.0
  %v1479 = vadd.f32 %v1477, %v1478
  %v1480 = vsel %vm1114, %v1365, 0.0
  %v1481 = vadd.f32 %v1479, %v1480
  %v1482 = vsel %vm1114, %v1366, 0.0
  %v1483 = vadd.f32 %v1481, %v1482
  %v1484 = vsel %vm1114, %v1367, 0.0
  %v1485 = vadd.f32 %v1483, %v1484
  %v1486 = vsel %vm1114, %v1368, 0.0
  %v1487 = vadd.f32 %v1485, %v1486
  %v1488 = vsel %vm1114, %v1369, 0.0
  %v1489 = vadd.f32 %v1487, %v1488
  %v1490 = vsel %vm1114, %v1370, 0.0
  %v1491 = vadd.f32 %v1489, %v1490
  %v1492 = vsel %vm1114, %v1371, 0.0
  %v1493 = vadd.f32 %v1491, %v1492
  %v1494 = vsel %vm1114, %v1372, 0.0
  %v1495 = vadd.f32 %v1493, %v1494
  %v1496 = vsel %vm1114, %v1373, 0.0
  %v1497 = vadd.f32 %v1495, %v1496
  %v1498 = vsel %vm1114, %v1374, 0.0
  %v1499 = vadd.f32 %v1497, %v1498
  %v1500 = vsel %vm1114, %v1375, 0.0
  %v1501 = vadd.f32 %v1499, %v1500
  %v1502 = vsel %vm1114, %v1376, 0.0
  %v1503 = vadd.f32 %v1501, %v1502
  %v1504 = vrot.slane %v1503, 4
  %v1505 = vadd.f32 %v1503, %v1504
  %v1506 = vrot.slane %v1505, 2
  %v1507 = vadd.f32 %v1505, %v1506
  %v1508 = vrot.slane %v1507, 1
  %v1509 = vadd.f32 %v1507, %v1508
  %v1510 = vmul.f32 %v1509, %v230
  %v1511 = vld [vmem:[%s4] sm:$0x1]
  %v1512 = vadd.f32 %v1510, 1e-05
  %v1513 = vrsqrt.pop %v1512
  %v1514 = vmul.f32 %v1513, %v1512
  %v1515 = vmul.f32 %v1514, %v1513
  %v1516 = vmul.f32 0.5, %v1515
  %v1517 = vsub.f32 1.5, %v1516
  %v1518 = vmul.f32 %v1513, %v1517
  %vm1519 = vweird.f32 %v1512
  %vm1520 = vweird.f32 %v1513
  %vm1521 = vmor %vm1519, %vm1520
  %v1522 = vsel %vm1521, %v1513, %v1518
  %v1523 = vmul.f32 %v1511, %v1522
  %v1524 = vld [vmem:[%s5] sm:$0x1]
  %v1525 = vmul.f32 %v1248, %v1523
  %v1526 = vsub.f32 %v1524, %v1525
  %v1528 = vperm.slane %v1523, 0
  %v1530 = vmul.f32 %v923, %v1528
  %v1531 = vmul.f32 %v926, %v1528
  %v1532 = vmul.f32 %v929, %v1528
  %v1533 = vmul.f32 %v932, %v1528
  %v1534 = vmul.f32 %v935, %v1528
  %v1535 = vmul.f32 %v938, %v1528
  %v1536 = vmul.f32 %v941, %v1528
  %v1537 = vmul.f32 %v944, %v1528
  %v1538 = vmul.f32 %v947, %v1528
  %v1539 = vmul.f32 %v950, %v1528
  %v1540 = vmul.f32 %v953, %v1528
  %v1541 = vmul.f32 %v956, %v1528
  %v1542 = vmul.f32 %v959, %v1528
  %v1543 = vmul.f32 %v962, %v1528
  %v1544 = vmul.f32 %v965, %v1528
  %v1545 = vmul.f32 %v968, %v1528
  %v1546 = vmul.f32 %v971, %v1528
  %v1547 = vmul.f32 %v974, %v1528
  %v1548 = vmul.f32 %v977, %v1528
  %v1549 = vmul.f32 %v980, %v1528
  %v1550 = vmul.f32 %v983, %v1528
  %v1551 = vmul.f32 %v986, %v1528
  %v1552 = vmul.f32 %v989, %v1528
  %v1553 = vmul.f32 %v992, %v1528
  %v1554 = vmul.f32 %v995, %v1528
  %v1555 = vmul.f32 %v998, %v1528
  %v1556 = vmul.f32 %v1001, %v1528
  %v1557 = vmul.f32 %v1004, %v1528
  %v1558 = vmul.f32 %v1007, %v1528
  %v1559 = vmul.f32 %v1010, %v1528
  %v1560 = vmul.f32 %v1013, %v1528
  %v1561 = vmul.f32 %v1016, %v1528
  %v1562 = vmul.f32 %v1019, %v1528
  %v1563 = vmul.f32 %v1022, %v1528
  %v1564 = vmul.f32 %v1025, %v1528
  %v1565 = vmul.f32 %v1028, %v1528
  %v1566 = vmul.f32 %v1031, %v1528
  %v1567 = vmul.f32 %v1034, %v1528
  %v1568 = vmul.f32 %v1037, %v1528
  %v1569 = vmul.f32 %v1040, %v1528
  %v1570 = vmul.f32 %v1043, %v1528
  %v1571 = vmul.f32 %v1046, %v1528
  %v1572 = vmul.f32 %v1049, %v1528
  %v1573 = vmul.f32 %v1052, %v1528
  %v1574 = vmul.f32 %v1055, %v1528
  %v1575 = vmul.f32 %v1058, %v1528
  %v1576 = vmul.f32 %v1061, %v1528
  %v1577 = vmul.f32 %v1064, %v1528
  %v1578 = vmul.f32 %v1067, %v1528
  %v1579 = vmul.f32 %v1070, %v1528
  %v1580 = vmul.f32 %v1073, %v1528
  %v1581 = vmul.f32 %v1076, %v1528
  %v1582 = vmul.f32 %v1079, %v1528
  %v1583 = vmul.f32 %v1082, %v1528
  %v1584 = vmul.f32 %v1085, %v1528
  %v1585 = vmul.f32 %v1088, %v1528
  %v1586 = vmul.f32 %v1091, %v1528
  %v1587 = vmul.f32 %v1094, %v1528
  %v1588 = vmul.f32 %v1097, %v1528
  %v1589 = vmul.f32 %v1100, %v1528
  %v1590 = vmul.f32 %v1103, %v1528
  %v1591 = vmul.f32 %v1106, %v1528
  %v1592 = vmul.f32 %v1109, %v1528
  %v1593 = vmul.f32 %v1112, %v1528
  %v1595 = vperm.slane %v1526, 0
  %v1597 = vadd.f32 %v1530, %v1595
  %v1598 = vadd.f32 %v1531, %v1595
  %v1599 = vadd.f32 %v1532, %v1595
  %v1600 = vadd.f32 %v1533, %v1595
  %v1601 = vadd.f32 %v1534, %v1595
  %v1602 = vadd.f32 %v1535, %v1595
  %v1603 = vadd.f32 %v1536, %v1595
  %v1604 = vadd.f32 %v1537, %v1595
  %v1605 = vadd.f32 %v1538, %v1595
  %v1606 = vadd.f32 %v1539, %v1595
  %v1607 = vadd.f32 %v1540, %v1595
  %v1608 = vadd.f32 %v1541, %v1595
  %v1609 = vadd.f32 %v1542, %v1595
  %v1610 = vadd.f32 %v1543, %v1595
  %v1611 = vadd.f32 %v1544, %v1595
  %v1612 = vadd.f32 %v1545, %v1595
  %v1613 = vadd.f32 %v1546, %v1595
  %v1614 = vadd.f32 %v1547, %v1595
  %v1615 = vadd.f32 %v1548, %v1595
  %v1616 = vadd.f32 %v1549, %v1595
  %v1617 = vadd.f32 %v1550, %v1595
  %v1618 = vadd.f32 %v1551, %v1595
  %v1619 = vadd.f32 %v1552, %v1595
  %v1620 = vadd.f32 %v1553, %v1595
  %v1621 = vadd.f32 %v1554, %v1595
  %v1622 = vadd.f32 %v1555, %v1595
  %v1623 = vadd.f32 %v1556, %v1595
  %v1624 = vadd.f32 %v1557, %v1595
  %v1625 = vadd.f32 %v1558, %v1595
  %v1626 = vadd.f32 %v1559, %v1595
  %v1627 = vadd.f32 %v1560, %v1595
  %v1628 = vadd.f32 %v1561, %v1595
  %v1629 = vadd.f32 %v1562, %v1595
  %v1630 = vadd.f32 %v1563, %v1595
  %v1631 = vadd.f32 %v1564, %v1595
  %v1632 = vadd.f32 %v1565, %v1595
  %v1633 = vadd.f32 %v1566, %v1595
  %v1634 = vadd.f32 %v1567, %v1595
  %v1635 = vadd.f32 %v1568, %v1595
  %v1636 = vadd.f32 %v1569, %v1595
  %v1637 = vadd.f32 %v1570, %v1595
  %v1638 = vadd.f32 %v1571, %v1595
  %v1639 = vadd.f32 %v1572, %v1595
  %v1640 = vadd.f32 %v1573, %v1595
  %v1641 = vadd.f32 %v1574, %v1595
  %v1642 = vadd.f32 %v1575, %v1595
  %v1643 = vadd.f32 %v1576, %v1595
  %v1644 = vadd.f32 %v1577, %v1595
  %v1645 = vadd.f32 %v1578, %v1595
  %v1646 = vadd.f32 %v1579, %v1595
  %v1647 = vadd.f32 %v1580, %v1595
  %v1648 = vadd.f32 %v1581, %v1595
  %v1649 = vadd.f32 %v1582, %v1595
  %v1650 = vadd.f32 %v1583, %v1595
  %v1651 = vadd.f32 %v1584, %v1595
  %v1652 = vadd.f32 %v1585, %v1595
  %v1653 = vadd.f32 %v1586, %v1595
  %v1654 = vadd.f32 %v1587, %v1595
  %v1655 = vadd.f32 %v1588, %v1595
  %v1656 = vadd.f32 %v1589, %v1595
  %v1657 = vadd.f32 %v1590, %v1595
  %v1658 = vadd.f32 %v1591, %v1595
  %v1659 = vadd.f32 %v1592, %v1595
  %v1660 = vadd.f32 %v1593, %v1595
  %v1661 = vmax.f32 %v1597, 0.0
  %v1662 = vmax.f32 %v1598, 0.0
  %v1663 = vmax.f32 %v1599, 0.0
  %v1664 = vmax.f32 %v1600, 0.0
  %v1665 = vmax.f32 %v1601, 0.0
  %v1666 = vmax.f32 %v1602, 0.0
  %v1667 = vmax.f32 %v1603, 0.0
  %v1668 = vmax.f32 %v1604, 0.0
  %v1669 = vmax.f32 %v1605, 0.0
  %v1670 = vmax.f32 %v1606, 0.0
  %v1671 = vmax.f32 %v1607, 0.0
  %v1672 = vmax.f32 %v1608, 0.0
  %v1673 = vmax.f32 %v1609, 0.0
  %v1674 = vmax.f32 %v1610, 0.0
  %v1675 = vmax.f32 %v1611, 0.0
  %v1676 = vmax.f32 %v1612, 0.0
  %v1677 = vmax.f32 %v1613, 0.0
  %v1678 = vmax.f32 %v1614, 0.0
  %v1679 = vmax.f32 %v1615, 0.0
  %v1680 = vmax.f32 %v1616, 0.0
  %v1681 = vmax.f32 %v1617, 0.0
  %v1682 = vmax.f32 %v1618, 0.0
  %v1683 = vmax.f32 %v1619, 0.0
  %v1684 = vmax.f32 %v1620, 0.0
  %v1685 = vmax.f32 %v1621, 0.0
  %v1686 = vmax.f32 %v1622, 0.0
  %v1687 = vmax.f32 %v1623, 0.0
  %v1688 = vmax.f32 %v1624, 0.0
  %v1689 = vmax.f32 %v1625, 0.0
  %v1690 = vmax.f32 %v1626, 0.0
  %v1691 = vmax.f32 %v1627, 0.0
  %v1692 = vmax.f32 %v1628, 0.0
  %v1693 = vmax.f32 %v1629, 0.0
  %v1694 = vmax.f32 %v1630, 0.0
  %v1695 = vmax.f32 %v1631, 0.0
  %v1696 = vmax.f32 %v1632, 0.0
  %v1697 = vmax.f32 %v1633, 0.0
  %v1698 = vmax.f32 %v1634, 0.0
  %v1699 = vmax.f32 %v1635, 0.0
  %v1700 = vmax.f32 %v1636, 0.0
  %v1701 = vmax.f32 %v1637, 0.0
  %v1702 = vmax.f32 %v1638, 0.0
  %v1703 = vmax.f32 %v1639, 0.0
  %v1704 = vmax.f32 %v1640, 0.0
  %v1705 = vmax.f32 %v1641, 0.0
  %v1706 = vmax.f32 %v1642, 0.0
  %v1707 = vmax.f32 %v1643, 0.0
  %v1708 = vmax.f32 %v1644, 0.0
  %v1709 = vmax.f32 %v1645, 0.0
  %v1710 = vmax.f32 %v1646, 0.0
  %v1711 = vmax.f32 %v1647, 0.0
  %v1712 = vmax.f32 %v1648, 0.0
  %v1713 = vmax.f32 %v1649, 0.0
  %v1714 = vmax.f32 %v1650, 0.0
  %v1715 = vmax.f32 %v1651, 0.0
  %v1716 = vmax.f32 %v1652, 0.0
  %v1717 = vmax.f32 %v1653, 0.0
  %v1718 = vmax.f32 %v1654, 0.0
  %v1719 = vmax.f32 %v1655, 0.0
  %v1720 = vmax.f32 %v1656, 0.0
  %v1721 = vmax.f32 %v1657, 0.0
  %v1722 = vmax.f32 %v1658, 0.0
  %v1723 = vmax.f32 %v1659, 0.0
  %v1724 = vmax.f32 %v1660, 0.0
  %1725 = vst.msk [vmem:[#allocation2] sm:$0xff] %vm1114, 0.0
  %1726 = vst.msk [vmem:[#allocation2 + $0x8] sm:$0xff] %vm1114, 0.0
  %vm1727 = vcmask 254976
  %1728 = vst.msk [vmem:[#allocation2 + $0x10] sm:$0x3] %vm1727, 0.0
  %1729 = vst.msk [vmem:[#allocation2 + $0x18] sm:$0xff] %vm1114, 0.0
  %1730 = vst.msk [vmem:[#allocation2 + $0x20] sm:$0xff] %vm1114, 0.0
  %1731 = vst.msk [vmem:[#allocation2 + $0x28] sm:$0x3] %vm1727, 0.0
  %1732 = vst.msk [vmem:[#allocation2 + $0x30] sm:$0xff] %vm1114, 0.0
  %1733 = vst.msk [vmem:[#allocation2 + $0x38] sm:$0xff] %vm1114, 0.0
  %1734 = vst.msk [vmem:[#allocation2 + $0x40] sm:$0x3] %vm1727, 0.0
  %1735 = vst.msk [vmem:[#allocation2 + $0x48] sm:$0xff] %vm1114, 0.0
  %1736 = vst.msk [vmem:[#allocation2 + $0x50] sm:$0xff] %vm1114, 0.0
  %1737 = vst.msk [vmem:[#allocation2 + $0x58] sm:$0x3] %vm1727, 0.0
  %1738 = vst.msk [vmem:[#allocation2 + $0x60] sm:$0xff] %vm1114, 0.0
  %1739 = vst.msk [vmem:[#allocation2 + $0x68] sm:$0xff] %vm1114, 0.0
  %1740 = vst.msk [vmem:[#allocation2 + $0x70] sm:$0x3] %vm1727, 0.0
  %1741 = vst.msk [vmem:[#allocation2 + $0x78] sm:$0xff] %vm1114, 0.0
  %1742 = vst.msk [vmem:[#allocation2 + $0x80] sm:$0xff] %vm1114, 0.0
  %1743 = vst.msk [vmem:[#allocation2 + $0x88] sm:$0x3] %vm1727, 0.0
  %1744 = vst.msk [vmem:[#allocation2 + $0x90] sm:$0xff] %vm1114, 0.0
  %1745 = vst.msk [vmem:[#allocation2 + $0x98] sm:$0xff] %vm1114, 0.0
  %1746 = vst.msk [vmem:[#allocation2 + $0xa0] sm:$0x3] %vm1727, 0.0
  %1747 = vst.msk [vmem:[#allocation2 + $0xa8] sm:$0xff] %vm1114, 0.0
  %1748 = vst.msk [vmem:[#allocation2 + $0xb0] sm:$0xff] %vm1114, 0.0
  %1749 = vst.msk [vmem:[#allocation2 + $0xb8] sm:$0x3] %vm1727, 0.0
  %1750 = vst.msk [vmem:[#allocation2 + $0xc0] sm:$0xff] %vm1114, 0.0
  %1751 = vst.msk [vmem:[#allocation2 + $0xc8] sm:$0xff] %vm1114, 0.0
  %1752 = vst.msk [vmem:[#allocation2 + $0xd0] sm:$0x3] %vm1727, 0.0
  %1753 = vst.msk [vmem:[#allocation2 + $0xd8] sm:$0xff] %vm1114, 0.0
  %1754 = vst.msk [vmem:[#allocation2 + $0xe0] sm:$0xff] %vm1114, 0.0
  %1755 = vst.msk [vmem:[#allocation2 + $0xe8] sm:$0x3] %vm1727, 0.0
  %1756 = vst.msk [vmem:[#allocation2 + $0xf0] sm:$0xff] %vm1114, 0.0
  %1757 = vst.msk [vmem:[#allocation2 + $0xf8] sm:$0xff] %vm1114, 0.0
  %1758 = vst.msk [vmem:[#allocation2 + $0x100] sm:$0x3] %vm1727, 0.0
  %1759 = vst.msk [vmem:[#allocation2 + $0x108] sm:$0xff] %vm1114, 0.0
  %1760 = vst.msk [vmem:[#allocation2 + $0x110] sm:$0xff] %vm1114, 0.0
  %1761 = vst.msk [vmem:[#allocation2 + $0x118] sm:$0x3] %vm1727, 0.0
  %1762 = vst.msk [vmem:[#allocation2 + $0x120] sm:$0xff] %vm1114, 0.0
  %1763 = vst.msk [vmem:[#allocation2 + $0x128] sm:$0xff] %vm1114, 0.0
  %1764 = vst.msk [vmem:[#allocation2 + $0x130] sm:$0x3] %vm1727, 0.0
  %1765 = vst.msk [vmem:[#allocation2 + $0x138] sm:$0xff] %vm1114, 0.0
  %1766 = vst.msk [vmem:[#allocation2 + $0x140] sm:$0xff] %vm1114, 0.0
  %1767 = vst.msk [vmem:[#allocation2 + $0x148] sm:$0x3] %vm1727, 0.0
  %1768 = vst.msk [vmem:[#allocation2 + $0x150] sm:$0xff] %vm1114, 0.0
  %1769 = vst.msk [vmem:[#allocation2 + $0x158] sm:$0xff] %vm1114, 0.0
  %1770 = vst.msk [vmem:[#allocation2 + $0x160] sm:$0x3] %vm1727, 0.0
  %1771 = vst.msk [vmem:[#allocation2 + $0x168] sm:$0xff] %vm1114, 0.0
  %1772 = vst.msk [vmem:[#allocation2 + $0x170] sm:$0xff] %vm1114, 0.0
  %1773 = vst.msk [vmem:[#allocation2 + $0x178] sm:$0x3] %vm1727, 0.0
  %1774 = vst.msk [vmem:[#allocation2 + $0x180] sm:$0xff] %vm1114, 0.0
  %1775 = vst.msk [vmem:[#allocation2 + $0x188] sm:$0xff] %vm1114, 0.0
  %1776 = vst.msk [vmem:[#allocation2 + $0x190] sm:$0x3] %vm1727, 0.0
  %1777 = vst.msk [vmem:[#allocation2 + $0x198] sm:$0xff] %vm1114, 0.0
  %1778 = vst.msk [vmem:[#allocation2 + $0x1a0] sm:$0xff] %vm1114, 0.0
  %1779 = vst.msk [vmem:[#allocation2 + $0x1a8] sm:$0x3] %vm1727, 0.0
  %1780 = vst.msk [vmem:[#allocation2 + $0x1b0] sm:$0xff] %vm1114, 0.0
  %1781 = vst.msk [vmem:[#allocation2 + $0x1b8] sm:$0xff] %vm1114, 0.0
  %1782 = vst.msk [vmem:[#allocation2 + $0x1c0] sm:$0x3] %vm1727, 0.0
  %1783 = vst.msk [vmem:[#allocation2 + $0x1c8] sm:$0xff] %vm1114, 0.0
  %1784 = vst.msk [vmem:[#allocation2 + $0x1d0] sm:$0xff] %vm1114, 0.0
  %1785 = vst.msk [vmem:[#allocation2 + $0x1d8] sm:$0x3] %vm1727, 0.0
  %1786 = vst.msk [vmem:[#allocation2 + $0x1e0] sm:$0xff] %vm1114, 0.0
  %1787 = vst.msk [vmem:[#allocation2 + $0x1e8] sm:$0xff] %vm1114, 0.0
  %1788 = vst.msk [vmem:[#allocation2 + $0x1f0] sm:$0x3] %vm1727, 0.0
  %1789 = vst.msk [vmem:[#allocation2 + $0x1f8] sm:$0xff] %vm1114, 0.0
  %1790 = vst.msk [vmem:[#allocation2 + $0x200] sm:$0xff] %vm1114, 0.0
  %1791 = vst.msk [vmem:[#allocation2 + $0x208] sm:$0x3] %vm1727, 0.0
  %1792 = vst.msk [vmem:[#allocation2 + $0x210] sm:$0xff] %vm1114, 0.0
  %1793 = vst.msk [vmem:[#allocation2 + $0x218] sm:$0xff] %vm1114, 0.0
  %1794 = vst.msk [vmem:[#allocation2 + $0x220] sm:$0x3] %vm1727, 0.0
  %1795 = vst.msk [vmem:[#allocation2 + $0x228] sm:$0xff] %vm1114, 0.0
  %1796 = vst.msk [vmem:[#allocation2 + $0x230] sm:$0xff] %vm1114, 0.0
  %1797 = vst.msk [vmem:[#allocation2 + $0x238] sm:$0x3] %vm1727, 0.0
  %1798 = vst.msk [vmem:[#allocation2 + $0x240] sm:$0xff] %vm1114, 0.0
  %1799 = vst.msk [vmem:[#allocation2 + $0x248] sm:$0xff] %vm1114, 0.0
  %1800 = vst.msk [vmem:[#allocation2 + $0x250] sm:$0x3] %vm1727, 0.0
  %1801 = vst.msk [vmem:[#allocation2 + $0x258] sm:$0xff] %vm1114, 0.0
  %1802 = vst.msk [vmem:[#allocation2 + $0x260] sm:$0xff] %vm1114, 0.0
  %1803 = vst.msk [vmem:[#allocation2 + $0x268] sm:$0x3] %vm1727, 0.0
  %1804 = vst.msk [vmem:[#allocation2 + $0x270] sm:$0xff] %vm1114, 0.0
  %1805 = vst.msk [vmem:[#allocation2 + $0x278] sm:$0xff] %vm1114, 0.0
  %1806 = vst.msk [vmem:[#allocation2 + $0x280] sm:$0x3] %vm1727, 0.0
  %1807 = vst.msk [vmem:[#allocation2 + $0x288] sm:$0xff] %vm1114, 0.0
  %1808 = vst.msk [vmem:[#allocation2 + $0x290] sm:$0xff] %vm1114, 0.0
  %1809 = vst.msk [vmem:[#allocation2 + $0x298] sm:$0x3] %vm1727, 0.0
  %1810 = vst.msk [vmem:[#allocation2 + $0x2a0] sm:$0xff] %vm1114, 0.0
  %1811 = vst.msk [vmem:[#allocation2 + $0x2a8] sm:$0xff] %vm1114, 0.0
  %1812 = vst.msk [vmem:[#allocation2 + $0x2b0] sm:$0x3] %vm1727, 0.0
  %1813 = vst.msk [vmem:[#allocation2 + $0x2b8] sm:$0xff] %vm1114, 0.0
  %1814 = vst.msk [vmem:[#allocation2 + $0x2c0] sm:$0xff] %vm1114, 0.0
  %1815 = vst.msk [vmem:[#allocation2 + $0x2c8] sm:$0x3] %vm1727, 0.0
  %1816 = vst.msk [vmem:[#allocation2 + $0x2d0] sm:$0xff] %vm1114, 0.0
  %1817 = vst.msk [vmem:[#allocation2 + $0x2d8] sm:$0xff] %vm1114, 0.0
  %1818 = vst.msk [vmem:[#allocation2 + $0x2e0] sm:$0x3] %vm1727, 0.0
  %1819 = vst.msk [vmem:[#allocation2 + $0x2e8] sm:$0xff] %vm1114, 0.0
  %1820 = vst.msk [vmem:[#allocation2 + $0x2f0] sm:$0xff] %vm1114, 0.0
  %1821 = vst.msk [vmem:[#allocation2 + $0x2f8] sm:$0x3] %vm1727, 0.0
  %1822 = vst.msk [vmem:[#allocation2 + $0x300] sm:$0xff] %vm1114, 0.0
  %1823 = vst.msk [vmem:[#allocation2 + $0x308] sm:$0xff] %vm1114, 0.0
  %1824 = vst.msk [vmem:[#allocation2 + $0x310] sm:$0x3] %vm1727, 0.0
  %1825 = vst.msk [vmem:[#allocation2 + $0x318] sm:$0xff] %vm1114, 0.0
  %1826 = vst.msk [vmem:[#allocation2 + $0x320] sm:$0xff] %vm1114, 0.0
  %1827 = vst.msk [vmem:[#allocation2 + $0x328] sm:$0x3] %vm1727, 0.0
  %1828 = vst.msk [vmem:[#allocation2 + $0x330] sm:$0xff] %vm1114, 0.0
  %1829 = vst.msk [vmem:[#allocation2 + $0x338] sm:$0xff] %vm1114, 0.0
  %1830 = vst.msk [vmem:[#allocation2 + $0x340] sm:$0x3] %vm1727, 0.0
  %1831 = vst.msk [vmem:[#allocation2 + $0x348] sm:$0xff] %vm1114, 0.0
  %1832 = vst.msk [vmem:[#allocation2 + $0x350] sm:$0xff] %vm1114, 0.0
  %1833 = vst.msk [vmem:[#allocation2 + $0x358] sm:$0x3] %vm1727, 0.0
  %s1834 = scalar_lea.vmem [#allocation2], 24
  %1835 = vst.msk [vmem:[%s1834 + $0x1] sm:$0xff] %vm1114, %v1661
  %1836 = vst.msk [vmem:[%s1834 + $0x9] sm:$0xff] %vm1114, %v1662
  %1837 = vst.msk [vmem:[%s1834 + $0x19] sm:$0xff] %vm1114, %v1663
  %1838 = vst.msk [vmem:[%s1834 + $0x21] sm:$0xff] %vm1114, %v1664
  %1839 = vst.msk [vmem:[%s1834 + $0x31] sm:$0xff] %vm1114, %v1665
  %1840 = vst.msk [vmem:[%s1834 + $0x39] sm:$0xff] %vm1114, %v1666
  %1841 = vst.msk [vmem:[%s1834 + $0x49] sm:$0xff] %vm1114, %v1667
  %1842 = vst.msk [vmem:[%s1834 + $0x51] sm:$0xff] %vm1114, %v1668
  %1843 = vst.msk [vmem:[%s1834 + $0x61] sm:$0xff] %vm1114, %v1669
  %1844 = vst.msk [vmem:[%s1834 + $0x69] sm:$0xff] %vm1114, %v1670
  %1845 = vst.msk [vmem:[%s1834 + $0x79] sm:$0xff] %vm1114, %v1671
  %1846 = vst.msk [vmem:[%s1834 + $0x81] sm:$0xff] %vm1114, %v1672
  %1847 = vst.msk [vmem:[%s1834 + $0x91] sm:$0xff] %vm1114, %v1673
  %1848 = vst.msk [vmem:[%s1834 + $0x99] sm:$0xff] %vm1114, %v1674
  %1849 = vst.msk [vmem:[%s1834 + $0xa9] sm:$0xff] %vm1114, %v1675
  %1850 = vst.msk [vmem:[%s1834 + $0xb1] sm:$0xff] %vm1114, %v1676
  %1851 = vst.msk [vmem:[%s1834 + $0xc1] sm:$0xff] %vm1114, %v1677
  %1852 = vst.msk [vmem:[%s1834 + $0xc9] sm:$0xff] %vm1114, %v1678
  %1853 = vst.msk [vmem:[%s1834 + $0xd9] sm:$0xff] %vm1114, %v1679
  %1854 = vst.msk [vmem:[%s1834 + $0xe1] sm:$0xff] %vm1114, %v1680
  %1855 = vst.msk [vmem:[%s1834 + $0xf1] sm:$0xff] %vm1114, %v1681
  %1856 = vst.msk [vmem:[%s1834 + $0xf9] sm:$0xff] %vm1114, %v1682
  %1857 = vst.msk [vmem:[%s1834 + $0x109] sm:$0xff] %vm1114, %v1683
  %1858 = vst.msk [vmem:[%s1834 + $0x111] sm:$0xff] %vm1114, %v1684
  %1859 = vst.msk [vmem:[%s1834 + $0x121] sm:$0xff] %vm1114, %v1685
  %1860 = vst.msk [vmem:[%s1834 + $0x129] sm:$0xff] %vm1114, %v1686
  %1861 = vst.msk [vmem:[%s1834 + $0x139] sm:$0xff] %vm1114, %v1687
  %1862 = vst.msk [vmem:[%s1834 + $0x141] sm:$0xff] %vm1114, %v1688
  %1863 = vst.msk [vmem:[%s1834 + $0x151] sm:$0xff] %vm1114, %v1689
  %1864 = vst.msk [vmem:[%s1834 + $0x159] sm:$0xff] %vm1114, %v1690
  %1865 = vst.msk [vmem:[%s1834 + $0x169] sm:$0xff] %vm1114, %v1691
  %1866 = vst.msk [vmem:[%s1834 + $0x171] sm:$0xff] %vm1114, %v1692
  %s1867 = scalar_lea.vmem [#allocation2], 456
  %1868 = vst.msk [vmem:[%s1867 + $0x1] sm:$0xff] %vm1114, %v1693
  %1869 = vst.msk [vmem:[%s1867 + $0x9] sm:$0xff] %vm1114, %v1694
  %1870 = vst.msk [vmem:[%s1867 + $0x19] sm:$0xff] %vm1114, %v1695
  %1871 = vst.msk [vmem:[%s1867 + $0x21] sm:$0xff] %vm1114, %v1696
  %1872 = vst.msk [vmem:[%s1867 + $0x31] sm:$0xff] %vm1114, %v1697
  %1873 = vst.msk [vmem:[%s1867 + $0x39] sm:$0xff] %vm1114, %v1698
  %1874 = vst.msk [vmem:[%s1867 + $0x49] sm:$0xff] %vm1114, %v1699
  %1875 = vst.msk [vmem:[%s1867 + $0x51] sm:$0xff] %vm1114, %v1700
  %1876 = vst.msk [vmem:[%s1867 + $0x61] sm:$0xff] %vm1114, %v1701
  %1877 = vst.msk [vmem:[%s1867 + $0x69] sm:$0xff] %vm1114, %v1702
  %1878 = vst.msk [vmem:[%s1867 + $0x79] sm:$0xff] %vm1114, %v1703
  %1879 = vst.msk [vmem:[%s1867 + $0x81] sm:$0xff] %vm1114, %v1704
  %1880 = vst.msk [vmem:[%s1867 + $0x91] sm:$0xff] %vm1114, %v1705
  %1881 = vst.msk [vmem:[%s1867 + $0x99] sm:$0xff] %vm1114, %v1706
  %1882 = vst.msk [vmem:[%s1867 + $0xa9] sm:$0xff] %vm1114, %v1707
  %1883 = vst.msk [vmem:[%s1867 + $0xb1] sm:$0xff] %vm1114, %v1708
  %1884 = vst.msk [vmem:[%s1867 + $0xc1] sm:$0xff] %vm1114, %v1709
  %1885 = vst.msk [vmem:[%s1867 + $0xc9] sm:$0xff] %vm1114, %v1710
  %1886 = vst.msk [vmem:[%s1867 + $0xd9] sm:$0xff] %vm1114, %v1711
  %1887 = vst.msk [vmem:[%s1867 + $0xe1] sm:$0xff] %vm1114, %v1712
  %1888 = vst.msk [vmem:[%s1867 + $0xf1] sm:$0xff] %vm1114, %v1713
  %1889 = vst.msk [vmem:[%s1867 + $0xf9] sm:$0xff] %vm1114, %v1714
  %1890 = vst.msk [vmem:[%s1867 + $0x109] sm:$0xff] %vm1114, %v1715
  %1891 = vst.msk [vmem:[%s1867 + $0x111] sm:$0xff] %vm1114, %v1716
  %1892 = vst.msk [vmem:[%s1867 + $0x121] sm:$0xff] %vm1114, %v1717
  %1893 = vst.msk [vmem:[%s1867 + $0x129] sm:$0xff] %vm1114, %v1718
  %1894 = vst.msk [vmem:[%s1867 + $0x139] sm:$0xff] %vm1114, %v1719
  %1895 = vst.msk [vmem:[%s1867 + $0x141] sm:$0xff] %vm1114, %v1720
  %1896 = vst.msk [vmem:[%s1867 + $0x151] sm:$0xff] %vm1114, %v1721
  %1897 = vst.msk [vmem:[%s1867 + $0x159] sm:$0xff] %vm1114, %v1722
  %1898 = vst.msk [vmem:[%s1867 + $0x169] sm:$0xff] %vm1114, %v1723
  %1899 = vst.msk [vmem:[%s1867 + $0x171] sm:$0xff] %vm1114, %v1724
  %v1900 = vld [vmem:[#allocation2] sm:$0xff]
  %v1901 = vld [vmem:[#allocation2 + $0x8] sm:$0xff]
  %v1902 = vld [vmem:[#allocation2 + $0x10] sm:$0x3]
  %v1903 = vld [vmem:[#allocation2 + $0x18] sm:$0xff]
  %v1904 = vld [vmem:[#allocation2 + $0x20] sm:$0xff]
  %v1905 = vld [vmem:[#allocation2 + $0x28] sm:$0x3]
  %v1906 = vld [vmem:[#allocation2 + $0x30] sm:$0xff]
  %v1907 = vld [vmem:[#allocation2 + $0x38] sm:$0xff]
  %v1908 = vld [vmem:[#allocation2 + $0x40] sm:$0x3]
  %v1909 = vld [vmem:[#allocation2 + $0x48] sm:$0xff]
  %v1910 = vld [vmem:[#allocation2 + $0x50] sm:$0xff]
  %v1911 = vld [vmem:[#allocation2 + $0x58] sm:$0x3]
  %v1912 = vld [vmem:[#allocation2 + $0x60] sm:$0xff]
  %v1913 = vld [vmem:[#allocation2 + $0x68] sm:$0xff]
  %v1914 = vld [vmem:[#allocation2 + $0x70] sm:$0x3]
  %v1915 = vld [vmem:[#allocation2 + $0x78] sm:$0xff]
  %v1916 = vld [vmem:[#allocation2 + $0x80] sm:$0xff]
  %v1917 = vld [vmem:[#allocation2 + $0x88] sm:$0x3]
  %v1918 = vld [vmem:[#allocation2 + $0x90] sm:$0xff]
  %v1919 = vld [vmem:[#allocation2 + $0x98] sm:$0xff]
  %v1920 = vld [vmem:[#allocation2 + $0xa0] sm:$0x3]
  %v1921 = vld [vmem:[#allocation2 + $0xa8] sm:$0xff]
  %v1922 = vld [vmem:[#allocation2 + $0xb0] sm:$0xff]
  %v1923 = vld [vmem:[#allocation2 + $0xb8] sm:$0x3]
  %v1924 = vld [vmem:[#allocation2 + $0xc0] sm:$0xff]
  %v1925 = vld [vmem:[#allocation2 + $0xc8] sm:$0xff]
  %v1926 = vld [vmem:[#allocation2 + $0xd0] sm:$0x3]
  %v1927 = vld [vmem:[#allocation2 + $0xd8] sm:$0xff]
  %v1928 = vld [vmem:[#allocation2 + $0xe0] sm:$0xff]
  %v1929 = vld [vmem:[#allocation2 + $0xe8] sm:$0x3]
  %v1930 = vld [vmem:[#allocation2 + $0xf0] sm:$0xff]
  %v1931 = vld [vmem:[#allocation2 + $0xf8] sm:$0xff]
  %v1932 = vld [vmem:[#allocation2 + $0x100] sm:$0x3]
  %v1933 = vld [vmem:[#allocation2 + $0x108] sm:$0xff]
  %v1934 = vld [vmem:[#allocation2 + $0x110] sm:$0xff]
  %v1935 = vld [vmem:[#allocation2 + $0x118] sm:$0x3]
  %v1936 = vld [vmem:[#allocation2 + $0x120] sm:$0xff]
  %v1937 = vld [vmem:[#allocation2 + $0x128] sm:$0xff]
  %v1938 = vld [vmem:[#allocation2 + $0x130] sm:$0x3]
  %v1939 = vld [vmem:[#allocation2 + $0x138] sm:$0xff]
  %v1940 = vld [vmem:[#allocation2 + $0x140] sm:$0xff]
  %v1941 = vld [vmem:[#allocation2 + $0x148] sm:$0x3]
  %v1942 = vld [vmem:[#allocation2 + $0x150] sm:$0xff]
  %v1943 = vld [vmem:[#allocation2 + $0x158] sm:$0xff]
  %v1944 = vld [vmem:[#allocation2 + $0x160] sm:$0x3]
  %v1945 = vld [vmem:[#allocation2 + $0x168] sm:$0xff]
  %v1946 = vld [vmem:[#allocation2 + $0x170] sm:$0xff]
  %v1947 = vld [vmem:[#allocation2 + $0x178] sm:$0x3]
  %v1948 = vld [vmem:[#allocation2 + $0x180] sm:$0xff]
  %v1949 = vld [vmem:[#allocation2 + $0x188] sm:$0xff]
  %v1950 = vld [vmem:[#allocation2 + $0x190] sm:$0x3]
  %v1951 = vld [vmem:[#allocation2 + $0x198] sm:$0xff]
  %v1952 = vld [vmem:[#allocation2 + $0x1a0] sm:$0xff]
  %v1953 = vld [vmem:[#allocation2 + $0x1a8] sm:$0x3]
  %v1954 = vld [vmem:[#allocation2 + $0x1b0] sm:$0xff]
  %v1955 = vld [vmem:[#allocation2 + $0x1b8] sm:$0xff]
  %v1956 = vld [vmem:[#allocation2 + $0x1c0] sm:$0x3]
  %v1957 = vld [vmem:[#allocation2 + $0x1c8] sm:$0xff]
  %v1958 = vld [vmem:[#allocation2 + $0x1d0] sm:$0xff]
  %v1959 = vld [vmem:[#allocation2 + $0x1d8] sm:$0x3]
  %v1960 = vld [vmem:[#allocation2 + $0x1e0] sm:$0xff]
  %v1961 = vld [vmem:[#allocation2 + $0x1e8] sm:$0xff]
  %v1962 = vld [vmem:[#allocation2 + $0x1f0] sm:$0x3]
  %v1963 = vld [vmem:[#allocation2 + $0x1f8] sm:$0xff]
  %v1964 = vld [vmem:[#allocation2 + $0x200] sm:$0xff]
  %v1965 = vld [vmem:[#allocation2 + $0x208] sm:$0x3]
  %v1966 = vld [vmem:[#allocation2 + $0x210] sm:$0xff]
  %v1967 = vld [vmem:[#allocation2 + $0x218] sm:$0xff]
  %v1968 = vld [vmem:[#allocation2 + $0x220] sm:$0x3]
  %v1969 = vld [vmem:[#allocation2 + $0x228] sm:$0xff]
  %v1970 = vld [vmem:[#allocation2 + $0x230] sm:$0xff]
  %v1971 = vld [vmem:[#allocation2 + $0x238] sm:$0x3]
  %v1972 = vld [vmem:[#allocation2 + $0x240] sm:$0xff]
  %v1973 = vld [vmem:[#allocation2 + $0x248] sm:$0xff]
  %v1974 = vld [vmem:[#allocation2 + $0x250] sm:$0x3]
  %v1975 = vld [vmem:[#allocation2 + $0x258] sm:$0xff]
  %v1976 = vld [vmem:[#allocation2 + $0x260] sm:$0xff]
  %v1977 = vld [vmem:[#allocation2 + $0x268] sm:$0x3]
  %v1978 = vld [vmem:[#allocation2 + $0x270] sm:$0xff]
  %v1979 = vld [vmem:[#allocation2 + $0x278] sm:$0xff]
  %v1980 = vld [vmem:[#allocation2 + $0x280] sm:$0x3]
  %v1981 = vld [vmem:[#allocation2 + $0x288] sm:$0xff]
  %v1982 = vld [vmem:[#allocation2 + $0x290] sm:$0xff]
  %v1983 = vld [vmem:[#allocation2 + $0x298] sm:$0x3]
  %v1984 = vld [vmem:[#allocation2 + $0x2a0] sm:$0xff]
  %v1985 = vld [vmem:[#allocation2 + $0x2a8] sm:$0xff]
  %v1986 = vld [vmem:[#allocation2 + $0x2b0] sm:$0x3]
  %v1987 = vld [vmem:[#allocation2 + $0x2b8] sm:$0xff]
  %v1988 = vld [vmem:[#allocation2 + $0x2c0] sm:$0xff]
  %v1989 = vld [vmem:[#allocation2 + $0x2c8] sm:$0x3]
  %v1990 = vld [vmem:[#allocation2 + $0x2d0] sm:$0xff]
  %v1991 = vld [vmem:[#allocation2 + $0x2d8] sm:$0xff]
  %v1992 = vld [vmem:[#allocation2 + $0x2e0] sm:$0x3]
  %v1993 = vld [vmem:[#allocation2 + $0x2e8] sm:$0xff]
  %v1994 = vld [vmem:[#allocation2 + $0x2f0] sm:$0xff]
  %v1995 = vld [vmem:[#allocation2 + $0x2f8] sm:$0x3]
  %v1996 = vld [vmem:[#allocation2 + $0x300] sm:$0xff]
  %v1997 = vld [vmem:[#allocation2 + $0x308] sm:$0xff]
  %v1998 = vld [vmem:[#allocation2 + $0x310] sm:$0x3]
  %v1999 = vld [vmem:[#allocation2 + $0x318] sm:$0xff]
  %v2000 = vld [vmem:[#allocation2 + $0x320] sm:$0xff]
  %v2001 = vld [vmem:[#allocation2 + $0x328] sm:$0x3]
  %v2002 = vld [vmem:[#allocation2 + $0x330] sm:$0xff]
  %v2003 = vld [vmem:[#allocation2 + $0x338] sm:$0xff]
  %v2004 = vld [vmem:[#allocation2 + $0x340] sm:$0x3]
  %v2005 = vld [vmem:[#allocation2 + $0x348] sm:$0xff]
  %v2006 = vld [vmem:[#allocation2 + $0x350] sm:$0xff]
  %v2007 = vld [vmem:[#allocation2 + $0x358] sm:$0x3]
  %v2008 = vld [vmem:[%s6] sm:$0xff]
  %v2009 = vld [vmem:[%s6 + $0x8] sm:$0xff]
  %v2010 = vld [vmem:[%s6 + $0x10] sm:$0xff]
  %v2011 = vld [vmem:[%s6 + $0x18] sm:$0xff]
  %v2012 = vld [vmem:[%s6 + $0x20] sm:$0xff]
  %v2013 = vld [vmem:[%s6 + $0x28] sm:$0xff]
  %v2014 = vld [vmem:[%s6 + $0x30] sm:$0xff]
  %v2015 = vld [vmem:[%s6 + $0x38] sm:$0xff]
  %v2016 = vld [vmem:[%s6 + $0x40] sm:$0xff]
  %v2017 = vld [vmem:[%s6 + $0x48] sm:$0xff]
  %v2018 = vld [vmem:[%s6 + $0x50] sm:$0xff]
  %v2019 = vld [vmem:[%s6 + $0x58] sm:$0xff]
  %v2020 = vld [vmem:[%s6 + $0x60] sm:$0xff]
  %v2021 = vld [vmem:[%s6 + $0x68] sm:$0xff]
  %v2022 = vld [vmem:[%s6 + $0x70] sm:$0xff]
  %v2023 = vld [vmem:[%s6 + $0x78] sm:$0xff]
  %v2024 = vld [vmem:[%s6 + $0x80] sm:$0xff]
  %v2025 = vld [vmem:[%s6 + $0x88] sm:$0xff]
  %v2026 = vld [vmem:[%s6 + $0x90] sm:$0xff]
  %v2027 = vld [vmem:[%s6 + $0x98] sm:$0xff]
  %v2028 = vld [vmem:[%s6 + $0xa0] sm:$0xff]
  %v2029 = vld [vmem:[%s6 + $0xa8] sm:$0xff]
  %v2030 = vld [vmem:[%s6 + $0xb0] sm:$0xff]
  %v2031 = vld [vmem:[%s6 + $0xb8] sm:$0xff]
  %v2032 = vld [vmem:[%s6 + $0xc0] sm:$0xff]
  %v2033 = vld [vmem:[%s6 + $0xc8] sm:$0xff]
  %v2034 = vld [vmem:[%s6 + $0xd0] sm:$0xff]
  %v2035 = vld [vmem:[%s6 + $0xd8] sm:$0xff]
  %v2036 = vld [vmem:[%s6 + $0xe0] sm:$0xff]
  %v2037 = vld [vmem:[%s6 + $0xe8] sm:$0xff]
  %v2038 = vld [vmem:[%s6 + $0xf0] sm:$0xff]
  %v2039 = vld [vmem:[%s6 + $0xf8] sm:$0xff]
  %v2040 = vld [vmem:[%s6 + $0x100] sm:$0xff]
  %v2041 = vld [vmem:[%s6 + $0x108] sm:$0xff]
  %v2042 = vld [vmem:[%s6 + $0x110] sm:$0xff]
  %v2043 = vld [vmem:[%s6 + $0x118] sm:$0xff]
  %vm2140 = vcmask 1046528
  %v2141 = vrot.slane %v1900, 1
  %v2142 = vrot.slane %v1901, 1
  %v2143 = vsel %vm2140, %v2141, %v2142
  %v2144 = vrot.slane %v1902, 1
  %v2145 = vsel %vm2140, %v2142, %v2144
  %v2146 = vrot.slane %v1903, 1
  %v2147 = vrot.slane %v1904, 1
  %v2148 = vsel %vm2140, %v2146, %v2147
  %v2149 = vrot.slane %v1905, 1
  %v2150 = vsel %vm2140, %v2147, %v2149
  %v2151 = vrot.slane %v1906, 1
  %v2152 = vrot.slane %v1907, 1
  %v2153 = vsel %vm2140, %v2151, %v2152
  %v2154 = vrot.slane %v1908, 1
  %v2155 = vsel %vm2140, %v2152, %v2154
  %v2156 = vrot.slane %v1909, 1
  %v2157 = vrot.slane %v1910, 1
  %v2158 = vsel %vm2140, %v2156, %v2157
  %v2159 = vrot.slane %v1911, 1
  %v2160 = vsel %vm2140, %v2157, %v2159
  %v2161 = vrot.slane %v1912, 1
  %v2162 = vrot.slane %v1913, 1
  %v2163 = vsel %vm2140, %v2161, %v2162
  %v2164 = vrot.slane %v1914, 1
  %v2165 = vsel %vm2140, %v2162, %v2164
  %v2166 = vrot.slane %v1915, 1
  %v2167 = vrot.slane %v1916, 1
  %v2168 = vsel %vm2140, %v2166, %v2167
  %v2169 = vrot.slane %v1917, 1
  %v2170 = vsel %vm2140, %v2167, %v2169
  %v2171 = vrot.slane %v1918, 1
  %v2172 = vrot.slane %v1919, 1
  %v2173 = vsel %vm2140, %v2171, %v2172
  %v2174 = vrot.slane %v1920, 1
  %v2175 = vsel %vm2140, %v2172, %v2174
  %v2176 = vrot.slane %v1921, 1
  %v2177 = vrot.slane %v1922, 1
  %v2178 = vsel %vm2140, %v2176, %v2177
  %v2179 = vrot.slane %v1923, 1
  %v2180 = vsel %vm2140, %v2177, %v2179
  %v2181 = vrot.slane %v1924, 1
  %v2182 = vrot.slane %v1925, 1
  %v2183 = vsel %vm2140, %v2181, %v2182
  %v2184 = vrot.slane %v1926, 1
  %v2185 = vsel %vm2140, %v2182, %v2184
  %v2186 = vrot.slane %v1927, 1
  %v2187 = vrot.slane %v1928, 1
  %v2188 = vsel %vm2140, %v2186, %v2187
  %v2189 = vrot.slane %v1929, 1
  %v2190 = vsel %vm2140, %v2187, %v2189
  %v2191 = vrot.slane %v1930, 1
  %v2192 = vrot.slane %v1931, 1
  %v2193 = vsel %vm2140, %v2191, %v2192
  %v2194 = vrot.slane %v1932, 1
  %v2195 = vsel %vm2140, %v2192, %v2194
  %v2196 = vrot.slane %v1933, 1
  %v2197 = vrot.slane %v1934, 1
  %v2198 = vsel %vm2140, %v2196, %v2197
  %v2199 = vrot.slane %v1935, 1
  %v2200 = vsel %vm2140, %v2197, %v2199
  %v2201 = vrot.slane %v1936, 1
  %v2202 = vrot.slane %v1937, 1
  %v2203 = vsel %vm2140, %v2201, %v2202
  %v2204 = vrot.slane %v1938, 1
  %v2205 = vsel %vm2140, %v2202, %v2204
  %v2206 = vrot.slane %v1939, 1
  %v2207 = vrot.slane %v1940, 1
  %v2208 = vsel %vm2140, %v2206, %v2207
  %v2209 = vrot.slane %v1941, 1
  %v2210 = vsel %vm2140, %v2207, %v2209
  %v2211 = vrot.slane %v1942, 1
  %v2212 = vrot.slane %v1943, 1
  %v2213 = vsel %vm2140, %v2211, %v2212
  %v2214 = vrot.slane %v1944, 1
  %v2215 = vsel %vm2140, %v2212, %v2214
  %v2216 = vrot.slane %v1945, 1
  %v2217 = vrot.slane %v1946, 1
  %v2218 = vsel %vm2140, %v2216, %v2217
  %v2219 = vrot.slane %v1947, 1
  %v2220 = vsel %vm2140, %v2217, %v2219
  %v2221 = vrot.slane %v1954, 1
  %v2222 = vrot.slane %v1955, 1
  %v2223 = vsel %vm2140, %v2221, %v2222
  %v2224 = vrot.slane %v1956, 1
  %v2225 = vsel %vm2140, %v2222, %v2224
  %v2226 = vrot.slane %v1957, 1
  %v2227 = vrot.slane %v1958, 1
  %v2228 = vsel %vm2140, %v2226, %v2227
  %v2229 = vrot.slane %v1959, 1
  %v2230 = vsel %vm2140, %v2227, %v2229
  %v2231 = vrot.slane %v1960, 1
  %v2232 = vrot.slane %v1961, 1
  %v2233 = vsel %vm2140, %v2231, %v2232
  %v2234 = vrot.slane %v1962, 1
  %v2235 = vsel %vm2140, %v2232, %v2234
  %v2236 = vrot.slane %v1963, 1
  %v2237 = vrot.slane %v1964, 1
  %v2238 = vsel %vm2140, %v2236, %v2237
  %v2239 = vrot.slane %v1965, 1
  %v2240 = vsel %vm2140, %v2237, %v2239
  %v2241 = vrot.slane %v1966, 1
  %v2242 = vrot.slane %v1967, 1
  %v2243 = vsel %vm2140, %v2241, %v2242
  %v2244 = vrot.slane %v1968, 1
  %v2245 = vsel %vm2140, %v2242, %v2244
  %v2246 = vrot.slane %v1969, 1
  %v2247 = vrot.slane %v1970, 1
  %v2248 = vsel %vm2140, %v2246, %v2247
  %v2249 = vrot.slane %v1971, 1
  %v2250 = vsel %vm2140, %v2247, %v2249
  %v2251 = vrot.slane %v1972, 1
  %v2252 = vrot.slane %v1973, 1
  %v2253 = vsel %vm2140, %v2251, %v2252
  %v2254 = vrot.slane %v1974, 1
  %v2255 = vsel %vm2140, %v2252, %v2254
  %v2256 = vrot.slane %v1975, 1
  %v2257 = vrot.slane %v1976, 1
  %v2258 = vsel %vm2140, %v2256, %v2257
  %v2259 = vrot.slane %v1977, 1
  %v2260 = vsel %vm2140, %v2257, %v2259
  %v2261 = vrot.slane %v1978, 1
  %v2262 = vrot.slane %v1979, 1
  %v2263 = vsel %vm2140, %v2261, %v2262
  %v2264 = vrot.slane %v1980, 1
  %v2265 = vsel %vm2140, %v2262, %v2264
  %v2266 = vrot.slane %v1981, 1
  %v2267 = vrot.slane %v1982, 1
  %v2268 = vsel %vm2140, %v2266, %v2267
  %v2269 = vrot.slane %v1983, 1
  %v2270 = vsel %vm2140, %v2267, %v2269
  %v2271 = vrot.slane %v1984, 1
  %v2272 = vrot.slane %v1985, 1
  %v2273 = vsel %vm2140, %v2271, %v2272
  %v2274 = vrot.slane %v1986, 1
  %v2275 = vsel %vm2140, %v2272, %v2274
  %v2276 = vrot.slane %v1987, 1
  %v2277 = vrot.slane %v1988, 1
  %v2278 = vsel %vm2140, %v2276, %v2277
  %v2279 = vrot.slane %v1989, 1
  %v2280 = vsel %vm2140, %v2277, %v2279
  %v2281 = vrot.slane %v1990, 1
  %v2282 = vrot.slane %v1991, 1
  %v2283 = vsel %vm2140, %v2281, %v2282
  %v2284 = vrot.slane %v1992, 1
  %v2285 = vsel %vm2140, %v2282, %v2284
  %v2286 = vrot.slane %v1993, 1
  %v2287 = vrot.slane %v1994, 1
  %v2288 = vsel %vm2140, %v2286, %v2287
  %v2289 = vrot.slane %v1995, 1
  %v2290 = vsel %vm2140, %v2287, %v2289
  %v2291 = vrot.slane %v1996, 1
  %v2292 = vrot.slane %v1997, 1
  %v2293 = vsel %vm2140, %v2291, %v2292
  %v2294 = vrot.slane %v1998, 1
  %v2295 = vsel %vm2140, %v2292, %v2294
  %v2296 = vrot.slane %v1999, 1
  %v2297 = vrot.slane %v2000, 1
  %v2298 = vsel %vm2140, %v2296, %v2297
  %v2299 = vrot.slane %v2001, 1
  %v2300 = vsel %vm2140, %v2297, %v2299
  %v2301 = vsel %vm1114, %v2143, 0
  %v2303 = vsel %vm1114, %v2145, 0
  %v2305 = vsel %vm1114, %v2148, 0
  %v2307 = vsel %vm1114, %v2150, 0
  %v2309 = vsel %vm1114, %v2153, 0
  %v2311 = vsel %vm1114, %v2155, 0
  %v2313 = vsel %vm1114, %v2158, 0
  %v2315 = vsel %vm1114, %v2160, 0
  %v2317 = vsel %vm1114, %v2163, 0
  %v2319 = vsel %vm1114, %v2165, 0
  %v2321 = vsel %vm1114, %v2168, 0
  %v2323 = vsel %vm1114, %v2170, 0
  %v2325 = vsel %vm1114, %v2173, 0
  %v2327 = vsel %vm1114, %v2175, 0
  %v2329 = vsel %vm1114, %v2178, 0
  %v2331 = vsel %vm1114, %v2180, 0
  %v2333 = vsel %vm1114, %v2183, 0
  %v2335 = vsel %vm1114, %v2185, 0
  %v2337 = vsel %vm1114, %v2188, 0
  %v2339 = vsel %vm1114, %v2190, 0
  %v2341 = vsel %vm1114, %v2193, 0
  %v2343 = vsel %vm1114, %v2195, 0
  %v2345 = vsel %vm1114, %v2198, 0
  %v2347 = vsel %vm1114, %v2200, 0
  %v2349 = vsel %vm1114, %v2203, 0
  %v2351 = vsel %vm1114, %v2205, 0
  %v2353 = vsel %vm1114, %v2208, 0
  %v2355 = vsel %vm1114, %v2210, 0
  %v2357 = vsel %vm1114, %v2213, 0
  %v2359 = vsel %vm1114, %v2215, 0
  %v2361 = vsel %vm1114, %v2218, 0
  %v2363 = vsel %vm1114, %v2220, 0
  %v2365 = vsel %vm1114, %v2223, 0
  %v2367 = vsel %vm1114, %v2225, 0
  %v2369 = vsel %vm1114, %v2228, 0
  %v2371 = vsel %vm1114, %v2230, 0
  %v2373 = vsel %vm1114, %v2233, 0
  %v2375 = vsel %vm1114, %v2235, 0
  %v2377 = vsel %vm1114, %v2238, 0
  %v2379 = vsel %vm1114, %v2240, 0
  %v2381 = vsel %vm1114, %v2243, 0
  %v2383 = vsel %vm1114, %v2245, 0
  %v2385 = vsel %vm1114, %v2248, 0
  %v2387 = vsel %vm1114, %v2250, 0
  %v2389 = vsel %vm1114, %v2253, 0
  %v2391 = vsel %vm1114, %v2255, 0
  %v2393 = vsel %vm1114, %v2258, 0
  %v2395 = vsel %vm1114, %v2260, 0
  %v2397 = vsel %vm1114, %v2263, 0
  %v2399 = vsel %vm1114, %v2265, 0
  %v2401 = vsel %vm1114, %v2268, 0
  %v2403 = vsel %vm1114, %v2270, 0
  %v2405 = vsel %vm1114, %v2273, 0
  %v2407 = vsel %vm1114, %v2275, 0
  %v2409 = vsel %vm1114, %v2278, 0
  %v2411 = vsel %vm1114, %v2280, 0
  %v2413 = vsel %vm1114, %v2283, 0
  %v2415 = vsel %vm1114, %v2285, 0
  %v2417 = vsel %vm1114, %v2288, 0
  %v2419 = vsel %vm1114, %v2290, 0
  %v2421 = vsel %vm1114, %v2293, 0
  %v2423 = vsel %vm1114, %v2295, 0
  %v2425 = vsel %vm1114, %v2298, 0
  %v2427 = vsel %vm1114, %v2300, 0
  %2429 = vmatpush.msra.mxu0 0.0
  %2430 = vmatpush.msra.mxu0 0.0
  %2431 = vmatpush.msra.mxu0 0.0
  %2432 = vmatpush.msra.mxu0 0.0
  %2433 = vmatpush.msra.mxu0 0.0
  %2434 = vmatpush.msra.mxu0 0.0
  %2435 = vmatpush.msra.mxu0 0.0
  %2436 = vmatpush.msra.mxu0 0.0
  %2437 = vmatpush.msra.mxu0 0.0
  %2438 = vmatpush.msra.mxu0 0.0
  %2439 = vmatpush.msra.mxu0 0.0
  %2440 = vmatpush.msra.mxu0 0.0
  %2441 = vmatpush.msra.mxu0 %v2015
  %2442 = vmatpush.msra.mxu0 %v2014
  %2443 = vmatpush.msra.mxu0 %v2013
  %2444 = vmatpush.msra.mxu0 %v2012
  %2445 = vmatmul.f32.gmra.mxu0 %v2301
  %v2446 = vpop.f32.mrf.mxu0
  %v2447 = vadd.f32 0.0, %v2446
  %2448 = vmatmul.f32.gmra.mxu0 %v2303
  %v2449 = vpop.f32.mrf.mxu0
  %v2450 = vadd.f32 0.0, %v2449
  %2451 = vmatmul.f32.gmra.mxu0 %v2305
  %v2452 = vpop.f32.mrf.mxu0
  %v2453 = vadd.f32 0.0, %v2452
  %2454 = vmatmul.f32.gmra.mxu0 %v2307
  %v2455 = vpop.f32.mrf.mxu0
  %v2456 = vadd.f32 0.0, %v2455
  %2457 = vmatmul.f32.gmra.mxu0 %v2309
  %v2458 = vpop.f32.mrf.mxu0
  %v2459 = vadd.f32 0.0, %v2458
  %2460 = vmatmul.f32.gmra.mxu0 %v2311
  %v2461 = vpop.f32.mrf.mxu0
  %v2462 = vadd.f32 0.0, %v2461
  %2463 = vmatmul.f32.gmra.mxu0 %v2313
  %v2464 = vpop.f32.mrf.mxu0
  %v2465 = vadd.f32 0.0, %v2464
  %2466 = vmatmul.f32.gmra.mxu0 %v2315
  %v2467 = vpop.f32.mrf.mxu0
  %v2468 = vadd.f32 0.0, %v2467
  %2469 = vmatmul.f32.gmra.mxu0 %v2317
  %v2470 = vpop.f32.mrf.mxu0
  %v2471 = vadd.f32 0.0, %v2470
  %2472 = vmatmul.f32.gmra.mxu0 %v2319
  %v2473 = vpop.f32.mrf.mxu0
  %v2474 = vadd.f32 0.0, %v2473
  %2475 = vmatmul.f32.gmra.mxu0 %v2321
  %v2476 = vpop.f32.mrf.mxu0
  %v2477 = vadd.f32 0.0, %v2476
  %2478 = vmatmul.f32.gmra.mxu0 %v2323
  %v2479 = vpop.f32.mrf.mxu0
  %v2480 = vadd.f32 0.0, %v2479
  %2481 = vmatmul.f32.gmra.mxu0 %v2325
  %v2482 = vpop.f32.mrf.mxu0
  %v2483 = vadd.f32 0.0, %v2482
  %2484 = vmatmul.f32.gmra.mxu0 %v2327
  %v2485 = vpop.f32.mrf.mxu0
  %v2486 = vadd.f32 0.0, %v2485
  %2487 = vmatmul.f32.gmra.mxu0 %v2329
  %v2488 = vpop.f32.mrf.mxu0
  %v2489 = vadd.f32 0.0, %v2488
  %2490 = vmatmul.f32.gmra.mxu0 %v2331
  %v2491 = vpop.f32.mrf.mxu0
  %v2492 = vadd.f32 0.0, %v2491
  %2493 = vmatmul.f32.gmra.mxu0 %v2333
  %v2494 = vpop.f32.mrf.mxu0
  %v2495 = vadd.f32 0.0, %v2494
  %2496 = vmatmul.f32.gmra.mxu0 %v2335
  %v2497 = vpop.f32.mrf.mxu0
  %v2498 = vadd.f32 0.0, %v2497
  %2499 = vmatmul.f32.gmra.mxu0 %v2337
  %v2500 = vpop.f32.mrf.mxu0
  %v2501 = vadd.f32 0.0, %v2500
  %2502 = vmatmul.f32.gmra.mxu0 %v2339
  %v2503 = vpop.f32.mrf.mxu0
  %v2504 = vadd.f32 0.0, %v2503
  %2505 = vmatmul.f32.gmra.mxu0 %v2341
  %v2506 = vpop.f32.mrf.mxu0
  %v2507 = vadd.f32 0.0, %v2506
  %2508 = vmatmul.f32.gmra.mxu0 %v2343
  %v2509 = vpop.f32.mrf.mxu0
  %v2510 = vadd.f32 0.0, %v2509
  %2511 = vmatmul.f32.gmra.mxu0 %v2345
  %v2512 = vpop.f32.mrf.mxu0
  %v2513 = vadd.f32 0.0, %v2512
  %2514 = vmatmul.f32.gmra.mxu0 %v2347
  %v2515 = vpop.f32.mrf.mxu0
  %v2516 = vadd.f32 0.0, %v2515
  %2517 = vmatmul.f32.gmra.mxu0 %v2349
  %v2518 = vpop.f32.mrf.mxu0
  %v2519 = vadd.f32 0.0, %v2518
  %2520 = vmatmul.f32.gmra.mxu0 %v2351
  %v2521 = vpop.f32.mrf.mxu0
  %v2522 = vadd.f32 0.0, %v2521
  %2523 = vmatmul.f32.gmra.mxu0 %v2353
  %v2524 = vpop.f32.mrf.mxu0
  %v2525 = vadd.f32 0.0, %v2524
  %2526 = vmatmul.f32.gmra.mxu0 %v2355
  %v2527 = vpop.f32.mrf.mxu0
  %v2528 = vadd.f32 0.0, %v2527
  %2529 = vmatmul.f32.gmra.mxu0 %v2357
  %v2530 = vpop.f32.mrf.mxu0
  %v2531 = vadd.f32 0.0, %v2530
  %2532 = vmatmul.f32.gmra.mxu0 %v2359
  %v2533 = vpop.f32.mrf.mxu0
  %v2534 = vadd.f32 0.0, %v2533
  %2535 = vmatmul.f32.gmra.mxu0 %v2361
  %v2536 = vpop.f32.mrf.mxu0
  %v2537 = vadd.f32 0.0, %v2536
  %2538 = vmatmul.f32.gmra.mxu0 %v2363
  %v2539 = vpop.f32.mrf.mxu0
  %v2540 = vadd.f32 0.0, %v2539
  %2541 = vmatmul.f32.gmra.mxu0 %v2365
  %v2542 = vpop.f32.mrf.mxu0
  %v2543 = vadd.f32 0.0, %v2542
  %2544 = vmatmul.f32.gmra.mxu0 %v2367
  %v2545 = vpop.f32.mrf.mxu0
  %v2546 = vadd.f32 0.0, %v2545
  %2547 = vmatmul.f32.gmra.mxu0 %v2369
  %v2548 = vpop.f32.mrf.mxu0
  %v2549 = vadd.f32 0.0, %v2548
  %2550 = vmatmul.f32.gmra.mxu0 %v2371
  %v2551 = vpop.f32.mrf.mxu0
  %v2552 = vadd.f32 0.0, %v2551
  %2553 = vmatmul.f32.gmra.mxu0 %v2373
  %v2554 = vpop.f32.mrf.mxu0
  %v2555 = vadd.f32 0.0, %v2554
  %2556 = vmatmul.f32.gmra.mxu0 %v2375
  %v2557 = vpop.f32.mrf.mxu0
  %v2558 = vadd.f32 0.0, %v2557
  %2559 = vmatmul.f32.gmra.mxu0 %v2377
  %v2560 = vpop.f32.mrf.mxu0
  %v2561 = vadd.f32 0.0, %v2560
  %2562 = vmatmul.f32.gmra.mxu0 %v2379
  %v2563 = vpop.f32.mrf.mxu0
  %v2564 = vadd.f32 0.0, %v2563
  %2565 = vmatmul.f32.gmra.mxu0 %v2381
  %v2566 = vpop.f32.mrf.mxu0
  %v2567 = vadd.f32 0.0, %v2566
  %2568 = vmatmul.f32.gmra.mxu0 %v2383
  %v2569 = vpop.f32.mrf.mxu0
  %v2570 = vadd.f32 0.0, %v2569
  %2571 = vmatmul.f32.gmra.mxu0 %v2385
  %v2572 = vpop.f32.mrf.mxu0
  %v2573 = vadd.f32 0.0, %v2572
  %2574 = vmatmul.f32.gmra.mxu0 %v2387
  %v2575 = vpop.f32.mrf.mxu0
  %v2576 = vadd.f32 0.0, %v2575
  %2577 = vmatmul.f32.gmra.mxu0 %v2389
  %v2578 = vpop.f32.mrf.mxu0
  %v2579 = vadd.f32 0.0, %v2578
  %2580 = vmatmul.f32.gmra.mxu0 %v2391
  %v2581 = vpop.f32.mrf.mxu0
  %v2582 = vadd.f32 0.0, %v2581
  %2583 = vmatmul.f32.gmra.mxu0 %v2393
  %v2584 = vpop.f32.mrf.mxu0
  %v2585 = vadd.f32 0.0, %v2584
  %2586 = vmatmul.f32.gmra.mxu0 %v2395
  %v2587 = vpop.f32.mrf.mxu0
  %v2588 = vadd.f32 0.0, %v2587
  %2589 = vmatmul.f32.gmra.mxu0 %v2397
  %v2590 = vpop.f32.mrf.mxu0
  %v2591 = vadd.f32 0.0, %v2590
  %2592 = vmatmul.f32.gmra.mxu0 %v2399
  %v2593 = vpop.f32.mrf.mxu0
  %v2594 = vadd.f32 0.0, %v2593
  %2595 = vmatmul.f32.gmra.mxu0 %v2401
  %v2596 = vpop.f32.mrf.mxu0
  %v2597 = vadd.f32 0.0, %v2596
  %2598 = vmatmul.f32.gmra.mxu0 %v2403
  %v2599 = vpop.f32.mrf.mxu0
  %v2600 = vadd.f32 0.0, %v2599
  %2601 = vmatmul.f32.gmra.mxu0 %v2405
  %v2602 = vpop.f32.mrf.mxu0
  %v2603 = vadd.f32 0.0, %v2602
  %2604 = vmatmul.f32.gmra.mxu0 %v2407
  %v2605 = vpop.f32.mrf.mxu0
  %v2606 = vadd.f32 0.0, %v2605
  %2607 = vmatmul.f32.gmra.mxu0 %v2409
  %v2608 = vpop.f32.mrf.mxu0
  %v2609 = vadd.f32 0.0, %v2608
  %2610 = vmatmul.f32.gmra.mxu0 %v2411
  %v2611 = vpop.f32.mrf.mxu0
  %v2612 = vadd.f32 0.0, %v2611
  %2613 = vmatmul.f32.gmra.mxu0 %v2413
  %v2614 = vpop.f32.mrf.mxu0
  %v2615 = vadd.f32 0.0, %v2614
  %2616 = vmatmul.f32.gmra.mxu0 %v2415
  %v2617 = vpop.f32.mrf.mxu0
  %v2618 = vadd.f32 0.0, %v2617
  %2619 = vmatmul.f32.gmra.mxu0 %v2417
  %v2620 = vpop.f32.mrf.mxu0
  %v2621 = vadd.f32 0.0, %v2620
  %2622 = vmatmul.f32.gmra.mxu0 %v2419
  %v2623 = vpop.f32.mrf.mxu0
  %v2624 = vadd.f32 0.0, %v2623
  %2625 = vmatmul.f32.gmra.mxu0 %v2421
  %v2626 = vpop.f32.mrf.mxu0
  %v2627 = vadd.f32 0.0, %v2626
  %2628 = vmatmul.f32.gmra.mxu0 %v2423
  %v2629 = vpop.f32.mrf.mxu0
  %v2630 = vadd.f32 0.0, %v2629
  %2631 = vmatmul.f32.gmra.mxu0 %v2425
  %v2632 = vpop.f32.mrf.mxu0
  %v2633 = vadd.f32 0.0, %v2632
  %2634 = vmatmul.f32.gmra.mxu0 %v2427
  %v2635 = vpop.f32.mrf.mxu0
  %v2636 = vadd.f32 0.0, %v2635
  %2637 = vdwg.mxu0
  %v2638 = vsel %vm1114, %v1900, 0
  %v2640 = vsel %vm1114, %v1901, 0
  %v2642 = vsel %vm1114, %v1903, 0
  %v2644 = vsel %vm1114, %v1904, 0
  %v2646 = vsel %vm1114, %v1906, 0
  %v2648 = vsel %vm1114, %v1907, 0
  %v2650 = vsel %vm1114, %v1909, 0
  %v2652 = vsel %vm1114, %v1910, 0
  %v2654 = vsel %vm1114, %v1912, 0
  %v2656 = vsel %vm1114, %v1913, 0
  %v2658 = vsel %vm1114, %v1915, 0
  %v2660 = vsel %vm1114, %v1916, 0
  %v2662 = vsel %vm1114, %v1918, 0
  %v2664 = vsel %vm1114, %v1919, 0
  %v2666 = vsel %vm1114, %v1921, 0
  %v2668 = vsel %vm1114, %v1922, 0
  %v2670 = vsel %vm1114, %v1924, 0
  %v2672 = vsel %vm1114, %v1925, 0
  %v2674 = vsel %vm1114, %v1927, 0
  %v2676 = vsel %vm1114, %v1928, 0
  %v2678 = vsel %vm1114, %v1930, 0
  %v2680 = vsel %vm1114, %v1931, 0
  %v2682 = vsel %vm1114, %v1933, 0
  %v2684 = vsel %vm1114, %v1934, 0
  %v2686 = vsel %vm1114, %v1936, 0
  %v2688 = vsel %vm1114, %v1937, 0
  %v2690 = vsel %vm1114, %v1939, 0
  %v2692 = vsel %vm1114, %v1940, 0
  %v2694 = vsel %vm1114, %v1942, 0
  %v2696 = vsel %vm1114, %v1943, 0
  %v2698 = vsel %vm1114, %v1945, 0
  %v2700 = vsel %vm1114, %v1946, 0
  %v2702 = vsel %vm1114, %v1954, 0
  %v2704 = vsel %vm1114, %v1955, 0
  %v2706 = vsel %vm1114, %v1957, 0
  %v2708 = vsel %vm1114, %v1958, 0
  %v2710 = vsel %vm1114, %v1960, 0
  %v2712 = vsel %vm1114, %v1961, 0
  %v2714 = vsel %vm1114, %v1963, 0
  %v2716 = vsel %vm1114, %v1964, 0
  %v2718 = vsel %vm1114, %v1966, 0
  %v2720 = vsel %vm1114, %v1967, 0
  %v2722 = vsel %vm1114, %v1969, 0
  %v2724 = vsel %vm1114, %v1970, 0
  %v2726 = vsel %vm1114, %v1972, 0
  %v2728 = vsel %vm1114, %v1973, 0
  %v2730 = vsel %vm1114, %v1975, 0
  %v2732 = vsel %vm1114, %v1976, 0
  %v2734 = vsel %vm1114, %v1978, 0
  %v2736 = vsel %vm1114, %v1979, 0
  %v2738 = vsel %vm1114, %v1981, 0
  %v2740 = vsel %vm1114, %v1982, 0
  %v2742 = vsel %vm1114, %v1984, 0
  %v2744 = vsel %vm1114, %v1985, 0
  %v2746 = vsel %vm1114, %v1987, 0
  %v2748 = vsel %vm1114, %v1988, 0
  %v2750 = vsel %vm1114, %v1990, 0
  %v2752 = vsel %vm1114, %v1991, 0
  %v2754 = vsel %vm1114, %v1993, 0
  %v2756 = vsel %vm1114, %v1994, 0
  %v2758 = vsel %vm1114, %v1996, 0
  %v2760 = vsel %vm1114, %v1997, 0
  %v2762 = vsel %vm1114, %v1999, 0
  %v2764 = vsel %vm1114, %v2000, 0
  %2766 = vmatpush.msra.mxu0 0.0
  %2767 = vmatpush.msra.mxu0 0.0
  %2768 = vmatpush.msra.mxu0 0.0
  %2769 = vmatpush.msra.mxu0 0.0
  %2770 = vmatpush.msra.mxu0 0.0
  %2771 = vmatpush.msra.mxu0 0.0
  %2772 = vmatpush.msra.mxu0 0.0
  %2773 = vmatpush.msra.mxu0 0.0
  %2774 = vmatpush.msra.mxu0 0.0
  %2775 = vmatpush.msra.mxu0 0.0
  %2776 = vmatpush.msra.mxu0 0.0
  %2777 = vmatpush.msra.mxu0 0.0
  %2778 = vmatpush.msra.mxu0 %v2011
  %2779 = vmatpush.msra.mxu0 %v2010
  %2780 = vmatpush.msra.mxu0 %v2009
  %2781 = vmatpush.msra.mxu0 %v2008
  %2782 = vmatmul.f32.gmra.mxu0 %v2638
  %v2783 = vpop.f32.mrf.mxu0
  %v2784 = vadd.f32 %v2447, %v2783
  %2785 = vmatmul.f32.gmra.mxu0 %v2640
  %v2786 = vpop.f32.mrf.mxu0
  %v2787 = vadd.f32 %v2450, %v2786
  %2788 = vmatmul.f32.gmra.mxu0 %v2642
  %v2789 = vpop.f32.mrf.mxu0
  %v2790 = vadd.f32 %v2453, %v2789
  %2791 = vmatmul.f32.gmra.mxu0 %v2644
  %v2792 = vpop.f32.mrf.mxu0
  %v2793 = vadd.f32 %v2456, %v2792
  %2794 = vmatmul.f32.gmra.mxu0 %v2646
  %v2795 = vpop.f32.mrf.mxu0
  %v2796 = vadd.f32 %v2459, %v2795
  %2797 = vmatmul.f32.gmra.mxu0 %v2648
  %v2798 = vpop.f32.mrf.mxu0
  %v2799 = vadd.f32 %v2462, %v2798
  %2800 = vmatmul.f32.gmra.mxu0 %v2650
  %v2801 = vpop.f32.mrf.mxu0
  %v2802 = vadd.f32 %v2465, %v2801
  %2803 = vmatmul.f32.gmra.mxu0 %v2652
  %v2804 = vpop.f32.mrf.mxu0
  %v2805 = vadd.f32 %v2468, %v2804
  %2806 = vmatmul.f32.gmra.mxu0 %v2654
  %v2807 = vpop.f32.mrf.mxu0
  %v2808 = vadd.f32 %v2471, %v2807
  %2809 = vmatmul.f32.gmra.mxu0 %v2656
  %v2810 = vpop.f32.mrf.mxu0
  %v2811 = vadd.f32 %v2474, %v2810
  %2812 = vmatmul.f32.gmra.mxu0 %v2658
  %v2813 = vpop.f32.mrf.mxu0
  %v2814 = vadd.f32 %v2477, %v2813
  %2815 = vmatmul.f32.gmra.mxu0 %v2660
  %v2816 = vpop.f32.mrf.mxu0
  %v2817 = vadd.f32 %v2480, %v2816
  %2818 = vmatmul.f32.gmra.mxu0 %v2662
  %v2819 = vpop.f32.mrf.mxu0
  %v2820 = vadd.f32 %v2483, %v2819
  %2821 = vmatmul.f32.gmra.mxu0 %v2664
  %v2822 = vpop.f32.mrf.mxu0
  %v2823 = vadd.f32 %v2486, %v2822
  %2824 = vmatmul.f32.gmra.mxu0 %v2666
  %v2825 = vpop.f32.mrf.mxu0
  %v2826 = vadd.f32 %v2489, %v2825
  %2827 = vmatmul.f32.gmra.mxu0 %v2668
  %v2828 = vpop.f32.mrf.mxu0
  %v2829 = vadd.f32 %v2492, %v2828
  %2830 = vmatmul.f32.gmra.mxu0 %v2670
  %v2831 = vpop.f32.mrf.mxu0
  %v2832 = vadd.f32 %v2495, %v2831
  %2833 = vmatmul.f32.gmra.mxu0 %v2672
  %v2834 = vpop.f32.mrf.mxu0
  %v2835 = vadd.f32 %v2498, %v2834
  %2836 = vmatmul.f32.gmra.mxu0 %v2674
  %v2837 = vpop.f32.mrf.mxu0
  %v2838 = vadd.f32 %v2501, %v2837
  %2839 = vmatmul.f32.gmra.mxu0 %v2676
  %v2840 = vpop.f32.mrf.mxu0
  %v2841 = vadd.f32 %v2504, %v2840
  %2842 = vmatmul.f32.gmra.mxu0 %v2678
  %v2843 = vpop.f32.mrf.mxu0
  %v2844 = vadd.f32 %v2507, %v2843
  %2845 = vmatmul.f32.gmra.mxu0 %v2680
  %v2846 = vpop.f32.mrf.mxu0
  %v2847 = vadd.f32 %v2510, %v2846
  %2848 = vmatmul.f32.gmra.mxu0 %v2682
  %v2849 = vpop.f32.mrf.mxu0
  %v2850 = vadd.f32 %v2513, %v2849
  %2851 = vmatmul.f32.gmra.mxu0 %v2684
  %v2852 = vpop.f32.mrf.mxu0
  %v2853 = vadd.f32 %v2516, %v2852
  %2854 = vmatmul.f32.gmra.mxu0 %v2686
  %v2855 = vpop.f32.mrf.mxu0
  %v2856 = vadd.f32 %v2519, %v2855
  %2857 = vmatmul.f32.gmra.mxu0 %v2688
  %v2858 = vpop.f32.mrf.mxu0
  %v2859 = vadd.f32 %v2522, %v2858
  %2860 = vmatmul.f32.gmra.mxu0 %v2690
  %v2861 = vpop.f32.mrf.mxu0
  %v2862 = vadd.f32 %v2525, %v2861
  %2863 = vmatmul.f32.gmra.mxu0 %v2692
  %v2864 = vpop.f32.mrf.mxu0
  %v2865 = vadd.f32 %v2528, %v2864
  %2866 = vmatmul.f32.gmra.mxu0 %v2694
  %v2867 = vpop.f32.mrf.mxu0
  %v2868 = vadd.f32 %v2531, %v2867
  %2869 = vmatmul.f32.gmra.mxu0 %v2696
  %v2870 = vpop.f32.mrf.mxu0
  %v2871 = vadd.f32 %v2534, %v2870
  %2872 = vmatmul.f32.gmra.mxu0 %v2698
  %v2873 = vpop.f32.mrf.mxu0
  %v2874 = vadd.f32 %v2537, %v2873
  %2875 = vmatmul.f32.gmra.mxu0 %v2700
  %v2876 = vpop.f32.mrf.mxu0
  %v2877 = vadd.f32 %v2540, %v2876
  %2878 = vmatmul.f32.gmra.mxu0 %v2702
  %v2879 = vpop.f32.mrf.mxu0
  %v2880 = vadd.f32 %v2543, %v2879
  %2881 = vmatmul.f32.gmra.mxu0 %v2704
  %v2882 = vpop.f32.mrf.mxu0
  %v2883 = vadd.f32 %v2546, %v2882
  %2884 = vmatmul.f32.gmra.mxu0 %v2706
  %v2885 = vpop.f32.mrf.mxu0
  %v2886 = vadd.f32 %v2549, %v2885
  %2887 = vmatmul.f32.gmra.mxu0 %v2708
  %v2888 = vpop.f32.mrf.mxu0
  %v2889 = vadd.f32 %v2552, %v2888
  %2890 = vmatmul.f32.gmra.mxu0 %v2710
  %v2891 = vpop.f32.mrf.mxu0
  %v2892 = vadd.f32 %v2555, %v2891
  %2893 = vmatmul.f32.gmra.mxu0 %v2712
  %v2894 = vpop.f32.mrf.mxu0
  %v2895 = vadd.f32 %v2558, %v2894
  %2896 = vmatmul.f32.gmra.mxu0 %v2714
  %v2897 = vpop.f32.mrf.mxu0
  %v2898 = vadd.f32 %v2561, %v2897
  %2899 = vmatmul.f32.gmra.mxu0 %v2716
  %v2900 = vpop.f32.mrf.mxu0
  %v2901 = vadd.f32 %v2564, %v2900
  %2902 = vmatmul.f32.gmra.mxu0 %v2718
  %v2903 = vpop.f32.mrf.mxu0
  %v2904 = vadd.f32 %v2567, %v2903
  %2905 = vmatmul.f32.gmra.mxu0 %v2720
  %v2906 = vpop.f32.mrf.mxu0
  %v2907 = vadd.f32 %v2570, %v2906
  %2908 = vmatmul.f32.gmra.mxu0 %v2722
  %v2909 = vpop.f32.mrf.mxu0
  %v2910 = vadd.f32 %v2573, %v2909
  %2911 = vmatmul.f32.gmra.mxu0 %v2724
  %v2912 = vpop.f32.mrf.mxu0
  %v2913 = vadd.f32 %v2576, %v2912
  %2914 = vmatmul.f32.gmra.mxu0 %v2726
  %v2915 = vpop.f32.mrf.mxu0
  %v2916 = vadd.f32 %v2579, %v2915
  %2917 = vmatmul.f32.gmra.mxu0 %v2728
  %v2918 = vpop.f32.mrf.mxu0
  %v2919 = vadd.f32 %v2582, %v2918
  %2920 = vmatmul.f32.gmra.mxu0 %v2730
  %v2921 = vpop.f32.mrf.mxu0
  %v2922 = vadd.f32 %v2585, %v2921
  %2923 = vmatmul.f32.gmra.mxu0 %v2732
  %v2924 = vpop.f32.mrf.mxu0
  %v2925 = vadd.f32 %v2588, %v2924
  %2926 = vmatmul.f32.gmra.mxu0 %v2734
  %v2927 = vpop.f32.mrf.mxu0
  %v2928 = vadd.f32 %v2591, %v2927
  %2929 = vmatmul.f32.gmra.mxu0 %v2736
  %v2930 = vpop.f32.mrf.mxu0
  %v2931 = vadd.f32 %v2594, %v2930
  %2932 = vmatmul.f32.gmra.mxu0 %v2738
  %v2933 = vpop.f32.mrf.mxu0
  %v2934 = vadd.f32 %v2597, %v2933
  %2935 = vmatmul.f32.gmra.mxu0 %v2740
  %v2936 = vpop.f32.mrf.mxu0
  %v2937 = vadd.f32 %v2600, %v2936
  %2938 = vmatmul.f32.gmra.mxu0 %v2742
  %v2939 = vpop.f32.mrf.mxu0
  %v2940 = vadd.f32 %v2603, %v2939
  %2941 = vmatmul.f32.gmra.mxu0 %v2744
  %v2942 = vpop.f32.mrf.mxu0
  %v2943 = vadd.f32 %v2606, %v2942
  %2944 = vmatmul.f32.gmra.mxu0 %v2746
  %v2945 = vpop.f32.mrf.mxu0
  %v2946 = vadd.f32 %v2609, %v2945
  %2947 = vmatmul.f32.gmra.mxu0 %v2748
  %v2948 = vpop.f32.mrf.mxu0
  %v2949 = vadd.f32 %v2612, %v2948
  %2950 = vmatmul.f32.gmra.mxu0 %v2750
  %v2951 = vpop.f32.mrf.mxu0
  %v2952 = vadd.f32 %v2615, %v2951
  %2953 = vmatmul.f32.gmra.mxu0 %v2752
  %v2954 = vpop.f32.mrf.mxu0
  %v2955 = vadd.f32 %v2618, %v2954
  %2956 = vmatmul.f32.gmra.mxu0 %v2754
  %v2957 = vpop.f32.mrf.mxu0
  %v2958 = vadd.f32 %v2621, %v2957
  %2959 = vmatmul.f32.gmra.mxu0 %v2756
  %v2960 = vpop.f32.mrf.mxu0
  %v2961 = vadd.f32 %v2624, %v2960
  %2962 = vmatmul.f32.gmra.mxu0 %v2758
  %v2963 = vpop.f32.mrf.mxu0
  %v2964 = vadd.f32 %v2627, %v2963
  %2965 = vmatmul.f32.gmra.mxu0 %v2760
  %v2966 = vpop.f32.mrf.mxu0
  %v2967 = vadd.f32 %v2630, %v2966
  %2968 = vmatmul.f32.gmra.mxu0 %v2762
  %v2969 = vpop.f32.mrf.mxu0
  %v2970 = vadd.f32 %v2633, %v2969
  %2971 = vmatmul.f32.gmra.mxu0 %v2764
  %v2972 = vpop.f32.mrf.mxu0
  %v2973 = vadd.f32 %v2636, %v2972
  %2974 = vdwg.mxu0
  %vm2975 = vcmask 1045504
  %v2976 = vrot.slane %v1900, 2
  %v2977 = vrot.slane %v1901, 2
  %v2978 = vsel %vm2975, %v2976, %v2977
  %v2979 = vrot.slane %v1902, 2
  %v2980 = vsel %vm2975, %v2977, %v2979
  %v2981 = vrot.slane %v1903, 2
  %v2982 = vrot.slane %v1904, 2
  %v2983 = vsel %vm2975, %v2981, %v2982
  %v2984 = vrot.slane %v1905, 2
  %v2985 = vsel %vm2975, %v2982, %v2984
  %v2986 = vrot.slane %v1906, 2
  %v2987 = vrot.slane %v1907, 2
  %v2988 = vsel %vm2975, %v2986, %v2987
  %v2989 = vrot.slane %v1908, 2
  %v2990 = vsel %vm2975, %v2987, %v2989
  %v2991 = vrot.slane %v1909, 2
  %v2992 = vrot.slane %v1910, 2
  %v2993 = vsel %vm2975, %v2991, %v2992
  %v2994 = vrot.slane %v1911, 2
  %v2995 = vsel %vm2975, %v2992, %v2994
  %v2996 = vrot.slane %v1912, 2
  %v2997 = vrot.slane %v1913, 2
  %v2998 = vsel %vm2975, %v2996, %v2997
  %v2999 = vrot.slane %v1914, 2
  %v3000 = vsel %vm2975, %v2997, %v2999
  %v3001 = vrot.slane %v1915, 2
  %v3002 = vrot.slane %v1916, 2
  %v3003 = vsel %vm2975, %v3001, %v3002
  %v3004 = vrot.slane %v1917, 2
  %v3005 = vsel %vm2975, %v3002, %v3004
  %v3006 = vrot.slane %v1918, 2
  %v3007 = vrot.slane %v1919, 2
  %v3008 = vsel %vm2975, %v3006, %v3007
  %v3009 = vrot.slane %v1920, 2
  %v3010 = vsel %vm2975, %v3007, %v3009
  %v3011 = vrot.slane %v1921, 2
  %v3012 = vrot.slane %v1922, 2
  %v3013 = vsel %vm2975, %v3011, %v3012
  %v3014 = vrot.slane %v1923, 2
  %v3015 = vsel %vm2975, %v3012, %v3014
  %v3016 = vrot.slane %v1924, 2
  %v3017 = vrot.slane %v1925, 2
  %v3018 = vsel %vm2975, %v3016, %v3017
  %v3019 = vrot.slane %v1926, 2
  %v3020 = vsel %vm2975, %v3017, %v3019
  %v3021 = vrot.slane %v1927, 2
  %v3022 = vrot.slane %v1928, 2
  %v3023 = vsel %vm2975, %v3021, %v3022
  %v3024 = vrot.slane %v1929, 2
  %v3025 = vsel %vm2975, %v3022, %v3024
  %v3026 = vrot.slane %v1930, 2
  %v3027 = vrot.slane %v1931, 2
  %v3028 = vsel %vm2975, %v3026, %v3027
  %v3029 = vrot.slane %v1932, 2
  %v3030 = vsel %vm2975, %v3027, %v3029
  %v3031 = vrot.slane %v1933, 2
  %v3032 = vrot.slane %v1934, 2
  %v3033 = vsel %vm2975, %v3031, %v3032
  %v3034 = vrot.slane %v1935, 2
  %v3035 = vsel %vm2975, %v3032, %v3034
  %v3036 = vrot.slane %v1936, 2
  %v3037 = vrot.slane %v1937, 2
  %v3038 = vsel %vm2975, %v3036, %v3037
  %v3039 = vrot.slane %v1938, 2
  %v3040 = vsel %vm2975, %v3037, %v3039
  %v3041 = vrot.slane %v1939, 2
  %v3042 = vrot.slane %v1940, 2
  %v3043 = vsel %vm2975, %v3041, %v3042
  %v3044 = vrot.slane %v1941, 2
  %v3045 = vsel %vm2975, %v3042, %v3044
  %v3046 = vrot.slane %v1942, 2
  %v3047 = vrot.slane %v1943, 2
  %v3048 = vsel %vm2975, %v3046, %v3047
  %v3049 = vrot.slane %v1944, 2
  %v3050 = vsel %vm2975, %v3047, %v3049
  %v3051 = vrot.slane %v1945, 2
  %v3052 = vrot.slane %v1946, 2
  %v3053 = vsel %vm2975, %v3051, %v3052
  %v3054 = vrot.slane %v1947, 2
  %v3055 = vsel %vm2975, %v3052, %v3054
  %v3056 = vrot.slane %v1954, 2
  %v3057 = vrot.slane %v1955, 2
  %v3058 = vsel %vm2975, %v3056, %v3057
  %v3059 = vrot.slane %v1956, 2
  %v3060 = vsel %vm2975, %v3057, %v3059
  %v3061 = vrot.slane %v1957, 2
  %v3062 = vrot.slane %v1958, 2
  %v3063 = vsel %vm2975, %v3061, %v3062
  %v3064 = vrot.slane %v1959, 2
  %v3065 = vsel %vm2975, %v3062, %v3064
  %v3066 = vrot.slane %v1960, 2
  %v3067 = vrot.slane %v1961, 2
  %v3068 = vsel %vm2975, %v3066, %v3067
  %v3069 = vrot.slane %v1962, 2
  %v3070 = vsel %vm2975, %v3067, %v3069
  %v3071 = vrot.slane %v1963, 2
  %v3072 = vrot.slane %v1964, 2
  %v3073 = vsel %vm2975, %v3071, %v3072
  %v3074 = vrot.slane %v1965, 2
  %v3075 = vsel %vm2975, %v3072, %v3074
  %v3076 = vrot.slane %v1966, 2
  %v3077 = vrot.slane %v1967, 2
  %v3078 = vsel %vm2975, %v3076, %v3077
  %v3079 = vrot.slane %v1968, 2
  %v3080 = vsel %vm2975, %v3077, %v3079
  %v3081 = vrot.slane %v1969, 2
  %v3082 = vrot.slane %v1970, 2
  %v3083 = vsel %vm2975, %v3081, %v3082
  %v3084 = vrot.slane %v1971, 2
  %v3085 = vsel %vm2975, %v3082, %v3084
  %v3086 = vrot.slane %v1972, 2
  %v3087 = vrot.slane %v1973, 2
  %v3088 = vsel %vm2975, %v3086, %v3087
  %v3089 = vrot.slane %v1974, 2
  %v3090 = vsel %vm2975, %v3087, %v3089
  %v3091 = vrot.slane %v1975, 2
  %v3092 = vrot.slane %v1976, 2
  %v3093 = vsel %vm2975, %v3091, %v3092
  %v3094 = vrot.slane %v1977, 2
  %v3095 = vsel %vm2975, %v3092, %v3094
  %v3096 = vrot.slane %v1978, 2
  %v3097 = vrot.slane %v1979, 2
  %v3098 = vsel %vm2975, %v3096, %v3097
  %v3099 = vrot.slane %v1980, 2
  %v3100 = vsel %vm2975, %v3097, %v3099
  %v3101 = vrot.slane %v1981, 2
  %v3102 = vrot.slane %v1982, 2
  %v3103 = vsel %vm2975, %v3101, %v3102
  %v3104 = vrot.slane %v1983, 2
  %v3105 = vsel %vm2975, %v3102, %v3104
  %v3106 = vrot.slane %v1984, 2
  %v3107 = vrot.slane %v1985, 2
  %v3108 = vsel %vm2975, %v3106, %v3107
  %v3109 = vrot.slane %v1986, 2
  %v3110 = vsel %vm2975, %v3107, %v3109
  %v3111 = vrot.slane %v1987, 2
  %v3112 = vrot.slane %v1988, 2
  %v3113 = vsel %vm2975, %v3111, %v3112
  %v3114 = vrot.slane %v1989, 2
  %v3115 = vsel %vm2975, %v3112, %v3114
  %v3116 = vrot.slane %v1990, 2
  %v3117 = vrot.slane %v1991, 2
  %v3118 = vsel %vm2975, %v3116, %v3117
  %v3119 = vrot.slane %v1992, 2
  %v3120 = vsel %vm2975, %v3117, %v3119
  %v3121 = vrot.slane %v1993, 2
  %v3122 = vrot.slane %v1994, 2
  %v3123 = vsel %vm2975, %v3121, %v3122
  %v3124 = vrot.slane %v1995, 2
  %v3125 = vsel %vm2975, %v3122, %v3124
  %v3126 = vrot.slane %v1996, 2
  %v3127 = vrot.slane %v1997, 2
  %v3128 = vsel %vm2975, %v3126, %v3127
  %v3129 = vrot.slane %v1998, 2
  %v3130 = vsel %vm2975, %v3127, %v3129
  %v3131 = vrot.slane %v1999, 2
  %v3132 = vrot.slane %v2000, 2
  %v3133 = vsel %vm2975, %v3131, %v3132
  %v3134 = vrot.slane %v2001, 2
  %v3135 = vsel %vm2975, %v3132, %v3134
  %v3136 = vsel %vm1114, %v2978, 0
  %v3138 = vsel %vm1114, %v2980, 0
  %v3140 = vsel %vm1114, %v2983, 0
  %v3142 = vsel %vm1114, %v2985, 0
  %v3144 = vsel %vm1114, %v2988, 0
  %v3146 = vsel %vm1114, %v2990, 0
  %v3148 = vsel %vm1114, %v2993, 0
  %v3150 = vsel %vm1114, %v2995, 0
  %v3152 = vsel %vm1114, %v2998, 0
  %v3154 = vsel %vm1114, %v3000, 0
  %v3156 = vsel %vm1114, %v3003, 0
  %v3158 = vsel %vm1114, %v3005, 0
  %v3160 = vsel %vm1114, %v3008, 0
  %v3162 = vsel %vm1114, %v3010, 0
  %v3164 = vsel %vm1114, %v3013, 0
  %v3166 = vsel %vm1114, %v3015, 0
  %v3168 = vsel %vm1114, %v3018, 0
  %v3170 = vsel %vm1114, %v3020, 0
  %v3172 = vsel %vm1114, %v3023, 0
  %v3174 = vsel %vm1114, %v3025, 0
  %v3176 = vsel %vm1114, %v3028, 0
  %v3178 = vsel %vm1114, %v3030, 0
  %v3180 = vsel %vm1114, %v3033, 0
  %v3182 = vsel %vm1114, %v3035, 0
  %v3184 = vsel %vm1114, %v3038, 0
  %v3186 = vsel %vm1114, %v3040, 0
  %v3188 = vsel %vm1114, %v3043, 0
  %v3190 = vsel %vm1114, %v3045, 0
  %v3192 = vsel %vm1114, %v3048, 0
  %v3194 = vsel %vm1114, %v3050, 0
  %v3196 = vsel %vm1114, %v3053, 0
  %v3198 = vsel %vm1114, %v3055, 0
  %v3200 = vsel %vm1114, %v3058, 0
  %v3202 = vsel %vm1114, %v3060, 0
  %v3204 = vsel %vm1114, %v3063, 0
  %v3206 = vsel %vm1114, %v3065, 0
  %v3208 = vsel %vm1114, %v3068, 0
  %v3210 = vsel %vm1114, %v3070, 0
  %v3212 = vsel %vm1114, %v3073, 0
  %v3214 = vsel %vm1114, %v3075, 0
  %v3216 = vsel %vm1114, %v3078, 0
  %v3218 = vsel %vm1114, %v3080, 0
  %v3220 = vsel %vm1114, %v3083, 0
  %v3222 = vsel %vm1114, %v3085, 0
  %v3224 = vsel %vm1114, %v3088, 0
  %v3226 = vsel %vm1114, %v3090, 0
  %v3228 = vsel %vm1114, %v3093, 0
  %v3230 = vsel %vm1114, %v3095, 0
  %v3232 = vsel %vm1114, %v3098, 0
  %v3234 = vsel %vm1114, %v3100, 0
  %v3236 = vsel %vm1114, %v3103, 0
  %v3238 = vsel %vm1114, %v3105, 0
  %v3240 = vsel %vm1114, %v3108, 0
  %v3242 = vsel %vm1114, %v3110, 0
  %v3244 = vsel %vm1114, %v3113, 0
  %v3246 = vsel %vm1114, %v3115, 0
  %v3248 = vsel %vm1114, %v3118, 0
  %v3250 = vsel %vm1114, %v3120, 0
  %v3252 = vsel %vm1114, %v3123, 0
  %v3254 = vsel %vm1114, %v3125, 0
  %v3256 = vsel %vm1114, %v3128, 0
  %v3258 = vsel %vm1114, %v3130, 0
  %v3260 = vsel %vm1114, %v3133, 0
  %v3262 = vsel %vm1114, %v3135, 0
  %3264 = vmatpush.msra.mxu0 0.0
  %3265 = vmatpush.msra.mxu0 0.0
  %3266 = vmatpush.msra.mxu0 0.0
  %3267 = vmatpush.msra.mxu0 0.0
  %3268 = vmatpush.msra.mxu0 0.0
  %3269 = vmatpush.msra.mxu0 0.0
  %3270 = vmatpush.msra.mxu0 0.0
  %3271 = vmatpush.msra.mxu0 0.0
  %3272 = vmatpush.msra.mxu0 0.0
  %3273 = vmatpush.msra.mxu0 0.0
  %3274 = vmatpush.msra.mxu0 0.0
  %3275 = vmatpush.msra.mxu0 0.0
  %3276 = vmatpush.msra.mxu0 %v2019
  %3277 = vmatpush.msra.mxu0 %v2018
  %3278 = vmatpush.msra.mxu0 %v2017
  %3279 = vmatpush.msra.mxu0 %v2016
  %3280 = vmatmul.f32.gmra.mxu0 %v3136
  %v3281 = vpop.f32.mrf.mxu0
  %v3282 = vadd.f32 0.0, %v3281
  %3283 = vmatmul.f32.gmra.mxu0 %v3138
  %v3284 = vpop.f32.mrf.mxu0
  %v3285 = vadd.f32 0.0, %v3284
  %3286 = vmatmul.f32.gmra.mxu0 %v3140
  %v3287 = vpop.f32.mrf.mxu0
  %v3288 = vadd.f32 0.0, %v3287
  %3289 = vmatmul.f32.gmra.mxu0 %v3142
  %v3290 = vpop.f32.mrf.mxu0
  %v3291 = vadd.f32 0.0, %v3290
  %3292 = vmatmul.f32.gmra.mxu0 %v3144
  %v3293 = vpop.f32.mrf.mxu0
  %v3294 = vadd.f32 0.0, %v3293
  %3295 = vmatmul.f32.gmra.mxu0 %v3146
  %v3296 = vpop.f32.mrf.mxu0
  %v3297 = vadd.f32 0.0, %v3296
  %3298 = vmatmul.f32.gmra.mxu0 %v3148
  %v3299 = vpop.f32.mrf.mxu0
  %v3300 = vadd.f32 0.0, %v3299
  %3301 = vmatmul.f32.gmra.mxu0 %v3150
  %v3302 = vpop.f32.mrf.mxu0
  %v3303 = vadd.f32 0.0, %v3302
  %3304 = vmatmul.f32.gmra.mxu0 %v3152
  %v3305 = vpop.f32.mrf.mxu0
  %v3306 = vadd.f32 0.0, %v3305
  %3307 = vmatmul.f32.gmra.mxu0 %v3154
  %v3308 = vpop.f32.mrf.mxu0
  %v3309 = vadd.f32 0.0, %v3308
  %3310 = vmatmul.f32.gmra.mxu0 %v3156
  %v3311 = vpop.f32.mrf.mxu0
  %v3312 = vadd.f32 0.0, %v3311
  %3313 = vmatmul.f32.gmra.mxu0 %v3158
  %v3314 = vpop.f32.mrf.mxu0
  %v3315 = vadd.f32 0.0, %v3314
  %3316 = vmatmul.f32.gmra.mxu0 %v3160
  %v3317 = vpop.f32.mrf.mxu0
  %v3318 = vadd.f32 0.0, %v3317
  %3319 = vmatmul.f32.gmra.mxu0 %v3162
  %v3320 = vpop.f32.mrf.mxu0
  %v3321 = vadd.f32 0.0, %v3320
  %3322 = vmatmul.f32.gmra.mxu0 %v3164
  %v3323 = vpop.f32.mrf.mxu0
  %v3324 = vadd.f32 0.0, %v3323
  %3325 = vmatmul.f32.gmra.mxu0 %v3166
  %v3326 = vpop.f32.mrf.mxu0
  %v3327 = vadd.f32 0.0, %v3326
  %3328 = vmatmul.f32.gmra.mxu0 %v3168
  %v3329 = vpop.f32.mrf.mxu0
  %v3330 = vadd.f32 0.0, %v3329
  %3331 = vmatmul.f32.gmra.mxu0 %v3170
  %v3332 = vpop.f32.mrf.mxu0
  %v3333 = vadd.f32 0.0, %v3332
  %3334 = vmatmul.f32.gmra.mxu0 %v3172
  %v3335 = vpop.f32.mrf.mxu0
  %v3336 = vadd.f32 0.0, %v3335
  %3337 = vmatmul.f32.gmra.mxu0 %v3174
  %v3338 = vpop.f32.mrf.mxu0
  %v3339 = vadd.f32 0.0, %v3338
  %3340 = vmatmul.f32.gmra.mxu0 %v3176
  %v3341 = vpop.f32.mrf.mxu0
  %v3342 = vadd.f32 0.0, %v3341
  %3343 = vmatmul.f32.gmra.mxu0 %v3178
  %v3344 = vpop.f32.mrf.mxu0
  %v3345 = vadd.f32 0.0, %v3344
  %3346 = vmatmul.f32.gmra.mxu0 %v3180
  %v3347 = vpop.f32.mrf.mxu0
  %v3348 = vadd.f32 0.0, %v3347
  %3349 = vmatmul.f32.gmra.mxu0 %v3182
  %v3350 = vpop.f32.mrf.mxu0
  %v3351 = vadd.f32 0.0, %v3350
  %3352 = vmatmul.f32.gmra.mxu0 %v3184
  %v3353 = vpop.f32.mrf.mxu0
  %v3354 = vadd.f32 0.0, %v3353
  %3355 = vmatmul.f32.gmra.mxu0 %v3186
  %v3356 = vpop.f32.mrf.mxu0
  %v3357 = vadd.f32 0.0, %v3356
  %3358 = vmatmul.f32.gmra.mxu0 %v3188
  %v3359 = vpop.f32.mrf.mxu0
  %v3360 = vadd.f32 0.0, %v3359
  %3361 = vmatmul.f32.gmra.mxu0 %v3190
  %v3362 = vpop.f32.mrf.mxu0
  %v3363 = vadd.f32 0.0, %v3362
  %3364 = vmatmul.f32.gmra.mxu0 %v3192
  %v3365 = vpop.f32.mrf.mxu0
  %v3366 = vadd.f32 0.0, %v3365
  %3367 = vmatmul.f32.gmra.mxu0 %v3194
  %v3368 = vpop.f32.mrf.mxu0
  %v3369 = vadd.f32 0.0, %v3368
  %3370 = vmatmul.f32.gmra.mxu0 %v3196
  %v3371 = vpop.f32.mrf.mxu0
  %v3372 = vadd.f32 0.0, %v3371
  %3373 = vmatmul.f32.gmra.mxu0 %v3198
  %v3374 = vpop.f32.mrf.mxu0
  %v3375 = vadd.f32 0.0, %v3374
  %3376 = vmatmul.f32.gmra.mxu0 %v3200
  %v3377 = vpop.f32.mrf.mxu0
  %v3378 = vadd.f32 0.0, %v3377
  %3379 = vmatmul.f32.gmra.mxu0 %v3202
  %v3380 = vpop.f32.mrf.mxu0
  %v3381 = vadd.f32 0.0, %v3380
  %3382 = vmatmul.f32.gmra.mxu0 %v3204
  %v3383 = vpop.f32.mrf.mxu0
  %v3384 = vadd.f32 0.0, %v3383
  %3385 = vmatmul.f32.gmra.mxu0 %v3206
  %v3386 = vpop.f32.mrf.mxu0
  %v3387 = vadd.f32 0.0, %v3386
  %3388 = vmatmul.f32.gmra.mxu0 %v3208
  %v3389 = vpop.f32.mrf.mxu0
  %v3390 = vadd.f32 0.0, %v3389
  %3391 = vmatmul.f32.gmra.mxu0 %v3210
  %v3392 = vpop.f32.mrf.mxu0
  %v3393 = vadd.f32 0.0, %v3392
  %3394 = vmatmul.f32.gmra.mxu0 %v3212
  %v3395 = vpop.f32.mrf.mxu0
  %v3396 = vadd.f32 0.0, %v3395
  %3397 = vmatmul.f32.gmra.mxu0 %v3214
  %v3398 = vpop.f32.mrf.mxu0
  %v3399 = vadd.f32 0.0, %v3398
  %3400 = vmatmul.f32.gmra.mxu0 %v3216
  %v3401 = vpop.f32.mrf.mxu0
  %v3402 = vadd.f32 0.0, %v3401
  %3403 = vmatmul.f32.gmra.mxu0 %v3218
  %v3404 = vpop.f32.mrf.mxu0
  %v3405 = vadd.f32 0.0, %v3404
  %3406 = vmatmul.f32.gmra.mxu0 %v3220
  %v3407 = vpop.f32.mrf.mxu0
  %v3408 = vadd.f32 0.0, %v3407
  %3409 = vmatmul.f32.gmra.mxu0 %v3222
  %v3410 = vpop.f32.mrf.mxu0
  %v3411 = vadd.f32 0.0, %v3410
  %3412 = vmatmul.f32.gmra.mxu0 %v3224
  %v3413 = vpop.f32.mrf.mxu0
  %v3414 = vadd.f32 0.0, %v3413
  %3415 = vmatmul.f32.gmra.mxu0 %v3226
  %v3416 = vpop.f32.mrf.mxu0
  %v3417 = vadd.f32 0.0, %v3416
  %3418 = vmatmul.f32.gmra.mxu0 %v3228
  %v3419 = vpop.f32.mrf.mxu0
  %v3420 = vadd.f32 0.0, %v3419
  %3421 = vmatmul.f32.gmra.mxu0 %v3230
  %v3422 = vpop.f32.mrf.mxu0
  %v3423 = vadd.f32 0.0, %v3422
  %3424 = vmatmul.f32.gmra.mxu0 %v3232
  %v3425 = vpop.f32.mrf.mxu0
  %v3426 = vadd.f32 0.0, %v3425
  %3427 = vmatmul.f32.gmra.mxu0 %v3234
  %v3428 = vpop.f32.mrf.mxu0
  %v3429 = vadd.f32 0.0, %v3428
  %3430 = vmatmul.f32.gmra.mxu0 %v3236
  %v3431 = vpop.f32.mrf.mxu0
  %v3432 = vadd.f32 0.0, %v3431
  %3433 = vmatmul.f32.gmra.mxu0 %v3238
  %v3434 = vpop.f32.mrf.mxu0
  %v3435 = vadd.f32 0.0, %v3434
  %3436 = vmatmul.f32.gmra.mxu0 %v3240
  %v3437 = vpop.f32.mrf.mxu0
  %v3438 = vadd.f32 0.0, %v3437
  %3439 = vmatmul.f32.gmra.mxu0 %v3242
  %v3440 = vpop.f32.mrf.mxu0
  %v3441 = vadd.f32 0.0, %v3440
  %3442 = vmatmul.f32.gmra.mxu0 %v3244
  %v3443 = vpop.f32.mrf.mxu0
  %v3444 = vadd.f32 0.0, %v3443
  %3445 = vmatmul.f32.gmra.mxu0 %v3246
  %v3446 = vpop.f32.mrf.mxu0
  %v3447 = vadd.f32 0.0, %v3446
  %3448 = vmatmul.f32.gmra.mxu0 %v3248
  %v3449 = vpop.f32.mrf.mxu0
  %v3450 = vadd.f32 0.0, %v3449
  %3451 = vmatmul.f32.gmra.mxu0 %v3250
  %v3452 = vpop.f32.mrf.mxu0
  %v3453 = vadd.f32 0.0, %v3452
  %3454 = vmatmul.f32.gmra.mxu0 %v3252
  %v3455 = vpop.f32.mrf.mxu0
  %v3456 = vadd.f32 0.0, %v3455
  %3457 = vmatmul.f32.gmra.mxu0 %v3254
  %v3458 = vpop.f32.mrf.mxu0
  %v3459 = vadd.f32 0.0, %v3458
  %3460 = vmatmul.f32.gmra.mxu0 %v3256
  %v3461 = vpop.f32.mrf.mxu0
  %v3462 = vadd.f32 0.0, %v3461
  %3463 = vmatmul.f32.gmra.mxu0 %v3258
  %v3464 = vpop.f32.mrf.mxu0
  %v3465 = vadd.f32 0.0, %v3464
  %3466 = vmatmul.f32.gmra.mxu0 %v3260
  %v3467 = vpop.f32.mrf.mxu0
  %v3468 = vadd.f32 0.0, %v3467
  %3469 = vmatmul.f32.gmra.mxu0 %v3262
  %v3470 = vpop.f32.mrf.mxu0
  %v3471 = vadd.f32 0.0, %v3470
  %3472 = vdwg.mxu0
  %v3473 = vadd.f32 %v2784, %v3282
  %v3474 = vadd.f32 %v2787, %v3285
  %v3475 = vadd.f32 %v2790, %v3288
  %v3476 = vadd.f32 %v2793, %v3291
  %v3477 = vadd.f32 %v2796, %v3294
  %v3478 = vadd.f32 %v2799, %v3297
  %v3479 = vadd.f32 %v2802, %v3300
  %v3480 = vadd.f32 %v2805, %v3303
  %v3481 = vadd.f32 %v2808, %v3306
  %v3482 = vadd.f32 %v2811, %v3309
  %v3483 = vadd.f32 %v2814, %v3312
  %v3484 = vadd.f32 %v2817, %v3315
  %v3485 = vadd.f32 %v2820, %v3318
  %v3486 = vadd.f32 %v2823, %v3321
  %v3487 = vadd.f32 %v2826, %v3324
  %v3488 = vadd.f32 %v2829, %v3327
  %v3489 = vadd.f32 %v2832, %v3330
  %v3490 = vadd.f32 %v2835, %v3333
  %v3491 = vadd.f32 %v2838, %v3336
  %v3492 = vadd.f32 %v2841, %v3339
  %v3493 = vadd.f32 %v2844, %v3342
  %v3494 = vadd.f32 %v2847, %v3345
  %v3495 = vadd.f32 %v2850, %v3348
  %v3496 = vadd.f32 %v2853, %v3351
  %v3497 = vadd.f32 %v2856, %v3354
  %v3498 = vadd.f32 %v2859, %v3357
  %v3499 = vadd.f32 %v2862, %v3360
  %v3500 = vadd.f32 %v2865, %v3363
  %v3501 = vadd.f32 %v2868, %v3366
  %v3502 = vadd.f32 %v2871, %v3369
  %v3503 = vadd.f32 %v2874, %v3372
  %v3504 = vadd.f32 %v2877, %v3375
  %v3505 = vadd.f32 %v2880, %v3378
  %v3506 = vadd.f32 %v2883, %v3381
  %v3507 = vadd.f32 %v2886, %v3384
  %v3508 = vadd.f32 %v2889, %v3387
  %v3509 = vadd.f32 %v2892, %v3390
  %v3510 = vadd.f32 %v2895, %v3393
  %v3511 = vadd.f32 %v2898, %v3396
  %v3512 = vadd.f32 %v2901, %v3399
  %v3513 = vadd.f32 %v2904, %v3402
  %v3514 = vadd.f32 %v2907, %v3405
  %v3515 = vadd.f32 %v2910, %v3408
  %v3516 = vadd.f32 %v2913, %v3411
  %v3517 = vadd.f32 %v2916, %v3414
  %v3518 = vadd.f32 %v2919, %v3417
  %v3519 = vadd.f32 %v2922, %v3420
  %v3520 = vadd.f32 %v2925, %v3423
  %v3521 = vadd.f32 %v2928, %v3426
  %v3522 = vadd.f32 %v2931, %v3429
  %v3523 = vadd.f32 %v2934, %v3432
  %v3524 = vadd.f32 %v2937, %v3435
  %v3525 = vadd.f32 %v2940, %v3438
  %v3526 = vadd.f32 %v2943, %v3441
  %v3527 = vadd.f32 %v2946, %v3444
  %v3528 = vadd.f32 %v2949, %v3447
  %v3529 = vadd.f32 %v2952, %v3450
  %v3530 = vadd.f32 %v2955, %v3453
  %v3531 = vadd.f32 %v2958, %v3456
  %v3532 = vadd.f32 %v2961, %v3459
  %v3533 = vadd.f32 %v2964, %v3462
  %v3534 = vadd.f32 %v2967, %v3465
  %v3535 = vadd.f32 %v2970, %v3468
  %v3536 = vadd.f32 %v2973, %v3471
  %v3538 = vsel %vm1114, %v1948, 0
  %v3541 = vsel %vm1114, %v1949, 0
  %v3544 = vsel %vm1114, %v2002, 0
  %v3547 = vsel %vm1114, %v2003, 0
  %3549 = vmatpush.msra.mxu0 0.0
  %3550 = vmatpush.msra.mxu0 0.0
  %3551 = vmatpush.msra.mxu0 0.0
  %3552 = vmatpush.msra.mxu0 0.0
  %3553 = vmatpush.msra.mxu0 0.0
  %3554 = vmatpush.msra.mxu0 0.0
  %3555 = vmatpush.msra.mxu0 0.0
  %3556 = vmatpush.msra.mxu0 0.0
  %3557 = vmatpush.msra.mxu0 0.0
  %3558 = vmatpush.msra.mxu0 0.0
  %3559 = vmatpush.msra.mxu0 0.0
  %3560 = vmatpush.msra.mxu0 0.0
  %3561 = vmatpush.msra.mxu0 %v2023
  %3562 = vmatpush.msra.mxu0 %v2022
  %3563 = vmatpush.msra.mxu0 %v2021
  %3564 = vmatpush.msra.mxu0 %v2020
  %3565 = vmatmul.f32.gmra.mxu0 %v2642
  %v3566 = vpop.f32.mrf.mxu0
  %v3567 = vadd.f32 0.0, %v3566
  %3568 = vmatmul.f32.gmra.mxu0 %v2644
  %v3569 = vpop.f32.mrf.mxu0
  %v3570 = vadd.f32 0.0, %v3569
  %3571 = vmatmul.f32.gmra.mxu0 %v2646
  %v3572 = vpop.f32.mrf.mxu0
  %v3573 = vadd.f32 0.0, %v3572
  %3574 = vmatmul.f32.gmra.mxu0 %v2648
  %v3575 = vpop.f32.mrf.mxu0
  %v3576 = vadd.f32 0.0, %v3575
  %3577 = vmatmul.f32.gmra.mxu0 %v2650
  %v3578 = vpop.f32.mrf.mxu0
  %v3579 = vadd.f32 0.0, %v3578
  %3580 = vmatmul.f32.gmra.mxu0 %v2652
  %v3581 = vpop.f32.mrf.mxu0
  %v3582 = vadd.f32 0.0, %v3581
  %3583 = vmatmul.f32.gmra.mxu0 %v2654
  %v3584 = vpop.f32.mrf.mxu0
  %v3585 = vadd.f32 0.0, %v3584
  %3586 = vmatmul.f32.gmra.mxu0 %v2656
  %v3587 = vpop.f32.mrf.mxu0
  %v3588 = vadd.f32 0.0, %v3587
  %3589 = vmatmul.f32.gmra.mxu0 %v2658
  %v3590 = vpop.f32.mrf.mxu0
  %v3591 = vadd.f32 0.0, %v3590
  %3592 = vmatmul.f32.gmra.mxu0 %v2660
  %v3593 = vpop.f32.mrf.mxu0
  %v3594 = vadd.f32 0.0, %v3593
  %3595 = vmatmul.f32.gmra.mxu0 %v2662
  %v3596 = vpop.f32.mrf.mxu0
  %v3597 = vadd.f32 0.0, %v3596
  %3598 = vmatmul.f32.gmra.mxu0 %v2664
  %v3599 = vpop.f32.mrf.mxu0
  %v3600 = vadd.f32 0.0, %v3599
  %3601 = vmatmul.f32.gmra.mxu0 %v2666
  %v3602 = vpop.f32.mrf.mxu0
  %v3603 = vadd.f32 0.0, %v3602
  %3604 = vmatmul.f32.gmra.mxu0 %v2668
  %v3605 = vpop.f32.mrf.mxu0
  %v3606 = vadd.f32 0.0, %v3605
  %3607 = vmatmul.f32.gmra.mxu0 %v2670
  %v3608 = vpop.f32.mrf.mxu0
  %v3609 = vadd.f32 0.0, %v3608
  %3610 = vmatmul.f32.gmra.mxu0 %v2672
  %v3611 = vpop.f32.mrf.mxu0
  %v3612 = vadd.f32 0.0, %v3611
  %3613 = vmatmul.f32.gmra.mxu0 %v2674
  %v3614 = vpop.f32.mrf.mxu0
  %v3615 = vadd.f32 0.0, %v3614
  %3616 = vmatmul.f32.gmra.mxu0 %v2676
  %v3617 = vpop.f32.mrf.mxu0
  %v3618 = vadd.f32 0.0, %v3617
  %3619 = vmatmul.f32.gmra.mxu0 %v2678
  %v3620 = vpop.f32.mrf.mxu0
  %v3621 = vadd.f32 0.0, %v3620
  %3622 = vmatmul.f32.gmra.mxu0 %v2680
  %v3623 = vpop.f32.mrf.mxu0
  %v3624 = vadd.f32 0.0, %v3623
  %3625 = vmatmul.f32.gmra.mxu0 %v2682
  %v3626 = vpop.f32.mrf.mxu0
  %v3627 = vadd.f32 0.0, %v3626
  %3628 = vmatmul.f32.gmra.mxu0 %v2684
  %v3629 = vpop.f32.mrf.mxu0
  %v3630 = vadd.f32 0.0, %v3629
  %3631 = vmatmul.f32.gmra.mxu0 %v2686
  %v3632 = vpop.f32.mrf.mxu0
  %v3633 = vadd.f32 0.0, %v3632
  %3634 = vmatmul.f32.gmra.mxu0 %v2688
  %v3635 = vpop.f32.mrf.mxu0
  %v3636 = vadd.f32 0.0, %v3635
  %3637 = vmatmul.f32.gmra.mxu0 %v2690
  %v3638 = vpop.f32.mrf.mxu0
  %v3639 = vadd.f32 0.0, %v3638
  %3640 = vmatmul.f32.gmra.mxu0 %v2692
  %v3641 = vpop.f32.mrf.mxu0
  %v3642 = vadd.f32 0.0, %v3641
  %3643 = vmatmul.f32.gmra.mxu0 %v2694
  %v3644 = vpop.f32.mrf.mxu0
  %v3645 = vadd.f32 0.0, %v3644
  %3646 = vmatmul.f32.gmra.mxu0 %v2696
  %v3647 = vpop.f32.mrf.mxu0
  %v3648 = vadd.f32 0.0, %v3647
  %3649 = vmatmul.f32.gmra.mxu0 %v2698
  %v3650 = vpop.f32.mrf.mxu0
  %v3651 = vadd.f32 0.0, %v3650
  %3652 = vmatmul.f32.gmra.mxu0 %v2700
  %v3653 = vpop.f32.mrf.mxu0
  %v3654 = vadd.f32 0.0, %v3653
  %3655 = vmatmul.f32.gmra.mxu0 %v3538
  %v3656 = vpop.f32.mrf.mxu0
  %v3657 = vadd.f32 0.0, %v3656
  %3658 = vmatmul.f32.gmra.mxu0 %v3541
  %v3659 = vpop.f32.mrf.mxu0
  %v3660 = vadd.f32 0.0, %v3659
  %3661 = vmatmul.f32.gmra.mxu0 %v2706
  %v3662 = vpop.f32.mrf.mxu0
  %v3663 = vadd.f32 0.0, %v3662
  %3664 = vmatmul.f32.gmra.mxu0 %v2708
  %v3665 = vpop.f32.mrf.mxu0
  %v3666 = vadd.f32 0.0, %v3665
  %3667 = vmatmul.f32.gmra.mxu0 %v2710
  %v3668 = vpop.f32.mrf.mxu0
  %v3669 = vadd.f32 0.0, %v3668
  %3670 = vmatmul.f32.gmra.mxu0 %v2712
  %v3671 = vpop.f32.mrf.mxu0
  %v3672 = vadd.f32 0.0, %v3671
  %3673 = vmatmul.f32.gmra.mxu0 %v2714
  %v3674 = vpop.f32.mrf.mxu0
  %v3675 = vadd.f32 0.0, %v3674
  %3676 = vmatmul.f32.gmra.mxu0 %v2716
  %v3677 = vpop.f32.mrf.mxu0
  %v3678 = vadd.f32 0.0, %v3677
  %3679 = vmatmul.f32.gmra.mxu0 %v2718
  %v3680 = vpop.f32.mrf.mxu0
  %v3681 = vadd.f32 0.0, %v3680
  %3682 = vmatmul.f32.gmra.mxu0 %v2720
  %v3683 = vpop.f32.mrf.mxu0
  %v3684 = vadd.f32 0.0, %v3683
  %3685 = vmatmul.f32.gmra.mxu0 %v2722
  %v3686 = vpop.f32.mrf.mxu0
  %v3687 = vadd.f32 0.0, %v3686
  %3688 = vmatmul.f32.gmra.mxu0 %v2724
  %v3689 = vpop.f32.mrf.mxu0
  %v3690 = vadd.f32 0.0, %v3689
  %3691 = vmatmul.f32.gmra.mxu0 %v2726
  %v3692 = vpop.f32.mrf.mxu0
  %v3693 = vadd.f32 0.0, %v3692
  %3694 = vmatmul.f32.gmra.mxu0 %v2728
  %v3695 = vpop.f32.mrf.mxu0
  %v3696 = vadd.f32 0.0, %v3695
  %3697 = vmatmul.f32.gmra.mxu0 %v2730
  %v3698 = vpop.f32.mrf.mxu0
  %v3699 = vadd.f32 0.0, %v3698
  %3700 = vmatmul.f32.gmra.mxu0 %v2732
  %v3701 = vpop.f32.mrf.mxu0
  %v3702 = vadd.f32 0.0, %v3701
  %3703 = vmatmul.f32.gmra.mxu0 %v2734
  %v3704 = vpop.f32.mrf.mxu0
  %v3705 = vadd.f32 0.0, %v3704
  %3706 = vmatmul.f32.gmra.mxu0 %v2736
  %v3707 = vpop.f32.mrf.mxu0
  %v3708 = vadd.f32 0.0, %v3707
  %3709 = vmatmul.f32.gmra.mxu0 %v2738
  %v3710 = vpop.f32.mrf.mxu0
  %v3711 = vadd.f32 0.0, %v3710
  %3712 = vmatmul.f32.gmra.mxu0 %v2740
  %v3713 = vpop.f32.mrf.mxu0
  %v3714 = vadd.f32 0.0, %v3713
  %3715 = vmatmul.f32.gmra.mxu0 %v2742
  %v3716 = vpop.f32.mrf.mxu0
  %v3717 = vadd.f32 0.0, %v3716
  %3718 = vmatmul.f32.gmra.mxu0 %v2744
  %v3719 = vpop.f32.mrf.mxu0
  %v3720 = vadd.f32 0.0, %v3719
  %3721 = vmatmul.f32.gmra.mxu0 %v2746
  %v3722 = vpop.f32.mrf.mxu0
  %v3723 = vadd.f32 0.0, %v3722
  %3724 = vmatmul.f32.gmra.mxu0 %v2748
  %v3725 = vpop.f32.mrf.mxu0
  %v3726 = vadd.f32 0.0, %v3725
  %3727 = vmatmul.f32.gmra.mxu0 %v2750
  %v3728 = vpop.f32.mrf.mxu0
  %v3729 = vadd.f32 0.0, %v3728
  %3730 = vmatmul.f32.gmra.mxu0 %v2752
  %v3731 = vpop.f32.mrf.mxu0
  %v3732 = vadd.f32 0.0, %v3731
  %3733 = vmatmul.f32.gmra.mxu0 %v2754
  %v3734 = vpop.f32.mrf.mxu0
  %v3735 = vadd.f32 0.0, %v3734
  %3736 = vmatmul.f32.gmra.mxu0 %v2756
  %v3737 = vpop.f32.mrf.mxu0
  %v3738 = vadd.f32 0.0, %v3737
  %3739 = vmatmul.f32.gmra.mxu0 %v2758
  %v3740 = vpop.f32.mrf.mxu0
  %v3741 = vadd.f32 0.0, %v3740
  %3742 = vmatmul.f32.gmra.mxu0 %v2760
  %v3743 = vpop.f32.mrf.mxu0
  %v3744 = vadd.f32 0.0, %v3743
  %3745 = vmatmul.f32.gmra.mxu0 %v2762
  %v3746 = vpop.f32.mrf.mxu0
  %v3747 = vadd.f32 0.0, %v3746
  %3748 = vmatmul.f32.gmra.mxu0 %v2764
  %v3749 = vpop.f32.mrf.mxu0
  %v3750 = vadd.f32 0.0, %v3749
  %3751 = vmatmul.f32.gmra.mxu0 %v3544
  %v3752 = vpop.f32.mrf.mxu0
  %v3753 = vadd.f32 0.0, %v3752
  %3754 = vmatmul.f32.gmra.mxu0 %v3547
  %v3755 = vpop.f32.mrf.mxu0
  %v3756 = vadd.f32 0.0, %v3755
  %3757 = vdwg.mxu0
  %v3758 = vadd.f32 %v3473, %v3567
  %v3759 = vadd.f32 %v3474, %v3570
  %v3760 = vadd.f32 %v3475, %v3573
  %v3761 = vadd.f32 %v3476, %v3576
  %v3762 = vadd.f32 %v3477, %v3579
  %v3763 = vadd.f32 %v3478, %v3582
  %v3764 = vadd.f32 %v3479, %v3585
  %v3765 = vadd.f32 %v3480, %v3588
  %v3766 = vadd.f32 %v3481, %v3591
  %v3767 = vadd.f32 %v3482, %v3594
  %v3768 = vadd.f32 %v3483, %v3597
  %v3769 = vadd.f32 %v3484, %v3600
  %v3770 = vadd.f32 %v3485, %v3603
  %v3771 = vadd.f32 %v3486, %v3606
  %v3772 = vadd.f32 %v3487, %v3609
  %v3773 = vadd.f32 %v3488, %v3612
  %v3774 = vadd.f32 %v3489, %v3615
  %v3775 = vadd.f32 %v3490, %v3618
  %v3776 = vadd.f32 %v3491, %v3621
  %v3777 = vadd.f32 %v3492, %v3624
  %v3778 = vadd.f32 %v3493, %v3627
  %v3779 = vadd.f32 %v3494, %v3630
  %v3780 = vadd.f32 %v3495, %v3633
  %v3781 = vadd.f32 %v3496, %v3636
  %v3782 = vadd.f32 %v3497, %v3639
  %v3783 = vadd.f32 %v3498, %v3642
  %v3784 = vadd.f32 %v3499, %v3645
  %v3785 = vadd.f32 %v3500, %v3648
  %v3786 = vadd.f32 %v3501, %v3651
  %v3787 = vadd.f32 %v3502, %v3654
  %v3788 = vadd.f32 %v3503, %v3657
  %v3789 = vadd.f32 %v3504, %v3660
  %v3790 = vadd.f32 %v3505, %v3663
  %v3791 = vadd.f32 %v3506, %v3666
  %v3792 = vadd.f32 %v3507, %v3669
  %v3793 = vadd.f32 %v3508, %v3672
  %v3794 = vadd.f32 %v3509, %v3675
  %v3795 = vadd.f32 %v3510, %v3678
  %v3796 = vadd.f32 %v3511, %v3681
  %v3797 = vadd.f32 %v3512, %v3684
  %v3798 = vadd.f32 %v3513, %v3687
  %v3799 = vadd.f32 %v3514, %v3690
  %v3800 = vadd.f32 %v3515, %v3693
  %v3801 = vadd.f32 %v3516, %v3696
  %v3802 = vadd.f32 %v3517, %v3699
  %v3803 = vadd.f32 %v3518, %v3702
  %v3804 = vadd.f32 %v3519, %v3705
  %v3805 = vadd.f32 %v3520, %v3708
  %v3806 = vadd.f32 %v3521, %v3711
  %v3807 = vadd.f32 %v3522, %v3714
  %v3808 = vadd.f32 %v3523, %v3717
  %v3809 = vadd.f32 %v3524, %v3720
  %v3810 = vadd.f32 %v3525, %v3723
  %v3811 = vadd.f32 %v3526, %v3726
  %v3812 = vadd.f32 %v3527, %v3729
  %v3813 = vadd.f32 %v3528, %v3732
  %v3814 = vadd.f32 %v3529, %v3735
  %v3815 = vadd.f32 %v3530, %v3738
  %v3816 = vadd.f32 %v3531, %v3741
  %v3817 = vadd.f32 %v3532, %v3744
  %v3818 = vadd.f32 %v3533, %v3747
  %v3819 = vadd.f32 %v3534, %v3750
  %v3820 = vadd.f32 %v3535, %v3753
  %v3821 = vadd.f32 %v3536, %v3756
  %v3824 = vrot.slane %v1948, 1
  %v3825 = vrot.slane %v1949, 1
  %v3826 = vsel %vm2140, %v3824, %v3825
  %v3827 = vrot.slane %v1950, 1
  %v3828 = vsel %vm2140, %v3825, %v3827
  %v3829 = vrot.slane %v2002, 1
  %v3830 = vrot.slane %v2003, 1
  %v3831 = vsel %vm2140, %v3829, %v3830
  %v3832 = vrot.slane %v2004, 1
  %v3833 = vsel %vm2140, %v3830, %v3832
  %v3834 = vsel %vm1114, %v3826, 0
  %v3836 = vsel %vm1114, %v3828, 0
  %v3838 = vsel %vm1114, %v3831, 0
  %v3840 = vsel %vm1114, %v3833, 0
  %3842 = vmatpush.msra.mxu0 0.0
  %3843 = vmatpush.msra.mxu0 0.0
  %3844 = vmatpush.msra.mxu0 0.0
  %3845 = vmatpush.msra.mxu0 0.0
  %3846 = vmatpush.msra.mxu0 0.0
  %3847 = vmatpush.msra.mxu0 0.0
  %3848 = vmatpush.msra.mxu0 0.0
  %3849 = vmatpush.msra.mxu0 0.0
  %3850 = vmatpush.msra.mxu0 0.0
  %3851 = vmatpush.msra.mxu0 0.0
  %3852 = vmatpush.msra.mxu0 0.0
  %3853 = vmatpush.msra.mxu0 0.0
  %3854 = vmatpush.msra.mxu0 %v2027
  %3855 = vmatpush.msra.mxu0 %v2026
  %3856 = vmatpush.msra.mxu0 %v2025
  %3857 = vmatpush.msra.mxu0 %v2024
  %3858 = vmatmul.f32.gmra.mxu0 %v2305
  %v3859 = vpop.f32.mrf.mxu0
  %v3860 = vadd.f32 0.0, %v3859
  %3861 = vmatmul.f32.gmra.mxu0 %v2307
  %v3862 = vpop.f32.mrf.mxu0
  %v3863 = vadd.f32 0.0, %v3862
  %3864 = vmatmul.f32.gmra.mxu0 %v2309
  %v3865 = vpop.f32.mrf.mxu0
  %v3866 = vadd.f32 0.0, %v3865
  %3867 = vmatmul.f32.gmra.mxu0 %v2311
  %v3868 = vpop.f32.mrf.mxu0
  %v3869 = vadd.f32 0.0, %v3868
  %3870 = vmatmul.f32.gmra.mxu0 %v2313
  %v3871 = vpop.f32.mrf.mxu0
  %v3872 = vadd.f32 0.0, %v3871
  %3873 = vmatmul.f32.gmra.mxu0 %v2315
  %v3874 = vpop.f32.mrf.mxu0
  %v3875 = vadd.f32 0.0, %v3874
  %3876 = vmatmul.f32.gmra.mxu0 %v2317
  %v3877 = vpop.f32.mrf.mxu0
  %v3878 = vadd.f32 0.0, %v3877
  %3879 = vmatmul.f32.gmra.mxu0 %v2319
  %v3880 = vpop.f32.mrf.mxu0
  %v3881 = vadd.f32 0.0, %v3880
  %3882 = vmatmul.f32.gmra.mxu0 %v2321
  %v3883 = vpop.f32.mrf.mxu0
  %v3884 = vadd.f32 0.0, %v3883
  %3885 = vmatmul.f32.gmra.mxu0 %v2323
  %v3886 = vpop.f32.mrf.mxu0
  %v3887 = vadd.f32 0.0, %v3886
  %3888 = vmatmul.f32.gmra.mxu0 %v2325
  %v3889 = vpop.f32.mrf.mxu0
  %v3890 = vadd.f32 0.0, %v3889
  %3891 = vmatmul.f32.gmra.mxu0 %v2327
  %v3892 = vpop.f32.mrf.mxu0
  %v3893 = vadd.f32 0.0, %v3892
  %3894 = vmatmul.f32.gmra.mxu0 %v2329
  %v3895 = vpop.f32.mrf.mxu0
  %v3896 = vadd.f32 0.0, %v3895
  %3897 = vmatmul.f32.gmra.mxu0 %v2331
  %v3898 = vpop.f32.mrf.mxu0
  %v3899 = vadd.f32 0.0, %v3898
  %3900 = vmatmul.f32.gmra.mxu0 %v2333
  %v3901 = vpop.f32.mrf.mxu0
  %v3902 = vadd.f32 0.0, %v3901
  %3903 = vmatmul.f32.gmra.mxu0 %v2335
  %v3904 = vpop.f32.mrf.mxu0
  %v3905 = vadd.f32 0.0, %v3904
  %3906 = vmatmul.f32.gmra.mxu0 %v2337
  %v3907 = vpop.f32.mrf.mxu0
  %v3908 = vadd.f32 0.0, %v3907
  %3909 = vmatmul.f32.gmra.mxu0 %v2339
  %v3910 = vpop.f32.mrf.mxu0
  %v3911 = vadd.f32 0.0, %v3910
  %3912 = vmatmul.f32.gmra.mxu0 %v2341
  %v3913 = vpop.f32.mrf.mxu0
  %v3914 = vadd.f32 0.0, %v3913
  %3915 = vmatmul.f32.gmra.mxu0 %v2343
  %v3916 = vpop.f32.mrf.mxu0
  %v3917 = vadd.f32 0.0, %v3916
  %3918 = vmatmul.f32.gmra.mxu0 %v2345
  %v3919 = vpop.f32.mrf.mxu0
  %v3920 = vadd.f32 0.0, %v3919
  %3921 = vmatmul.f32.gmra.mxu0 %v2347
  %v3922 = vpop.f32.mrf.mxu0
  %v3923 = vadd.f32 0.0, %v3922
  %3924 = vmatmul.f32.gmra.mxu0 %v2349
  %v3925 = vpop.f32.mrf.mxu0
  %v3926 = vadd.f32 0.0, %v3925
  %3927 = vmatmul.f32.gmra.mxu0 %v2351
  %v3928 = vpop.f32.mrf.mxu0
  %v3929 = vadd.f32 0.0, %v3928
  %3930 = vmatmul.f32.gmra.mxu0 %v2353
  %v3931 = vpop.f32.mrf.mxu0
  %v3932 = vadd.f32 0.0, %v3931
  %3933 = vmatmul.f32.gmra.mxu0 %v2355
  %v3934 = vpop.f32.mrf.mxu0
  %v3935 = vadd.f32 0.0, %v3934
  %3936 = vmatmul.f32.gmra.mxu0 %v2357
  %v3937 = vpop.f32.mrf.mxu0
  %v3938 = vadd.f32 0.0, %v3937
  %3939 = vmatmul.f32.gmra.mxu0 %v2359
  %v3940 = vpop.f32.mrf.mxu0
  %v3941 = vadd.f32 0.0, %v3940
  %3942 = vmatmul.f32.gmra.mxu0 %v2361
  %v3943 = vpop.f32.mrf.mxu0
  %v3944 = vadd.f32 0.0, %v3943
  %3945 = vmatmul.f32.gmra.mxu0 %v2363
  %v3946 = vpop.f32.mrf.mxu0
  %v3947 = vadd.f32 0.0, %v3946
  %3948 = vmatmul.f32.gmra.mxu0 %v3834
  %v3949 = vpop.f32.mrf.mxu0
  %v3950 = vadd.f32 0.0, %v3949
  %3951 = vmatmul.f32.gmra.mxu0 %v3836
  %v3952 = vpop.f32.mrf.mxu0
  %v3953 = vadd.f32 0.0, %v3952
  %3954 = vmatmul.f32.gmra.mxu0 %v2369
  %v3955 = vpop.f32.mrf.mxu0
  %v3956 = vadd.f32 0.0, %v3955
  %3957 = vmatmul.f32.gmra.mxu0 %v2371
  %v3958 = vpop.f32.mrf.mxu0
  %v3959 = vadd.f32 0.0, %v3958
  %3960 = vmatmul.f32.gmra.mxu0 %v2373
  %v3961 = vpop.f32.mrf.mxu0
  %v3962 = vadd.f32 0.0, %v3961
  %3963 = vmatmul.f32.gmra.mxu0 %v2375
  %v3964 = vpop.f32.mrf.mxu0
  %v3965 = vadd.f32 0.0, %v3964
  %3966 = vmatmul.f32.gmra.mxu0 %v2377
  %v3967 = vpop.f32.mrf.mxu0
  %v3968 = vadd.f32 0.0, %v3967
  %3969 = vmatmul.f32.gmra.mxu0 %v2379
  %v3970 = vpop.f32.mrf.mxu0
  %v3971 = vadd.f32 0.0, %v3970
  %3972 = vmatmul.f32.gmra.mxu0 %v2381
  %v3973 = vpop.f32.mrf.mxu0
  %v3974 = vadd.f32 0.0, %v3973
  %3975 = vmatmul.f32.gmra.mxu0 %v2383
  %v3976 = vpop.f32.mrf.mxu0
  %v3977 = vadd.f32 0.0, %v3976
  %3978 = vmatmul.f32.gmra.mxu0 %v2385
  %v3979 = vpop.f32.mrf.mxu0
  %v3980 = vadd.f32 0.0, %v3979
  %3981 = vmatmul.f32.gmra.mxu0 %v2387
  %v3982 = vpop.f32.mrf.mxu0
  %v3983 = vadd.f32 0.0, %v3982
  %3984 = vmatmul.f32.gmra.mxu0 %v2389
  %v3985 = vpop.f32.mrf.mxu0
  %v3986 = vadd.f32 0.0, %v3985
  %3987 = vmatmul.f32.gmra.mxu0 %v2391
  %v3988 = vpop.f32.mrf.mxu0
  %v3989 = vadd.f32 0.0, %v3988
  %3990 = vmatmul.f32.gmra.mxu0 %v2393
  %v3991 = vpop.f32.mrf.mxu0
  %v3992 = vadd.f32 0.0, %v3991
  %3993 = vmatmul.f32.gmra.mxu0 %v2395
  %v3994 = vpop.f32.mrf.mxu0
  %v3995 = vadd.f32 0.0, %v3994
  %3996 = vmatmul.f32.gmra.mxu0 %v2397
  %v3997 = vpop.f32.mrf.mxu0
  %v3998 = vadd.f32 0.0, %v3997
  %3999 = vmatmul.f32.gmra.mxu0 %v2399
  %v4000 = vpop.f32.mrf.mxu0
  %v4001 = vadd.f32 0.0, %v4000
  %4002 = vmatmul.f32.gmra.mxu0 %v2401
  %v4003 = vpop.f32.mrf.mxu0
  %v4004 = vadd.f32 0.0, %v4003
  %4005 = vmatmul.f32.gmra.mxu0 %v2403
  %v4006 = vpop.f32.mrf.mxu0
  %v4007 = vadd.f32 0.0, %v4006
  %4008 = vmatmul.f32.gmra.mxu0 %v2405
  %v4009 = vpop.f32.mrf.mxu0
  %v4010 = vadd.f32 0.0, %v4009
  %4011 = vmatmul.f32.gmra.mxu0 %v2407
  %v4012 = vpop.f32.mrf.mxu0
  %v4013 = vadd.f32 0.0, %v4012
  %4014 = vmatmul.f32.gmra.mxu0 %v2409
  %v4015 = vpop.f32.mrf.mxu0
  %v4016 = vadd.f32 0.0, %v4015
  %4017 = vmatmul.f32.gmra.mxu0 %v2411
  %v4018 = vpop.f32.mrf.mxu0
  %v4019 = vadd.f32 0.0, %v4018
  %4020 = vmatmul.f32.gmra.mxu0 %v2413
  %v4021 = vpop.f32.mrf.mxu0
  %v4022 = vadd.f32 0.0, %v4021
  %4023 = vmatmul.f32.gmra.mxu0 %v2415
  %v4024 = vpop.f32.mrf.mxu0
  %v4025 = vadd.f32 0.0, %v4024
  %4026 = vmatmul.f32.gmra.mxu0 %v2417
  %v4027 = vpop.f32.mrf.mxu0
  %v4028 = vadd.f32 0.0, %v4027
  %4029 = vmatmul.f32.gmra.mxu0 %v2419
  %v4030 = vpop.f32.mrf.mxu0
  %v4031 = vadd.f32 0.0, %v4030
  %4032 = vmatmul.f32.gmra.mxu0 %v2421
  %v4033 = vpop.f32.mrf.mxu0
  %v4034 = vadd.f32 0.0, %v4033
  %4035 = vmatmul.f32.gmra.mxu0 %v2423
  %v4036 = vpop.f32.mrf.mxu0
  %v4037 = vadd.f32 0.0, %v4036
  %4038 = vmatmul.f32.gmra.mxu0 %v2425
  %v4039 = vpop.f32.mrf.mxu0
  %v4040 = vadd.f32 0.0, %v4039
  %4041 = vmatmul.f32.gmra.mxu0 %v2427
  %v4042 = vpop.f32.mrf.mxu0
  %v4043 = vadd.f32 0.0, %v4042
  %4044 = vmatmul.f32.gmra.mxu0 %v3838
  %v4045 = vpop.f32.mrf.mxu0
  %v4046 = vadd.f32 0.0, %v4045
  %4047 = vmatmul.f32.gmra.mxu0 %v3840
  %v4048 = vpop.f32.mrf.mxu0
  %v4049 = vadd.f32 0.0, %v4048
  %4050 = vdwg.mxu0
  %v4051 = vadd.f32 %v3758, %v3860
  %v4052 = vadd.f32 %v3759, %v3863
  %v4053 = vadd.f32 %v3760, %v3866
  %v4054 = vadd.f32 %v3761, %v3869
  %v4055 = vadd.f32 %v3762, %v3872
  %v4056 = vadd.f32 %v3763, %v3875
  %v4057 = vadd.f32 %v3764, %v3878
  %v4058 = vadd.f32 %v3765, %v3881
  %v4059 = vadd.f32 %v3766, %v3884
  %v4060 = vadd.f32 %v3767, %v3887
  %v4061 = vadd.f32 %v3768, %v3890
  %v4062 = vadd.f32 %v3769, %v3893
  %v4063 = vadd.f32 %v3770, %v3896
  %v4064 = vadd.f32 %v3771, %v3899
  %v4065 = vadd.f32 %v3772, %v3902
  %v4066 = vadd.f32 %v3773, %v3905
  %v4067 = vadd.f32 %v3774, %v3908
  %v4068 = vadd.f32 %v3775, %v3911
  %v4069 = vadd.f32 %v3776, %v3914
  %v4070 = vadd.f32 %v3777, %v3917
  %v4071 = vadd.f32 %v3778, %v3920
  %v4072 = vadd.f32 %v3779, %v3923
  %v4073 = vadd.f32 %v3780, %v3926
  %v4074 = vadd.f32 %v3781, %v3929
  %v4075 = vadd.f32 %v3782, %v3932
  %v4076 = vadd.f32 %v3783, %v3935
  %v4077 = vadd.f32 %v3784, %v3938
  %v4078 = vadd.f32 %v3785, %v3941
  %v4079 = vadd.f32 %v3786, %v3944
  %v4080 = vadd.f32 %v3787, %v3947
  %v4081 = vadd.f32 %v3788, %v3950
  %v4082 = vadd.f32 %v3789, %v3953
  %v4083 = vadd.f32 %v3790, %v3956
  %v4084 = vadd.f32 %v3791, %v3959
  %v4085 = vadd.f32 %v3792, %v3962
  %v4086 = vadd.f32 %v3793, %v3965
  %v4087 = vadd.f32 %v3794, %v3968
  %v4088 = vadd.f32 %v3795, %v3971
  %v4089 = vadd.f32 %v3796, %v3974
  %v4090 = vadd.f32 %v3797, %v3977
  %v4091 = vadd.f32 %v3798, %v3980
  %v4092 = vadd.f32 %v3799, %v3983
  %v4093 = vadd.f32 %v3800, %v3986
  %v4094 = vadd.f32 %v3801, %v3989
  %v4095 = vadd.f32 %v3802, %v3992
  %v4096 = vadd.f32 %v3803, %v3995
  %v4097 = vadd.f32 %v3804, %v3998
  %v4098 = vadd.f32 %v3805, %v4001
  %v4099 = vadd.f32 %v3806, %v4004
  %v4100 = vadd.f32 %v3807, %v4007
  %v4101 = vadd.f32 %v3808, %v4010
  %v4102 = vadd.f32 %v3809, %v4013
  %v4103 = vadd.f32 %v3810, %v4016
  %v4104 = vadd.f32 %v3811, %v4019
  %v4105 = vadd.f32 %v3812, %v4022
  %v4106 = vadd.f32 %v3813, %v4025
  %v4107 = vadd.f32 %v3814, %v4028
  %v4108 = vadd.f32 %v3815, %v4031
  %v4109 = vadd.f32 %v3816, %v4034
  %v4110 = vadd.f32 %v3817, %v4037
  %v4111 = vadd.f32 %v3818, %v4040
  %v4112 = vadd.f32 %v3819, %v4043
  %v4113 = vadd.f32 %v3820, %v4046
  %v4114 = vadd.f32 %v3821, %v4049
  %v4115 = vrot.slane %v1948, 2
  %v4116 = vrot.slane %v1949, 2
  %v4117 = vsel %vm2975, %v4115, %v4116
  %v4118 = vrot.slane %v1950, 2
  %v4119 = vsel %vm2975, %v4116, %v4118
  %v4120 = vrot.slane %v2002, 2
  %v4121 = vrot.slane %v2003, 2
  %v4122 = vsel %vm2975, %v4120, %v4121
  %v4123 = vrot.slane %v2004, 2
  %v4124 = vsel %vm2975, %v4121, %v4123
  %v4125 = vsel %vm1114, %v4117, 0
  %v4127 = vsel %vm1114, %v4119, 0
  %v4129 = vsel %vm1114, %v4122, 0
  %v4131 = vsel %vm1114, %v4124, 0
  %4133 = vmatpush.msra.mxu0 0.0
  %4134 = vmatpush.msra.mxu0 0.0
  %4135 = vmatpush.msra.mxu0 0.0
  %4136 = vmatpush.msra.mxu0 0.0
  %4137 = vmatpush.msra.mxu0 0.0
  %4138 = vmatpush.msra.mxu0 0.0
  %4139 = vmatpush.msra.mxu0 0.0
  %4140 = vmatpush.msra.mxu0 0.0
  %4141 = vmatpush.msra.mxu0 0.0
  %4142 = vmatpush.msra.mxu0 0.0
  %4143 = vmatpush.msra.mxu0 0.0
  %4144 = vmatpush.msra.mxu0 0.0
  %4145 = vmatpush.msra.mxu0 %v2031
  %4146 = vmatpush.msra.mxu0 %v2030
  %4147 = vmatpush.msra.mxu0 %v2029
  %4148 = vmatpush.msra.mxu0 %v2028
  %4149 = vmatmul.f32.gmra.mxu0 %v3140
  %v4150 = vpop.f32.mrf.mxu0
  %v4151 = vadd.f32 0.0, %v4150
  %4152 = vmatmul.f32.gmra.mxu0 %v3142
  %v4153 = vpop.f32.mrf.mxu0
  %v4154 = vadd.f32 0.0, %v4153
  %4155 = vmatmul.f32.gmra.mxu0 %v3144
  %v4156 = vpop.f32.mrf.mxu0
  %v4157 = vadd.f32 0.0, %v4156
  %4158 = vmatmul.f32.gmra.mxu0 %v3146
  %v4159 = vpop.f32.mrf.mxu0
  %v4160 = vadd.f32 0.0, %v4159
  %4161 = vmatmul.f32.gmra.mxu0 %v3148
  %v4162 = vpop.f32.mrf.mxu0
  %v4163 = vadd.f32 0.0, %v4162
  %4164 = vmatmul.f32.gmra.mxu0 %v3150
  %v4165 = vpop.f32.mrf.mxu0
  %v4166 = vadd.f32 0.0, %v4165
  %4167 = vmatmul.f32.gmra.mxu0 %v3152
  %v4168 = vpop.f32.mrf.mxu0
  %v4169 = vadd.f32 0.0, %v4168
  %4170 = vmatmul.f32.gmra.mxu0 %v3154
  %v4171 = vpop.f32.mrf.mxu0
  %v4172 = vadd.f32 0.0, %v4171
  %4173 = vmatmul.f32.gmra.mxu0 %v3156
  %v4174 = vpop.f32.mrf.mxu0
  %v4175 = vadd.f32 0.0, %v4174
  %4176 = vmatmul.f32.gmra.mxu0 %v3158
  %v4177 = vpop.f32.mrf.mxu0
  %v4178 = vadd.f32 0.0, %v4177
  %4179 = vmatmul.f32.gmra.mxu0 %v3160
  %v4180 = vpop.f32.mrf.mxu0
  %v4181 = vadd.f32 0.0, %v4180
  %4182 = vmatmul.f32.gmra.mxu0 %v3162
  %v4183 = vpop.f32.mrf.mxu0
  %v4184 = vadd.f32 0.0, %v4183
  %4185 = vmatmul.f32.gmra.mxu0 %v3164
  %v4186 = vpop.f32.mrf.mxu0
  %v4187 = vadd.f32 0.0, %v4186
  %4188 = vmatmul.f32.gmra.mxu0 %v3166
  %v4189 = vpop.f32.mrf.mxu0
  %v4190 = vadd.f32 0.0, %v4189
  %4191 = vmatmul.f32.gmra.mxu0 %v3168
  %v4192 = vpop.f32.mrf.mxu0
  %v4193 = vadd.f32 0.0, %v4192
  %4194 = vmatmul.f32.gmra.mxu0 %v3170
  %v4195 = vpop.f32.mrf.mxu0
  %v4196 = vadd.f32 0.0, %v4195
  %4197 = vmatmul.f32.gmra.mxu0 %v3172
  %v4198 = vpop.f32.mrf.mxu0
  %v4199 = vadd.f32 0.0, %v4198
  %4200 = vmatmul.f32.gmra.mxu0 %v3174
  %v4201 = vpop.f32.mrf.mxu0
  %v4202 = vadd.f32 0.0, %v4201
  %4203 = vmatmul.f32.gmra.mxu0 %v3176
  %v4204 = vpop.f32.mrf.mxu0
  %v4205 = vadd.f32 0.0, %v4204
  %4206 = vmatmul.f32.gmra.mxu0 %v3178
  %v4207 = vpop.f32.mrf.mxu0
  %v4208 = vadd.f32 0.0, %v4207
  %4209 = vmatmul.f32.gmra.mxu0 %v3180
  %v4210 = vpop.f32.mrf.mxu0
  %v4211 = vadd.f32 0.0, %v4210
  %4212 = vmatmul.f32.gmra.mxu0 %v3182
  %v4213 = vpop.f32.mrf.mxu0
  %v4214 = vadd.f32 0.0, %v4213
  %4215 = vmatmul.f32.gmra.mxu0 %v3184
  %v4216 = vpop.f32.mrf.mxu0
  %v4217 = vadd.f32 0.0, %v4216
  %4218 = vmatmul.f32.gmra.mxu0 %v3186
  %v4219 = vpop.f32.mrf.mxu0
  %v4220 = vadd.f32 0.0, %v4219
  %4221 = vmatmul.f32.gmra.mxu0 %v3188
  %v4222 = vpop.f32.mrf.mxu0
  %v4223 = vadd.f32 0.0, %v4222
  %4224 = vmatmul.f32.gmra.mxu0 %v3190
  %v4225 = vpop.f32.mrf.mxu0
  %v4226 = vadd.f32 0.0, %v4225
  %4227 = vmatmul.f32.gmra.mxu0 %v3192
  %v4228 = vpop.f32.mrf.mxu0
  %v4229 = vadd.f32 0.0, %v4228
  %4230 = vmatmul.f32.gmra.mxu0 %v3194
  %v4231 = vpop.f32.mrf.mxu0
  %v4232 = vadd.f32 0.0, %v4231
  %4233 = vmatmul.f32.gmra.mxu0 %v3196
  %v4234 = vpop.f32.mrf.mxu0
  %v4235 = vadd.f32 0.0, %v4234
  %4236 = vmatmul.f32.gmra.mxu0 %v3198
  %v4237 = vpop.f32.mrf.mxu0
  %v4238 = vadd.f32 0.0, %v4237
  %4239 = vmatmul.f32.gmra.mxu0 %v4125
  %v4240 = vpop.f32.mrf.mxu0
  %v4241 = vadd.f32 0.0, %v4240
  %4242 = vmatmul.f32.gmra.mxu0 %v4127
  %v4243 = vpop.f32.mrf.mxu0
  %v4244 = vadd.f32 0.0, %v4243
  %4245 = vmatmul.f32.gmra.mxu0 %v3204
  %v4246 = vpop.f32.mrf.mxu0
  %v4247 = vadd.f32 0.0, %v4246
  %4248 = vmatmul.f32.gmra.mxu0 %v3206
  %v4249 = vpop.f32.mrf.mxu0
  %v4250 = vadd.f32 0.0, %v4249
  %4251 = vmatmul.f32.gmra.mxu0 %v3208
  %v4252 = vpop.f32.mrf.mxu0
  %v4253 = vadd.f32 0.0, %v4252
  %4254 = vmatmul.f32.gmra.mxu0 %v3210
  %v4255 = vpop.f32.mrf.mxu0
  %v4256 = vadd.f32 0.0, %v4255
  %4257 = vmatmul.f32.gmra.mxu0 %v3212
  %v4258 = vpop.f32.mrf.mxu0
  %v4259 = vadd.f32 0.0, %v4258
  %4260 = vmatmul.f32.gmra.mxu0 %v3214
  %v4261 = vpop.f32.mrf.mxu0
  %v4262 = vadd.f32 0.0, %v4261
  %4263 = vmatmul.f32.gmra.mxu0 %v3216
  %v4264 = vpop.f32.mrf.mxu0
  %v4265 = vadd.f32 0.0, %v4264
  %4266 = vmatmul.f32.gmra.mxu0 %v3218
  %v4267 = vpop.f32.mrf.mxu0
  %v4268 = vadd.f32 0.0, %v4267
  %4269 = vmatmul.f32.gmra.mxu0 %v3220
  %v4270 = vpop.f32.mrf.mxu0
  %v4271 = vadd.f32 0.0, %v4270
  %4272 = vmatmul.f32.gmra.mxu0 %v3222
  %v4273 = vpop.f32.mrf.mxu0
  %v4274 = vadd.f32 0.0, %v4273
  %4275 = vmatmul.f32.gmra.mxu0 %v3224
  %v4276 = vpop.f32.mrf.mxu0
  %v4277 = vadd.f32 0.0, %v4276
  %4278 = vmatmul.f32.gmra.mxu0 %v3226
  %v4279 = vpop.f32.mrf.mxu0
  %v4280 = vadd.f32 0.0, %v4279
  %4281 = vmatmul.f32.gmra.mxu0 %v3228
  %v4282 = vpop.f32.mrf.mxu0
  %v4283 = vadd.f32 0.0, %v4282
  %4284 = vmatmul.f32.gmra.mxu0 %v3230
  %v4285 = vpop.f32.mrf.mxu0
  %v4286 = vadd.f32 0.0, %v4285
  %4287 = vmatmul.f32.gmra.mxu0 %v3232
  %v4288 = vpop.f32.mrf.mxu0
  %v4289 = vadd.f32 0.0, %v4288
  %4290 = vmatmul.f32.gmra.mxu0 %v3234
  %v4291 = vpop.f32.mrf.mxu0
  %v4292 = vadd.f32 0.0, %v4291
  %4293 = vmatmul.f32.gmra.mxu0 %v3236
  %v4294 = vpop.f32.mrf.mxu0
  %v4295 = vadd.f32 0.0, %v4294
  %4296 = vmatmul.f32.gmra.mxu0 %v3238
  %v4297 = vpop.f32.mrf.mxu0
  %v4298 = vadd.f32 0.0, %v4297
  %4299 = vmatmul.f32.gmra.mxu0 %v3240
  %v4300 = vpop.f32.mrf.mxu0
  %v4301 = vadd.f32 0.0, %v4300
  %4302 = vmatmul.f32.gmra.mxu0 %v3242
  %v4303 = vpop.f32.mrf.mxu0
  %v4304 = vadd.f32 0.0, %v4303
  %4305 = vmatmul.f32.gmra.mxu0 %v3244
  %v4306 = vpop.f32.mrf.mxu0
  %v4307 = vadd.f32 0.0, %v4306
  %4308 = vmatmul.f32.gmra.mxu0 %v3246
  %v4309 = vpop.f32.mrf.mxu0
  %v4310 = vadd.f32 0.0, %v4309
  %4311 = vmatmul.f32.gmra.mxu0 %v3248
  %v4312 = vpop.f32.mrf.mxu0
  %v4313 = vadd.f32 0.0, %v4312
  %4314 = vmatmul.f32.gmra.mxu0 %v3250
  %v4315 = vpop.f32.mrf.mxu0
  %v4316 = vadd.f32 0.0, %v4315
  %4317 = vmatmul.f32.gmra.mxu0 %v3252
  %v4318 = vpop.f32.mrf.mxu0
  %v4319 = vadd.f32 0.0, %v4318
  %4320 = vmatmul.f32.gmra.mxu0 %v3254
  %v4321 = vpop.f32.mrf.mxu0
  %v4322 = vadd.f32 0.0, %v4321
  %4323 = vmatmul.f32.gmra.mxu0 %v3256
  %v4324 = vpop.f32.mrf.mxu0
  %v4325 = vadd.f32 0.0, %v4324
  %4326 = vmatmul.f32.gmra.mxu0 %v3258
  %v4327 = vpop.f32.mrf.mxu0
  %v4328 = vadd.f32 0.0, %v4327
  %4329 = vmatmul.f32.gmra.mxu0 %v3260
  %v4330 = vpop.f32.mrf.mxu0
  %v4331 = vadd.f32 0.0, %v4330
  %4332 = vmatmul.f32.gmra.mxu0 %v3262
  %v4333 = vpop.f32.mrf.mxu0
  %v4334 = vadd.f32 0.0, %v4333
  %4335 = vmatmul.f32.gmra.mxu0 %v4129
  %v4336 = vpop.f32.mrf.mxu0
  %v4337 = vadd.f32 0.0, %v4336
  %4338 = vmatmul.f32.gmra.mxu0 %v4131
  %v4339 = vpop.f32.mrf.mxu0
  %v4340 = vadd.f32 0.0, %v4339
  %4341 = vdwg.mxu0
  %v4342 = vadd.f32 %v4051, %v4151
  %v4343 = vadd.f32 %v4052, %v4154
  %v4344 = vadd.f32 %v4053, %v4157
  %v4345 = vadd.f32 %v4054, %v4160
  %v4346 = vadd.f32 %v4055, %v4163
  %v4347 = vadd.f32 %v4056, %v4166
  %v4348 = vadd.f32 %v4057, %v4169
  %v4349 = vadd.f32 %v4058, %v4172
  %v4350 = vadd.f32 %v4059, %v4175
  %v4351 = vadd.f32 %v4060, %v4178
  %v4352 = vadd.f32 %v4061, %v4181
  %v4353 = vadd.f32 %v4062, %v4184
  %v4354 = vadd.f32 %v4063, %v4187
  %v4355 = vadd.f32 %v4064, %v4190
  %v4356 = vadd.f32 %v4065, %v4193
  %v4357 = vadd.f32 %v4066, %v4196
  %v4358 = vadd.f32 %v4067, %v4199
  %v4359 = vadd.f32 %v4068, %v4202
  %v4360 = vadd.f32 %v4069, %v4205
  %v4361 = vadd.f32 %v4070, %v4208
  %v4362 = vadd.f32 %v4071, %v4211
  %v4363 = vadd.f32 %v4072, %v4214
  %v4364 = vadd.f32 %v4073, %v4217
  %v4365 = vadd.f32 %v4074, %v4220
  %v4366 = vadd.f32 %v4075, %v4223
  %v4367 = vadd.f32 %v4076, %v4226
  %v4368 = vadd.f32 %v4077, %v4229
  %v4369 = vadd.f32 %v4078, %v4232
  %v4370 = vadd.f32 %v4079, %v4235
  %v4371 = vadd.f32 %v4080, %v4238
  %v4372 = vadd.f32 %v4081, %v4241
  %v4373 = vadd.f32 %v4082, %v4244
  %v4374 = vadd.f32 %v4083, %v4247
  %v4375 = vadd.f32 %v4084, %v4250
  %v4376 = vadd.f32 %v4085, %v4253
  %v4377 = vadd.f32 %v4086, %v4256
  %v4378 = vadd.f32 %v4087, %v4259
  %v4379 = vadd.f32 %v4088, %v4262
  %v4380 = vadd.f32 %v4089, %v4265
  %v4381 = vadd.f32 %v4090, %v4268
  %v4382 = vadd.f32 %v4091, %v4271
  %v4383 = vadd.f32 %v4092, %v4274
  %v4384 = vadd.f32 %v4093, %v4277
  %v4385 = vadd.f32 %v4094, %v4280
  %v4386 = vadd.f32 %v4095, %v4283
  %v4387 = vadd.f32 %v4096, %v4286
  %v4388 = vadd.f32 %v4097, %v4289
  %v4389 = vadd.f32 %v4098, %v4292
  %v4390 = vadd.f32 %v4099, %v4295
  %v4391 = vadd.f32 %v4100, %v4298
  %v4392 = vadd.f32 %v4101, %v4301
  %v4393 = vadd.f32 %v4102, %v4304
  %v4394 = vadd.f32 %v4103, %v4307
  %v4395 = vadd.f32 %v4104, %v4310
  %v4396 = vadd.f32 %v4105, %v4313
  %v4397 = vadd.f32 %v4106, %v4316
  %v4398 = vadd.f32 %v4107, %v4319
  %v4399 = vadd.f32 %v4108, %v4322
  %v4400 = vadd.f32 %v4109, %v4325
  %v4401 = vadd.f32 %v4110, %v4328
  %v4402 = vadd.f32 %v4111, %v4331
  %v4403 = vadd.f32 %v4112, %v4334
  %v4404 = vadd.f32 %v4113, %v4337
  %v4405 = vadd.f32 %v4114, %v4340
  %v4407 = vsel %vm1114, %v1951, 0
  %v4410 = vsel %vm1114, %v1952, 0
  %v4413 = vsel %vm1114, %v2005, 0
  %v4416 = vsel %vm1114, %v2006, 0
  %4418 = vmatpush.msra.mxu0 0.0
  %4419 = vmatpush.msra.mxu0 0.0
  %4420 = vmatpush.msra.mxu0 0.0
  %4421 = vmatpush.msra.mxu0 0.0
  %4422 = vmatpush.msra.mxu0 0.0
  %4423 = vmatpush.msra.mxu0 0.0
  %4424 = vmatpush.msra.mxu0 0.0
  %4425 = vmatpush.msra.mxu0 0.0
  %4426 = vmatpush.msra.mxu0 0.0
  %4427 = vmatpush.msra.mxu0 0.0
  %4428 = vmatpush.msra.mxu0 0.0
  %4429 = vmatpush.msra.mxu0 0.0
  %4430 = vmatpush.msra.mxu0 %v2035
  %4431 = vmatpush.msra.mxu0 %v2034
  %4432 = vmatpush.msra.mxu0 %v2033
  %4433 = vmatpush.msra.mxu0 %v2032
  %4434 = vmatmul.f32.gmra.mxu0 %v2646
  %v4435 = vpop.f32.mrf.mxu0
  %v4436 = vadd.f32 0.0, %v4435
  %4437 = vmatmul.f32.gmra.mxu0 %v2648
  %v4438 = vpop.f32.mrf.mxu0
  %v4439 = vadd.f32 0.0, %v4438
  %4440 = vmatmul.f32.gmra.mxu0 %v2650
  %v4441 = vpop.f32.mrf.mxu0
  %v4442 = vadd.f32 0.0, %v4441
  %4443 = vmatmul.f32.gmra.mxu0 %v2652
  %v4444 = vpop.f32.mrf.mxu0
  %v4445 = vadd.f32 0.0, %v4444
  %4446 = vmatmul.f32.gmra.mxu0 %v2654
  %v4447 = vpop.f32.mrf.mxu0
  %v4448 = vadd.f32 0.0, %v4447
  %4449 = vmatmul.f32.gmra.mxu0 %v2656
  %v4450 = vpop.f32.mrf.mxu0
  %v4451 = vadd.f32 0.0, %v4450
  %4452 = vmatmul.f32.gmra.mxu0 %v2658
  %v4453 = vpop.f32.mrf.mxu0
  %v4454 = vadd.f32 0.0, %v4453
  %4455 = vmatmul.f32.gmra.mxu0 %v2660
  %v4456 = vpop.f32.mrf.mxu0
  %v4457 = vadd.f32 0.0, %v4456
  %4458 = vmatmul.f32.gmra.mxu0 %v2662
  %v4459 = vpop.f32.mrf.mxu0
  %v4460 = vadd.f32 0.0, %v4459
  %4461 = vmatmul.f32.gmra.mxu0 %v2664
  %v4462 = vpop.f32.mrf.mxu0
  %v4463 = vadd.f32 0.0, %v4462
  %4464 = vmatmul.f32.gmra.mxu0 %v2666
  %v4465 = vpop.f32.mrf.mxu0
  %v4466 = vadd.f32 0.0, %v4465
  %4467 = vmatmul.f32.gmra.mxu0 %v2668
  %v4468 = vpop.f32.mrf.mxu0
  %v4469 = vadd.f32 0.0, %v4468
  %4470 = vmatmul.f32.gmra.mxu0 %v2670
  %v4471 = vpop.f32.mrf.mxu0
  %v4472 = vadd.f32 0.0, %v4471
  %4473 = vmatmul.f32.gmra.mxu0 %v2672
  %v4474 = vpop.f32.mrf.mxu0
  %v4475 = vadd.f32 0.0, %v4474
  %4476 = vmatmul.f32.gmra.mxu0 %v2674
  %v4477 = vpop.f32.mrf.mxu0
  %v4478 = vadd.f32 0.0, %v4477
  %4479 = vmatmul.f32.gmra.mxu0 %v2676
  %v4480 = vpop.f32.mrf.mxu0
  %v4481 = vadd.f32 0.0, %v4480
  %4482 = vmatmul.f32.gmra.mxu0 %v2678
  %v4483 = vpop.f32.mrf.mxu0
  %v4484 = vadd.f32 0.0, %v4483
  %4485 = vmatmul.f32.gmra.mxu0 %v2680
  %v4486 = vpop.f32.mrf.mxu0
  %v4487 = vadd.f32 0.0, %v4486
  %4488 = vmatmul.f32.gmra.mxu0 %v2682
  %v4489 = vpop.f32.mrf.mxu0
  %v4490 = vadd.f32 0.0, %v4489
  %4491 = vmatmul.f32.gmra.mxu0 %v2684
  %v4492 = vpop.f32.mrf.mxu0
  %v4493 = vadd.f32 0.0, %v4492
  %4494 = vmatmul.f32.gmra.mxu0 %v2686
  %v4495 = vpop.f32.mrf.mxu0
  %v4496 = vadd.f32 0.0, %v4495
  %4497 = vmatmul.f32.gmra.mxu0 %v2688
  %v4498 = vpop.f32.mrf.mxu0
  %v4499 = vadd.f32 0.0, %v4498
  %4500 = vmatmul.f32.gmra.mxu0 %v2690
  %v4501 = vpop.f32.mrf.mxu0
  %v4502 = vadd.f32 0.0, %v4501
  %4503 = vmatmul.f32.gmra.mxu0 %v2692
  %v4504 = vpop.f32.mrf.mxu0
  %v4505 = vadd.f32 0.0, %v4504
  %4506 = vmatmul.f32.gmra.mxu0 %v2694
  %v4507 = vpop.f32.mrf.mxu0
  %v4508 = vadd.f32 0.0, %v4507
  %4509 = vmatmul.f32.gmra.mxu0 %v2696
  %v4510 = vpop.f32.mrf.mxu0
  %v4511 = vadd.f32 0.0, %v4510
  %4512 = vmatmul.f32.gmra.mxu0 %v2698
  %v4513 = vpop.f32.mrf.mxu0
  %v4514 = vadd.f32 0.0, %v4513
  %4515 = vmatmul.f32.gmra.mxu0 %v2700
  %v4516 = vpop.f32.mrf.mxu0
  %v4517 = vadd.f32 0.0, %v4516
  %4518 = vmatmul.f32.gmra.mxu0 %v3538
  %v4519 = vpop.f32.mrf.mxu0
  %v4520 = vadd.f32 0.0, %v4519
  %4521 = vmatmul.f32.gmra.mxu0 %v3541
  %v4522 = vpop.f32.mrf.mxu0
  %v4523 = vadd.f32 0.0, %v4522
  %4524 = vmatmul.f32.gmra.mxu0 %v4407
  %v4525 = vpop.f32.mrf.mxu0
  %v4526 = vadd.f32 0.0, %v4525
  %4527 = vmatmul.f32.gmra.mxu0 %v4410
  %v4528 = vpop.f32.mrf.mxu0
  %v4529 = vadd.f32 0.0, %v4528
  %4530 = vmatmul.f32.gmra.mxu0 %v2710
  %v4531 = vpop.f32.mrf.mxu0
  %v4532 = vadd.f32 0.0, %v4531
  %4533 = vmatmul.f32.gmra.mxu0 %v2712
  %v4534 = vpop.f32.mrf.mxu0
  %v4535 = vadd.f32 0.0, %v4534
  %4536 = vmatmul.f32.gmra.mxu0 %v2714
  %v4537 = vpop.f32.mrf.mxu0
  %v4538 = vadd.f32 0.0, %v4537
  %4539 = vmatmul.f32.gmra.mxu0 %v2716
  %v4540 = vpop.f32.mrf.mxu0
  %v4541 = vadd.f32 0.0, %v4540
  %4542 = vmatmul.f32.gmra.mxu0 %v2718
  %v4543 = vpop.f32.mrf.mxu0
  %v4544 = vadd.f32 0.0, %v4543
  %4545 = vmatmul.f32.gmra.mxu0 %v2720
  %v4546 = vpop.f32.mrf.mxu0
  %v4547 = vadd.f32 0.0, %v4546
  %4548 = vmatmul.f32.gmra.mxu0 %v2722
  %v4549 = vpop.f32.mrf.mxu0
  %v4550 = vadd.f32 0.0, %v4549
  %4551 = vmatmul.f32.gmra.mxu0 %v2724
  %v4552 = vpop.f32.mrf.mxu0
  %v4553 = vadd.f32 0.0, %v4552
  %4554 = vmatmul.f32.gmra.mxu0 %v2726
  %v4555 = vpop.f32.mrf.mxu0
  %v4556 = vadd.f32 0.0, %v4555
  %4557 = vmatmul.f32.gmra.mxu0 %v2728
  %v4558 = vpop.f32.mrf.mxu0
  %v4559 = vadd.f32 0.0, %v4558
  %4560 = vmatmul.f32.gmra.mxu0 %v2730
  %v4561 = vpop.f32.mrf.mxu0
  %v4562 = vadd.f32 0.0, %v4561
  %4563 = vmatmul.f32.gmra.mxu0 %v2732
  %v4564 = vpop.f32.mrf.mxu0
  %v4565 = vadd.f32 0.0, %v4564
  %4566 = vmatmul.f32.gmra.mxu0 %v2734
  %v4567 = vpop.f32.mrf.mxu0
  %v4568 = vadd.f32 0.0, %v4567
  %4569 = vmatmul.f32.gmra.mxu0 %v2736
  %v4570 = vpop.f32.mrf.mxu0
  %v4571 = vadd.f32 0.0, %v4570
  %4572 = vmatmul.f32.gmra.mxu0 %v2738
  %v4573 = vpop.f32.mrf.mxu0
  %v4574 = vadd.f32 0.0, %v4573
  %4575 = vmatmul.f32.gmra.mxu0 %v2740
  %v4576 = vpop.f32.mrf.mxu0
  %v4577 = vadd.f32 0.0, %v4576
  %4578 = vmatmul.f32.gmra.mxu0 %v2742
  %v4579 = vpop.f32.mrf.mxu0
  %v4580 = vadd.f32 0.0, %v4579
  %4581 = vmatmul.f32.gmra.mxu0 %v2744
  %v4582 = vpop.f32.mrf.mxu0
  %v4583 = vadd.f32 0.0, %v4582
  %4584 = vmatmul.f32.gmra.mxu0 %v2746
  %v4585 = vpop.f32.mrf.mxu0
  %v4586 = vadd.f32 0.0, %v4585
  %4587 = vmatmul.f32.gmra.mxu0 %v2748
  %v4588 = vpop.f32.mrf.mxu0
  %v4589 = vadd.f32 0.0, %v4588
  %4590 = vmatmul.f32.gmra.mxu0 %v2750
  %v4591 = vpop.f32.mrf.mxu0
  %v4592 = vadd.f32 0.0, %v4591
  %4593 = vmatmul.f32.gmra.mxu0 %v2752
  %v4594 = vpop.f32.mrf.mxu0
  %v4595 = vadd.f32 0.0, %v4594
  %4596 = vmatmul.f32.gmra.mxu0 %v2754
  %v4597 = vpop.f32.mrf.mxu0
  %v4598 = vadd.f32 0.0, %v4597
  %4599 = vmatmul.f32.gmra.mxu0 %v2756
  %v4600 = vpop.f32.mrf.mxu0
  %v4601 = vadd.f32 0.0, %v4600
  %4602 = vmatmul.f32.gmra.mxu0 %v2758
  %v4603 = vpop.f32.mrf.mxu0
  %v4604 = vadd.f32 0.0, %v4603
  %4605 = vmatmul.f32.gmra.mxu0 %v2760
  %v4606 = vpop.f32.mrf.mxu0
  %v4607 = vadd.f32 0.0, %v4606
  %4608 = vmatmul.f32.gmra.mxu0 %v2762
  %v4609 = vpop.f32.mrf.mxu0
  %v4610 = vadd.f32 0.0, %v4609
  %4611 = vmatmul.f32.gmra.mxu0 %v2764
  %v4612 = vpop.f32.mrf.mxu0
  %v4613 = vadd.f32 0.0, %v4612
  %4614 = vmatmul.f32.gmra.mxu0 %v3544
  %v4615 = vpop.f32.mrf.mxu0
  %v4616 = vadd.f32 0.0, %v4615
  %4617 = vmatmul.f32.gmra.mxu0 %v3547
  %v4618 = vpop.f32.mrf.mxu0
  %v4619 = vadd.f32 0.0, %v4618
  %4620 = vmatmul.f32.gmra.mxu0 %v4413
  %v4621 = vpop.f32.mrf.mxu0
  %v4622 = vadd.f32 0.0, %v4621
  %4623 = vmatmul.f32.gmra.mxu0 %v4416
  %v4624 = vpop.f32.mrf.mxu0
  %v4625 = vadd.f32 0.0, %v4624
  %4626 = vdwg.mxu0
  %v4627 = vadd.f32 %v4342, %v4436
  %v4628 = vadd.f32 %v4343, %v4439
  %v4629 = vadd.f32 %v4344, %v4442
  %v4630 = vadd.f32 %v4345, %v4445
  %v4631 = vadd.f32 %v4346, %v4448
  %v4632 = vadd.f32 %v4347, %v4451
  %v4633 = vadd.f32 %v4348, %v4454
  %v4634 = vadd.f32 %v4349, %v4457
  %v4635 = vadd.f32 %v4350, %v4460
  %v4636 = vadd.f32 %v4351, %v4463
  %v4637 = vadd.f32 %v4352, %v4466
  %v4638 = vadd.f32 %v4353, %v4469
  %v4639 = vadd.f32 %v4354, %v4472
  %v4640 = vadd.f32 %v4355, %v4475
  %v4641 = vadd.f32 %v4356, %v4478
  %v4642 = vadd.f32 %v4357, %v4481
  %v4643 = vadd.f32 %v4358, %v4484
  %v4644 = vadd.f32 %v4359, %v4487
  %v4645 = vadd.f32 %v4360, %v4490
  %v4646 = vadd.f32 %v4361, %v4493
  %v4647 = vadd.f32 %v4362, %v4496
  %v4648 = vadd.f32 %v4363, %v4499
  %v4649 = vadd.f32 %v4364, %v4502
  %v4650 = vadd.f32 %v4365, %v4505
  %v4651 = vadd.f32 %v4366, %v4508
  %v4652 = vadd.f32 %v4367, %v4511
  %v4653 = vadd.f32 %v4368, %v4514
  %v4654 = vadd.f32 %v4369, %v4517
  %v4655 = vadd.f32 %v4370, %v4520
  %v4656 = vadd.f32 %v4371, %v4523
  %v4657 = vadd.f32 %v4372, %v4526
  %v4658 = vadd.f32 %v4373, %v4529
  %v4659 = vadd.f32 %v4374, %v4532
  %v4660 = vadd.f32 %v4375, %v4535
  %v4661 = vadd.f32 %v4376, %v4538
  %v4662 = vadd.f32 %v4377, %v4541
  %v4663 = vadd.f32 %v4378, %v4544
  %v4664 = vadd.f32 %v4379, %v4547
  %v4665 = vadd.f32 %v4380, %v4550
  %v4666 = vadd.f32 %v4381, %v4553
  %v4667 = vadd.f32 %v4382, %v4556
  %v4668 = vadd.f32 %v4383, %v4559
  %v4669 = vadd.f32 %v4384, %v4562
  %v4670 = vadd.f32 %v4385, %v4565
  %v4671 = vadd.f32 %v4386, %v4568
  %v4672 = vadd.f32 %v4387, %v4571
  %v4673 = vadd.f32 %v4388, %v4574
  %v4674 = vadd.f32 %v4389, %v4577
  %v4675 = vadd.f32 %v4390, %v4580
  %v4676 = vadd.f32 %v4391, %v4583
  %v4677 = vadd.f32 %v4392, %v4586
  %v4678 = vadd.f32 %v4393, %v4589
  %v4679 = vadd.f32 %v4394, %v4592
  %v4680 = vadd.f32 %v4395, %v4595
  %v4681 = vadd.f32 %v4396, %v4598
  %v4682 = vadd.f32 %v4397, %v4601
  %v4683 = vadd.f32 %v4398, %v4604
  %v4684 = vadd.f32 %v4399, %v4607
  %v4685 = vadd.f32 %v4400, %v4610
  %v4686 = vadd.f32 %v4401, %v4613
  %v4687 = vadd.f32 %v4402, %v4616
  %v4688 = vadd.f32 %v4403, %v4619
  %v4689 = vadd.f32 %v4404, %v4622
  %v4690 = vadd.f32 %v4405, %v4625
  %v4693 = vrot.slane %v1951, 1
  %v4694 = vrot.slane %v1952, 1
  %v4695 = vsel %vm2140, %v4693, %v4694
  %v4696 = vrot.slane %v1953, 1
  %v4697 = vsel %vm2140, %v4694, %v4696
  %v4698 = vrot.slane %v2005, 1
  %v4699 = vrot.slane %v2006, 1
  %v4700 = vsel %vm2140, %v4698, %v4699
  %v4701 = vrot.slane %v2007, 1
  %v4702 = vsel %vm2140, %v4699, %v4701
  %v4703 = vsel %vm1114, %v4695, 0
  %v4705 = vsel %vm1114, %v4697, 0
  %v4707 = vsel %vm1114, %v4700, 0
  %v4709 = vsel %vm1114, %v4702, 0
  %4711 = vmatpush.msra.mxu0 0.0
  %4712 = vmatpush.msra.mxu0 0.0
  %4713 = vmatpush.msra.mxu0 0.0
  %4714 = vmatpush.msra.mxu0 0.0
  %4715 = vmatpush.msra.mxu0 0.0
  %4716 = vmatpush.msra.mxu0 0.0
  %4717 = vmatpush.msra.mxu0 0.0
  %4718 = vmatpush.msra.mxu0 0.0
  %4719 = vmatpush.msra.mxu0 0.0
  %4720 = vmatpush.msra.mxu0 0.0
  %4721 = vmatpush.msra.mxu0 0.0
  %4722 = vmatpush.msra.mxu0 0.0
  %4723 = vmatpush.msra.mxu0 %v2039
  %4724 = vmatpush.msra.mxu0 %v2038
  %4725 = vmatpush.msra.mxu0 %v2037
  %4726 = vmatpush.msra.mxu0 %v2036
  %4727 = vmatmul.f32.gmra.mxu0 %v2309
  %v4728 = vpop.f32.mrf.mxu0
  %v4729 = vadd.f32 0.0, %v4728
  %4730 = vmatmul.f32.gmra.mxu0 %v2311
  %v4731 = vpop.f32.mrf.mxu0
  %v4732 = vadd.f32 0.0, %v4731
  %4733 = vmatmul.f32.gmra.mxu0 %v2313
  %v4734 = vpop.f32.mrf.mxu0
  %v4735 = vadd.f32 0.0, %v4734
  %4736 = vmatmul.f32.gmra.mxu0 %v2315
  %v4737 = vpop.f32.mrf.mxu0
  %v4738 = vadd.f32 0.0, %v4737
  %4739 = vmatmul.f32.gmra.mxu0 %v2317
  %v4740 = vpop.f32.mrf.mxu0
  %v4741 = vadd.f32 0.0, %v4740
  %4742 = vmatmul.f32.gmra.mxu0 %v2319
  %v4743 = vpop.f32.mrf.mxu0
  %v4744 = vadd.f32 0.0, %v4743
  %4745 = vmatmul.f32.gmra.mxu0 %v2321
  %v4746 = vpop.f32.mrf.mxu0
  %v4747 = vadd.f32 0.0, %v4746
  %4748 = vmatmul.f32.gmra.mxu0 %v2323
  %v4749 = vpop.f32.mrf.mxu0
  %v4750 = vadd.f32 0.0, %v4749
  %4751 = vmatmul.f32.gmra.mxu0 %v2325
  %v4752 = vpop.f32.mrf.mxu0
  %v4753 = vadd.f32 0.0, %v4752
  %4754 = vmatmul.f32.gmra.mxu0 %v2327
  %v4755 = vpop.f32.mrf.mxu0
  %v4756 = vadd.f32 0.0, %v4755
  %4757 = vmatmul.f32.gmra.mxu0 %v2329
  %v4758 = vpop.f32.mrf.mxu0
  %v4759 = vadd.f32 0.0, %v4758
  %4760 = vmatmul.f32.gmra.mxu0 %v2331
  %v4761 = vpop.f32.mrf.mxu0
  %v4762 = vadd.f32 0.0, %v4761
  %4763 = vmatmul.f32.gmra.mxu0 %v2333
  %v4764 = vpop.f32.mrf.mxu0
  %v4765 = vadd.f32 0.0, %v4764
  %4766 = vmatmul.f32.gmra.mxu0 %v2335
  %v4767 = vpop.f32.mrf.mxu0
  %v4768 = vadd.f32 0.0, %v4767
  %4769 = vmatmul.f32.gmra.mxu0 %v2337
  %v4770 = vpop.f32.mrf.mxu0
  %v4771 = vadd.f32 0.0, %v4770
  %4772 = vmatmul.f32.gmra.mxu0 %v2339
  %v4773 = vpop.f32.mrf.mxu0
  %v4774 = vadd.f32 0.0, %v4773
  %4775 = vmatmul.f32.gmra.mxu0 %v2341
  %v4776 = vpop.f32.mrf.mxu0
  %v4777 = vadd.f32 0.0, %v4776
  %4778 = vmatmul.f32.gmra.mxu0 %v2343
  %v4779 = vpop.f32.mrf.mxu0
  %v4780 = vadd.f32 0.0, %v4779
  %4781 = vmatmul.f32.gmra.mxu0 %v2345
  %v4782 = vpop.f32.mrf.mxu0
  %v4783 = vadd.f32 0.0, %v4782
  %4784 = vmatmul.f32.gmra.mxu0 %v2347
  %v4785 = vpop.f32.mrf.mxu0
  %v4786 = vadd.f32 0.0, %v4785
  %4787 = vmatmul.f32.gmra.mxu0 %v2349
  %v4788 = vpop.f32.mrf.mxu0
  %v4789 = vadd.f32 0.0, %v4788
  %4790 = vmatmul.f32.gmra.mxu0 %v2351
  %v4791 = vpop.f32.mrf.mxu0
  %v4792 = vadd.f32 0.0, %v4791
  %4793 = vmatmul.f32.gmra.mxu0 %v2353
  %v4794 = vpop.f32.mrf.mxu0
  %v4795 = vadd.f32 0.0, %v4794
  %4796 = vmatmul.f32.gmra.mxu0 %v2355
  %v4797 = vpop.f32.mrf.mxu0
  %v4798 = vadd.f32 0.0, %v4797
  %4799 = vmatmul.f32.gmra.mxu0 %v2357
  %v4800 = vpop.f32.mrf.mxu0
  %v4801 = vadd.f32 0.0, %v4800
  %4802 = vmatmul.f32.gmra.mxu0 %v2359
  %v4803 = vpop.f32.mrf.mxu0
  %v4804 = vadd.f32 0.0, %v4803
  %4805 = vmatmul.f32.gmra.mxu0 %v2361
  %v4806 = vpop.f32.mrf.mxu0
  %v4807 = vadd.f32 0.0, %v4806
  %4808 = vmatmul.f32.gmra.mxu0 %v2363
  %v4809 = vpop.f32.mrf.mxu0
  %v4810 = vadd.f32 0.0, %v4809
  %4811 = vmatmul.f32.gmra.mxu0 %v3834
  %v4812 = vpop.f32.mrf.mxu0
  %v4813 = vadd.f32 0.0, %v4812
  %4814 = vmatmul.f32.gmra.mxu0 %v3836
  %v4815 = vpop.f32.mrf.mxu0
  %v4816 = vadd.f32 0.0, %v4815
  %4817 = vmatmul.f32.gmra.mxu0 %v4703
  %v4818 = vpop.f32.mrf.mxu0
  %v4819 = vadd.f32 0.0, %v4818
  %4820 = vmatmul.f32.gmra.mxu0 %v4705
  %v4821 = vpop.f32.mrf.mxu0
  %v4822 = vadd.f32 0.0, %v4821
  %4823 = vmatmul.f32.gmra.mxu0 %v2373
  %v4824 = vpop.f32.mrf.mxu0
  %v4825 = vadd.f32 0.0, %v4824
  %4826 = vmatmul.f32.gmra.mxu0 %v2375
  %v4827 = vpop.f32.mrf.mxu0
  %v4828 = vadd.f32 0.0, %v4827
  %4829 = vmatmul.f32.gmra.mxu0 %v2377
  %v4830 = vpop.f32.mrf.mxu0
  %v4831 = vadd.f32 0.0, %v4830
  %4832 = vmatmul.f32.gmra.mxu0 %v2379
  %v4833 = vpop.f32.mrf.mxu0
  %v4834 = vadd.f32 0.0, %v4833
  %4835 = vmatmul.f32.gmra.mxu0 %v2381
  %v4836 = vpop.f32.mrf.mxu0
  %v4837 = vadd.f32 0.0, %v4836
  %4838 = vmatmul.f32.gmra.mxu0 %v2383
  %v4839 = vpop.f32.mrf.mxu0
  %v4840 = vadd.f32 0.0, %v4839
  %4841 = vmatmul.f32.gmra.mxu0 %v2385
  %v4842 = vpop.f32.mrf.mxu0
  %v4843 = vadd.f32 0.0, %v4842
  %4844 = vmatmul.f32.gmra.mxu0 %v2387
  %v4845 = vpop.f32.mrf.mxu0
  %v4846 = vadd.f32 0.0, %v4845
  %4847 = vmatmul.f32.gmra.mxu0 %v2389
  %v4848 = vpop.f32.mrf.mxu0
  %v4849 = vadd.f32 0.0, %v4848
  %4850 = vmatmul.f32.gmra.mxu0 %v2391
  %v4851 = vpop.f32.mrf.mxu0
  %v4852 = vadd.f32 0.0, %v4851
  %4853 = vmatmul.f32.gmra.mxu0 %v2393
  %v4854 = vpop.f32.mrf.mxu0
  %v4855 = vadd.f32 0.0, %v4854
  %4856 = vmatmul.f32.gmra.mxu0 %v2395
  %v4857 = vpop.f32.mrf.mxu0
  %v4858 = vadd.f32 0.0, %v4857
  %4859 = vmatmul.f32.gmra.mxu0 %v2397
  %v4860 = vpop.f32.mrf.mxu0
  %v4861 = vadd.f32 0.0, %v4860
  %4862 = vmatmul.f32.gmra.mxu0 %v2399
  %v4863 = vpop.f32.mrf.mxu0
  %v4864 = vadd.f32 0.0, %v4863
  %4865 = vmatmul.f32.gmra.mxu0 %v2401
  %v4866 = vpop.f32.mrf.mxu0
  %v4867 = vadd.f32 0.0, %v4866
  %4868 = vmatmul.f32.gmra.mxu0 %v2403
  %v4869 = vpop.f32.mrf.mxu0
  %v4870 = vadd.f32 0.0, %v4869
  %4871 = vmatmul.f32.gmra.mxu0 %v2405
  %v4872 = vpop.f32.mrf.mxu0
  %v4873 = vadd.f32 0.0, %v4872
  %4874 = vmatmul.f32.gmra.mxu0 %v2407
  %v4875 = vpop.f32.mrf.mxu0
  %v4876 = vadd.f32 0.0, %v4875
  %4877 = vmatmul.f32.gmra.mxu0 %v2409
  %v4878 = vpop.f32.mrf.mxu0
  %v4879 = vadd.f32 0.0, %v4878
  %4880 = vmatmul.f32.gmra.mxu0 %v2411
  %v4881 = vpop.f32.mrf.mxu0
  %v4882 = vadd.f32 0.0, %v4881
  %4883 = vmatmul.f32.gmra.mxu0 %v2413
  %v4884 = vpop.f32.mrf.mxu0
  %v4885 = vadd.f32 0.0, %v4884
  %4886 = vmatmul.f32.gmra.mxu0 %v2415
  %v4887 = vpop.f32.mrf.mxu0
  %v4888 = vadd.f32 0.0, %v4887
  %4889 = vmatmul.f32.gmra.mxu0 %v2417
  %v4890 = vpop.f32.mrf.mxu0
  %v4891 = vadd.f32 0.0, %v4890
  %4892 = vmatmul.f32.gmra.mxu0 %v2419
  %v4893 = vpop.f32.mrf.mxu0
  %v4894 = vadd.f32 0.0, %v4893
  %4895 = vmatmul.f32.gmra.mxu0 %v2421
  %v4896 = vpop.f32.mrf.mxu0
  %v4897 = vadd.f32 0.0, %v4896
  %4898 = vmatmul.f32.gmra.mxu0 %v2423
  %v4899 = vpop.f32.mrf.mxu0
  %v4900 = vadd.f32 0.0, %v4899
  %4901 = vmatmul.f32.gmra.mxu0 %v2425
  %v4902 = vpop.f32.mrf.mxu0
  %v4903 = vadd.f32 0.0, %v4902
  %4904 = vmatmul.f32.gmra.mxu0 %v2427
  %v4905 = vpop.f32.mrf.mxu0
  %v4906 = vadd.f32 0.0, %v4905
  %4907 = vmatmul.f32.gmra.mxu0 %v3838
  %v4908 = vpop.f32.mrf.mxu0
  %v4909 = vadd.f32 0.0, %v4908
  %4910 = vmatmul.f32.gmra.mxu0 %v3840
  %v4911 = vpop.f32.mrf.mxu0
  %v4912 = vadd.f32 0.0, %v4911
  %4913 = vmatmul.f32.gmra.mxu0 %v4707
  %v4914 = vpop.f32.mrf.mxu0
  %v4915 = vadd.f32 0.0, %v4914
  %4916 = vmatmul.f32.gmra.mxu0 %v4709
  %v4917 = vpop.f32.mrf.mxu0
  %v4918 = vadd.f32 0.0, %v4917
  %4919 = vdwg.mxu0
  %v4920 = vadd.f32 %v4627, %v4729
  %v4921 = vadd.f32 %v4628, %v4732
  %v4922 = vadd.f32 %v4629, %v4735
  %v4923 = vadd.f32 %v4630, %v4738
  %v4924 = vadd.f32 %v4631, %v4741
  %v4925 = vadd.f32 %v4632, %v4744
  %v4926 = vadd.f32 %v4633, %v4747
  %v4927 = vadd.f32 %v4634, %v4750
  %v4928 = vadd.f32 %v4635, %v4753
  %v4929 = vadd.f32 %v4636, %v4756
  %v4930 = vadd.f32 %v4637, %v4759
  %v4931 = vadd.f32 %v4638, %v4762
  %v4932 = vadd.f32 %v4639, %v4765
  %v4933 = vadd.f32 %v4640, %v4768
  %v4934 = vadd.f32 %v4641, %v4771
  %v4935 = vadd.f32 %v4642, %v4774
  %v4936 = vadd.f32 %v4643, %v4777
  %v4937 = vadd.f32 %v4644, %v4780
  %v4938 = vadd.f32 %v4645, %v4783
  %v4939 = vadd.f32 %v4646, %v4786
  %v4940 = vadd.f32 %v4647, %v4789
  %v4941 = vadd.f32 %v4648, %v4792
  %v4942 = vadd.f32 %v4649, %v4795
  %v4943 = vadd.f32 %v4650, %v4798
  %v4944 = vadd.f32 %v4651, %v4801
  %v4945 = vadd.f32 %v4652, %v4804
  %v4946 = vadd.f32 %v4653, %v4807
  %v4947 = vadd.f32 %v4654, %v4810
  %v4948 = vadd.f32 %v4655, %v4813
  %v4949 = vadd.f32 %v4656, %v4816
  %v4950 = vadd.f32 %v4657, %v4819
  %v4951 = vadd.f32 %v4658, %v4822
  %v4952 = vadd.f32 %v4659, %v4825
  %v4953 = vadd.f32 %v4660, %v4828
  %v4954 = vadd.f32 %v4661, %v4831
  %v4955 = vadd.f32 %v4662, %v4834
  %v4956 = vadd.f32 %v4663, %v4837
  %v4957 = vadd.f32 %v4664, %v4840
  %v4958 = vadd.f32 %v4665, %v4843
  %v4959 = vadd.f32 %v4666, %v4846
  %v4960 = vadd.f32 %v4667, %v4849
  %v4961 = vadd.f32 %v4668, %v4852
  %v4962 = vadd.f32 %v4669, %v4855
  %v4963 = vadd.f32 %v4670, %v4858
  %v4964 = vadd.f32 %v4671, %v4861
  %v4965 = vadd.f32 %v4672, %v4864
  %v4966 = vadd.f32 %v4673, %v4867
  %v4967 = vadd.f32 %v4674, %v4870
  %v4968 = vadd.f32 %v4675, %v4873
  %v4969 = vadd.f32 %v4676, %v4876
  %v4970 = vadd.f32 %v4677, %v4879
  %v4971 = vadd.f32 %v4678, %v4882
  %v4972 = vadd.f32 %v4679, %v4885
  %v4973 = vadd.f32 %v4680, %v4888
  %v4974 = vadd.f32 %v4681, %v4891
  %v4975 = vadd.f32 %v4682, %v4894
  %v4976 = vadd.f32 %v4683, %v4897
  %v4977 = vadd.f32 %v4684, %v4900
  %v4978 = vadd.f32 %v4685, %v4903
  %v4979 = vadd.f32 %v4686, %v4906
  %v4980 = vadd.f32 %v4687, %v4909
  %v4981 = vadd.f32 %v4688, %v4912
  %v4982 = vadd.f32 %v4689, %v4915
  %v4983 = vadd.f32 %v4690, %v4918
  %v4984 = vrot.slane %v1951, 2
  %v4985 = vrot.slane %v1952, 2
  %v4986 = vsel %vm2975, %v4984, %v4985
  %v4987 = vrot.slane %v1953, 2
  %v4988 = vsel %vm2975, %v4985, %v4987
  %v4989 = vrot.slane %v2005, 2
  %v4990 = vrot.slane %v2006, 2
  %v4991 = vsel %vm2975, %v4989, %v4990
  %v4992 = vrot.slane %v2007, 2
  %v4993 = vsel %vm2975, %v4990, %v4992
  %v4994 = vsel %vm1114, %v4986, 0
  %v4996 = vsel %vm1114, %v4988, 0
  %v4998 = vsel %vm1114, %v4991, 0
  %v5000 = vsel %vm1114, %v4993, 0
  %5002 = vmatpush.msra.mxu0 0.0
  %5003 = vmatpush.msra.mxu0 0.0
  %5004 = vmatpush.msra.mxu0 0.0
  %5005 = vmatpush.msra.mxu0 0.0
  %5006 = vmatpush.msra.mxu0 0.0
  %5007 = vmatpush.msra.mxu0 0.0
  %5008 = vmatpush.msra.mxu0 0.0
  %5009 = vmatpush.msra.mxu0 0.0
  %5010 = vmatpush.msra.mxu0 0.0
  %5011 = vmatpush.msra.mxu0 0.0
  %5012 = vmatpush.msra.mxu0 0.0
  %5013 = vmatpush.msra.mxu0 0.0
  %5014 = vmatpush.msra.mxu0 %v2043
  %5015 = vmatpush.msra.mxu0 %v2042
  %5016 = vmatpush.msra.mxu0 %v2041
  %5017 = vmatpush.msra.mxu0 %v2040
  %5018 = vmatmul.f32.gmra.mxu0 %v3144
  %v5019 = vpop.f32.mrf.mxu0
  %v5020 = vadd.f32 0.0, %v5019
  %5021 = vmatmul.f32.gmra.mxu0 %v3146
  %v5022 = vpop.f32.mrf.mxu0
  %v5023 = vadd.f32 0.0, %v5022
  %5024 = vmatmul.f32.gmra.mxu0 %v3148
  %v5025 = vpop.f32.mrf.mxu0
  %v5026 = vadd.f32 0.0, %v5025
  %5027 = vmatmul.f32.gmra.mxu0 %v3150
  %v5028 = vpop.f32.mrf.mxu0
  %v5029 = vadd.f32 0.0, %v5028
  %5030 = vmatmul.f32.gmra.mxu0 %v3152
  %v5031 = vpop.f32.mrf.mxu0
  %v5032 = vadd.f32 0.0, %v5031
  %5033 = vmatmul.f32.gmra.mxu0 %v3154
  %v5034 = vpop.f32.mrf.mxu0
  %v5035 = vadd.f32 0.0, %v5034
  %5036 = vmatmul.f32.gmra.mxu0 %v3156
  %v5037 = vpop.f32.mrf.mxu0
  %v5038 = vadd.f32 0.0, %v5037
  %5039 = vmatmul.f32.gmra.mxu0 %v3158
  %v5040 = vpop.f32.mrf.mxu0
  %v5041 = vadd.f32 0.0, %v5040
  %5042 = vmatmul.f32.gmra.mxu0 %v3160
  %v5043 = vpop.f32.mrf.mxu0
  %v5044 = vadd.f32 0.0, %v5043
  %5045 = vmatmul.f32.gmra.mxu0 %v3162
  %v5046 = vpop.f32.mrf.mxu0
  %v5047 = vadd.f32 0.0, %v5046
  %5048 = vmatmul.f32.gmra.mxu0 %v3164
  %v5049 = vpop.f32.mrf.mxu0
  %v5050 = vadd.f32 0.0, %v5049
  %5051 = vmatmul.f32.gmra.mxu0 %v3166
  %v5052 = vpop.f32.mrf.mxu0
  %v5053 = vadd.f32 0.0, %v5052
  %5054 = vmatmul.f32.gmra.mxu0 %v3168
  %v5055 = vpop.f32.mrf.mxu0
  %v5056 = vadd.f32 0.0, %v5055
  %5057 = vmatmul.f32.gmra.mxu0 %v3170
  %v5058 = vpop.f32.mrf.mxu0
  %v5059 = vadd.f32 0.0, %v5058
  %5060 = vmatmul.f32.gmra.mxu0 %v3172
  %v5061 = vpop.f32.mrf.mxu0
  %v5062 = vadd.f32 0.0, %v5061
  %5063 = vmatmul.f32.gmra.mxu0 %v3174
  %v5064 = vpop.f32.mrf.mxu0
  %v5065 = vadd.f32 0.0, %v5064
  %5066 = vmatmul.f32.gmra.mxu0 %v3176
  %v5067 = vpop.f32.mrf.mxu0
  %v5068 = vadd.f32 0.0, %v5067
  %5069 = vmatmul.f32.gmra.mxu0 %v3178
  %v5070 = vpop.f32.mrf.mxu0
  %v5071 = vadd.f32 0.0, %v5070
  %5072 = vmatmul.f32.gmra.mxu0 %v3180
  %v5073 = vpop.f32.mrf.mxu0
  %v5074 = vadd.f32 0.0, %v5073
  %5075 = vmatmul.f32.gmra.mxu0 %v3182
  %v5076 = vpop.f32.mrf.mxu0
  %v5077 = vadd.f32 0.0, %v5076
  %5078 = vmatmul.f32.gmra.mxu0 %v3184
  %v5079 = vpop.f32.mrf.mxu0
  %v5080 = vadd.f32 0.0, %v5079
  %5081 = vmatmul.f32.gmra.mxu0 %v3186
  %v5082 = vpop.f32.mrf.mxu0
  %v5083 = vadd.f32 0.0, %v5082
  %5084 = vmatmul.f32.gmra.mxu0 %v3188
  %v5085 = vpop.f32.mrf.mxu0
  %v5086 = vadd.f32 0.0, %v5085
  %5087 = vmatmul.f32.gmra.mxu0 %v3190
  %v5088 = vpop.f32.mrf.mxu0
  %v5089 = vadd.f32 0.0, %v5088
  %5090 = vmatmul.f32.gmra.mxu0 %v3192
  %v5091 = vpop.f32.mrf.mxu0
  %v5092 = vadd.f32 0.0, %v5091
  %5093 = vmatmul.f32.gmra.mxu0 %v3194
  %v5094 = vpop.f32.mrf.mxu0
  %v5095 = vadd.f32 0.0, %v5094
  %5096 = vmatmul.f32.gmra.mxu0 %v3196
  %v5097 = vpop.f32.mrf.mxu0
  %v5098 = vadd.f32 0.0, %v5097
  %5099 = vmatmul.f32.gmra.mxu0 %v3198
  %v5100 = vpop.f32.mrf.mxu0
  %v5101 = vadd.f32 0.0, %v5100
  %5102 = vmatmul.f32.gmra.mxu0 %v4125
  %v5103 = vpop.f32.mrf.mxu0
  %v5104 = vadd.f32 0.0, %v5103
  %5105 = vmatmul.f32.gmra.mxu0 %v4127
  %v5106 = vpop.f32.mrf.mxu0
  %v5107 = vadd.f32 0.0, %v5106
  %5108 = vmatmul.f32.gmra.mxu0 %v4994
  %v5109 = vpop.f32.mrf.mxu0
  %v5110 = vadd.f32 0.0, %v5109
  %5111 = vmatmul.f32.gmra.mxu0 %v4996
  %v5112 = vpop.f32.mrf.mxu0
  %v5113 = vadd.f32 0.0, %v5112
  %5114 = vmatmul.f32.gmra.mxu0 %v3208
  %v5115 = vpop.f32.mrf.mxu0
  %v5116 = vadd.f32 0.0, %v5115
  %5117 = vmatmul.f32.gmra.mxu0 %v3210
  %v5118 = vpop.f32.mrf.mxu0
  %v5119 = vadd.f32 0.0, %v5118
  %5120 = vmatmul.f32.gmra.mxu0 %v3212
  %v5121 = vpop.f32.mrf.mxu0
  %v5122 = vadd.f32 0.0, %v5121
  %5123 = vmatmul.f32.gmra.mxu0 %v3214
  %v5124 = vpop.f32.mrf.mxu0
  %v5125 = vadd.f32 0.0, %v5124
  %5126 = vmatmul.f32.gmra.mxu0 %v3216
  %v5127 = vpop.f32.mrf.mxu0
  %v5128 = vadd.f32 0.0, %v5127
  %5129 = vmatmul.f32.gmra.mxu0 %v3218
  %v5130 = vpop.f32.mrf.mxu0
  %v5131 = vadd.f32 0.0, %v5130
  %5132 = vmatmul.f32.gmra.mxu0 %v3220
  %v5133 = vpop.f32.mrf.mxu0
  %v5134 = vadd.f32 0.0, %v5133
  %5135 = vmatmul.f32.gmra.mxu0 %v3222
  %v5136 = vpop.f32.mrf.mxu0
  %v5137 = vadd.f32 0.0, %v5136
  %5138 = vmatmul.f32.gmra.mxu0 %v3224
  %v5139 = vpop.f32.mrf.mxu0
  %v5140 = vadd.f32 0.0, %v5139
  %5141 = vmatmul.f32.gmra.mxu0 %v3226
  %v5142 = vpop.f32.mrf.mxu0
  %v5143 = vadd.f32 0.0, %v5142
  %5144 = vmatmul.f32.gmra.mxu0 %v3228
  %v5145 = vpop.f32.mrf.mxu0
  %v5146 = vadd.f32 0.0, %v5145
  %5147 = vmatmul.f32.gmra.mxu0 %v3230
  %v5148 = vpop.f32.mrf.mxu0
  %v5149 = vadd.f32 0.0, %v5148
  %5150 = vmatmul.f32.gmra.mxu0 %v3232
  %v5151 = vpop.f32.mrf.mxu0
  %v5152 = vadd.f32 0.0, %v5151
  %5153 = vmatmul.f32.gmra.mxu0 %v3234
  %v5154 = vpop.f32.mrf.mxu0
  %v5155 = vadd.f32 0.0, %v5154
  %5156 = vmatmul.f32.gmra.mxu0 %v3236
  %v5157 = vpop.f32.mrf.mxu0
  %v5158 = vadd.f32 0.0, %v5157
  %5159 = vmatmul.f32.gmra.mxu0 %v3238
  %v5160 = vpop.f32.mrf.mxu0
  %v5161 = vadd.f32 0.0, %v5160
  %5162 = vmatmul.f32.gmra.mxu0 %v3240
  %v5163 = vpop.f32.mrf.mxu0
  %v5164 = vadd.f32 0.0, %v5163
  %5165 = vmatmul.f32.gmra.mxu0 %v3242
  %v5166 = vpop.f32.mrf.mxu0
  %v5167 = vadd.f32 0.0, %v5166
  %5168 = vmatmul.f32.gmra.mxu0 %v3244
  %v5169 = vpop.f32.mrf.mxu0
  %v5170 = vadd.f32 0.0, %v5169
  %5171 = vmatmul.f32.gmra.mxu0 %v3246
  %v5172 = vpop.f32.mrf.mxu0
  %v5173 = vadd.f32 0.0, %v5172
  %5174 = vmatmul.f32.gmra.mxu0 %v3248
  %v5175 = vpop.f32.mrf.mxu0
  %v5176 = vadd.f32 0.0, %v5175
  %5177 = vmatmul.f32.gmra.mxu0 %v3250
  %v5178 = vpop.f32.mrf.mxu0
  %v5179 = vadd.f32 0.0, %v5178
  %5180 = vmatmul.f32.gmra.mxu0 %v3252
  %v5181 = vpop.f32.mrf.mxu0
  %v5182 = vadd.f32 0.0, %v5181
  %5183 = vmatmul.f32.gmra.mxu0 %v3254
  %v5184 = vpop.f32.mrf.mxu0
  %v5185 = vadd.f32 0.0, %v5184
  %5186 = vmatmul.f32.gmra.mxu0 %v3256
  %v5187 = vpop.f32.mrf.mxu0
  %v5188 = vadd.f32 0.0, %v5187
  %5189 = vmatmul.f32.gmra.mxu0 %v3258
  %v5190 = vpop.f32.mrf.mxu0
  %v5191 = vadd.f32 0.0, %v5190
  %5192 = vmatmul.f32.gmra.mxu0 %v3260
  %v5193 = vpop.f32.mrf.mxu0
  %v5194 = vadd.f32 0.0, %v5193
  %5195 = vmatmul.f32.gmra.mxu0 %v3262
  %v5196 = vpop.f32.mrf.mxu0
  %v5197 = vadd.f32 0.0, %v5196
  %5198 = vmatmul.f32.gmra.mxu0 %v4129
  %v5199 = vpop.f32.mrf.mxu0
  %v5200 = vadd.f32 0.0, %v5199
  %5201 = vmatmul.f32.gmra.mxu0 %v4131
  %v5202 = vpop.f32.mrf.mxu0
  %v5203 = vadd.f32 0.0, %v5202
  %5204 = vmatmul.f32.gmra.mxu0 %v4998
  %v5205 = vpop.f32.mrf.mxu0
  %v5206 = vadd.f32 0.0, %v5205
  %5207 = vmatmul.f32.gmra.mxu0 %v5000
  %v5208 = vpop.f32.mrf.mxu0
  %v5209 = vadd.f32 0.0, %v5208
  %5210 = vdwg.mxu0
  %v5211 = vadd.f32 %v4920, %v5020
  %v5212 = vadd.f32 %v4921, %v5023
  %v5213 = vadd.f32 %v4922, %v5026
  %v5214 = vadd.f32 %v4923, %v5029
  %v5215 = vadd.f32 %v4924, %v5032
  %v5216 = vadd.f32 %v4925, %v5035
  %v5217 = vadd.f32 %v4926, %v5038
  %v5218 = vadd.f32 %v4927, %v5041
  %v5219 = vadd.f32 %v4928, %v5044
  %v5220 = vadd.f32 %v4929, %v5047
  %v5221 = vadd.f32 %v4930, %v5050
  %v5222 = vadd.f32 %v4931, %v5053
  %v5223 = vadd.f32 %v4932, %v5056
  %v5224 = vadd.f32 %v4933, %v5059
  %v5225 = vadd.f32 %v4934, %v5062
  %v5226 = vadd.f32 %v4935, %v5065
  %v5227 = vadd.f32 %v4936, %v5068
  %v5228 = vadd.f32 %v4937, %v5071
  %v5229 = vadd.f32 %v4938, %v5074
  %v5230 = vadd.f32 %v4939, %v5077
  %v5231 = vadd.f32 %v4940, %v5080
  %v5232 = vadd.f32 %v4941, %v5083
  %v5233 = vadd.f32 %v4942, %v5086
  %v5234 = vadd.f32 %v4943, %v5089
  %v5235 = vadd.f32 %v4944, %v5092
  %v5236 = vadd.f32 %v4945, %v5095
  %v5237 = vadd.f32 %v4946, %v5098
  %v5238 = vadd.f32 %v4947, %v5101
  %v5239 = vadd.f32 %v4948, %v5104
  %v5240 = vadd.f32 %v4949, %v5107
  %v5241 = vadd.f32 %v4950, %v5110
  %v5242 = vadd.f32 %v4951, %v5113
  %v5243 = vadd.f32 %v4952, %v5116
  %v5244 = vadd.f32 %v4953, %v5119
  %v5245 = vadd.f32 %v4954, %v5122
  %v5246 = vadd.f32 %v4955, %v5125
  %v5247 = vadd.f32 %v4956, %v5128
  %v5248 = vadd.f32 %v4957, %v5131
  %v5249 = vadd.f32 %v4958, %v5134
  %v5250 = vadd.f32 %v4959, %v5137
  %v5251 = vadd.f32 %v4960, %v5140
  %v5252 = vadd.f32 %v4961, %v5143
  %v5253 = vadd.f32 %v4962, %v5146
  %v5254 = vadd.f32 %v4963, %v5149
  %v5255 = vadd.f32 %v4964, %v5152
  %v5256 = vadd.f32 %v4965, %v5155
  %v5257 = vadd.f32 %v4966, %v5158
  %v5258 = vadd.f32 %v4967, %v5161
  %v5259 = vadd.f32 %v4968, %v5164
  %v5260 = vadd.f32 %v4969, %v5167
  %v5261 = vadd.f32 %v4970, %v5170
  %v5262 = vadd.f32 %v4971, %v5173
  %v5263 = vadd.f32 %v4972, %v5176
  %v5264 = vadd.f32 %v4973, %v5179
  %v5265 = vadd.f32 %v4974, %v5182
  %v5266 = vadd.f32 %v4975, %v5185
  %v5267 = vadd.f32 %v4976, %v5188
  %v5268 = vadd.f32 %v4977, %v5191
  %v5269 = vadd.f32 %v4978, %v5194
  %v5270 = vadd.f32 %v4979, %v5197
  %v5271 = vadd.f32 %v4980, %v5200
  %v5272 = vadd.f32 %v4981, %v5203
  %v5273 = vadd.f32 %v4982, %v5206
  %v5274 = vadd.f32 %v4983, %v5209
  %vm5275 = vcmask 64512
  %5276 = vst.msk [vmem:[%s7] sm:$0xff] %vm5275, %v5211
  %5277 = vst.msk [vmem:[%s7 + $0x8] sm:$0xff] %vm5275, %v5212
  %5278 = vst.msk [vmem:[%s7 + $0x10] sm:$0xff] %vm5275, %v5213
  %5279 = vst.msk [vmem:[%s7 + $0x18] sm:$0xff] %vm5275, %v5214
  %5280 = vst.msk [vmem:[%s7 + $0x20] sm:$0xff] %vm5275, %v5215
  %5281 = vst.msk [vmem:[%s7 + $0x28] sm:$0xff] %vm5275, %v5216
  %5282 = vst.msk [vmem:[%s7 + $0x30] sm:$0xff] %vm5275, %v5217
  %5283 = vst.msk [vmem:[%s7 + $0x38] sm:$0xff] %vm5275, %v5218
  %5284 = vst.msk [vmem:[%s7 + $0x40] sm:$0xff] %vm5275, %v5219
  %5285 = vst.msk [vmem:[%s7 + $0x48] sm:$0xff] %vm5275, %v5220
  %5286 = vst.msk [vmem:[%s7 + $0x50] sm:$0xff] %vm5275, %v5221
  %5287 = vst.msk [vmem:[%s7 + $0x58] sm:$0xff] %vm5275, %v5222
  %5288 = vst.msk [vmem:[%s7 + $0x60] sm:$0xff] %vm5275, %v5223
  %5289 = vst.msk [vmem:[%s7 + $0x68] sm:$0xff] %vm5275, %v5224
  %5290 = vst.msk [vmem:[%s7 + $0x70] sm:$0xff] %vm5275, %v5225
  %5291 = vst.msk [vmem:[%s7 + $0x78] sm:$0xff] %vm5275, %v5226
  %5292 = vst.msk [vmem:[%s7 + $0x80] sm:$0xff] %vm5275, %v5227
  %5293 = vst.msk [vmem:[%s7 + $0x88] sm:$0xff] %vm5275, %v5228
  %5294 = vst.msk [vmem:[%s7 + $0x90] sm:$0xff] %vm5275, %v5229
  %5295 = vst.msk [vmem:[%s7 + $0x98] sm:$0xff] %vm5275, %v5230
  %5296 = vst.msk [vmem:[%s7 + $0xa0] sm:$0xff] %vm5275, %v5231
  %5297 = vst.msk [vmem:[%s7 + $0xa8] sm:$0xff] %vm5275, %v5232
  %5298 = vst.msk [vmem:[%s7 + $0xb0] sm:$0xff] %vm5275, %v5233
  %5299 = vst.msk [vmem:[%s7 + $0xb8] sm:$0xff] %vm5275, %v5234
  %5300 = vst.msk [vmem:[%s7 + $0xc0] sm:$0xff] %vm5275, %v5235
  %5301 = vst.msk [vmem:[%s7 + $0xc8] sm:$0xff] %vm5275, %v5236
  %5302 = vst.msk [vmem:[%s7 + $0xd0] sm:$0xff] %vm5275, %v5237
  %5303 = vst.msk [vmem:[%s7 + $0xd8] sm:$0xff] %vm5275, %v5238
  %5304 = vst.msk [vmem:[%s7 + $0xe0] sm:$0xff] %vm5275, %v5239
  %5305 = vst.msk [vmem:[%s7 + $0xe8] sm:$0xff] %vm5275, %v5240
  %5306 = vst.msk [vmem:[%s7 + $0xf0] sm:$0xff] %vm5275, %v5241
  %5307 = vst.msk [vmem:[%s7 + $0xf8] sm:$0xff] %vm5275, %v5242
  %5308 = vst.msk [vmem:[%s7 + $0x100] sm:$0xff] %vm5275, %v5243
  %5309 = vst.msk [vmem:[%s7 + $0x108] sm:$0xff] %vm5275, %v5244
  %5310 = vst.msk [vmem:[%s7 + $0x110] sm:$0xff] %vm5275, %v5245
  %5311 = vst.msk [vmem:[%s7 + $0x118] sm:$0xff] %vm5275, %v5246
  %5312 = vst.msk [vmem:[%s7 + $0x120] sm:$0xff] %vm5275, %v5247
  %5313 = vst.msk [vmem:[%s7 + $0x128] sm:$0xff] %vm5275, %v5248
  %5314 = vst.msk [vmem:[%s7 + $0x130] sm:$0xff] %vm5275, %v5249
  %5315 = vst.msk [vmem:[%s7 + $0x138] sm:$0xff] %vm5275, %v5250
  %5316 = vst.msk [vmem:[%s7 + $0x140] sm:$0xff] %vm5275, %v5251
  %5317 = vst.msk [vmem:[%s7 + $0x148] sm:$0xff] %vm5275, %v5252
  %5318 = vst.msk [vmem:[%s7 + $0x150] sm:$0xff] %vm5275, %v5253
  %5319 = vst.msk [vmem:[%s7 + $0x158] sm:$0xff] %vm5275, %v5254
  %5320 = vst.msk [vmem:[%s7 + $0x160] sm:$0xff] %vm5275, %v5255
  %5321 = vst.msk [vmem:[%s7 + $0x168] sm:$0xff] %vm5275, %v5256
  %5322 = vst.msk [vmem:[%s7 + $0x170] sm:$0xff] %vm5275, %v5257
  %5323 = vst.msk [vmem:[%s7 + $0x178] sm:$0xff] %vm5275, %v5258
  %5324 = vst.msk [vmem:[%s7 + $0x180] sm:$0xff] %vm5275, %v5259
  %5325 = vst.msk [vmem:[%s7 + $0x188] sm:$0xff] %vm5275, %v5260
  %5326 = vst.msk [vmem:[%s7 + $0x190] sm:$0xff] %vm5275, %v5261
  %5327 = vst.msk [vmem:[%s7 + $0x198] sm:$0xff] %vm5275, %v5262
  %5328 = vst.msk [vmem:[%s7 + $0x1a0] sm:$0xff] %vm5275, %v5263
  %5329 = vst.msk [vmem:[%s7 + $0x1a8] sm:$0xff] %vm5275, %v5264
  %5330 = vst.msk [vmem:[%s7 + $0x1b0] sm:$0xff] %vm5275, %v5265
  %5331 = vst.msk [vmem:[%s7 + $0x1b8] sm:$0xff] %vm5275, %v5266
  %5332 = vst.msk [vmem:[%s7 + $0x1c0] sm:$0xff] %vm5275, %v5267
  %5333 = vst.msk [vmem:[%s7 + $0x1c8] sm:$0xff] %vm5275, %v5268
  %5334 = vst.msk [vmem:[%s7 + $0x1d0] sm:$0xff] %vm5275, %v5269
  %5335 = vst.msk [vmem:[%s7 + $0x1d8] sm:$0xff] %vm5275, %v5270
  %5336 = vst.msk [vmem:[%s7 + $0x1e0] sm:$0xff] %vm5275, %v5271
  %5337 = vst.msk [vmem:[%s7 + $0x1e8] sm:$0xff] %vm5275, %v5272
  %5338 = vst.msk [vmem:[%s7 + $0x1f0] sm:$0xff] %vm5275, %v5273
  %5339 = vst.msk [vmem:[%s7 + $0x1f8] sm:$0xff] %vm5275, %v5274
  %5404 = vrot.lane.b32.xlu0 %v26, 8
  %v5405 = vpop.permute.xlu0 %5404
  %5406 = vrot.lane.b32.xlu0 %v27, 8
  %v5407 = vpop.permute.xlu0 %5406
  %5408 = vrot.lane.b32.xlu0 %v28, 8
  %v5409 = vpop.permute.xlu0 %5408
  %5410 = vrot.lane.b32.xlu0 %v29, 8
  %v5411 = vpop.permute.xlu0 %5410
  %5412 = vrot.lane.b32.xlu0 %v30, 8
  %v5413 = vpop.permute.xlu0 %5412
  %5414 = vrot.lane.b32.xlu0 %v31, 8
  %v5415 = vpop.permute.xlu0 %5414
  %5416 = vrot.lane.b32.xlu0 %v32, 8
  %v5417 = vpop.permute.xlu0 %5416
  %5418 = vrot.lane.b32.xlu0 %v33, 8
  %v5419 = vpop.permute.xlu0 %5418
  %5420 = vrot.lane.b32.xlu0 %v34, 8
  %v5421 = vpop.permute.xlu0 %5420
  %5422 = vrot.lane.b32.xlu0 %v35, 8
  %v5423 = vpop.permute.xlu0 %5422
  %5424 = vrot.lane.b32.xlu0 %v36, 8
  %v5425 = vpop.permute.xlu0 %5424
  %5426 = vrot.lane.b32.xlu0 %v37, 8
  %v5427 = vpop.permute.xlu0 %5426
  %5428 = vrot.lane.b32.xlu0 %v38, 8
  %v5429 = vpop.permute.xlu0 %5428
  %5430 = vrot.lane.b32.xlu0 %v39, 8
  %v5431 = vpop.permute.xlu0 %5430
  %5432 = vrot.lane.b32.xlu0 %v40, 8
  %v5433 = vpop.permute.xlu0 %5432
  %5434 = vrot.lane.b32.xlu0 %v41, 8
  %v5435 = vpop.permute.xlu0 %5434
  %5436 = vrot.lane.b32.xlu0 %v42, 8
  %v5437 = vpop.permute.xlu0 %5436
  %5438 = vrot.lane.b32.xlu0 %v43, 8
  %v5439 = vpop.permute.xlu0 %5438
  %5440 = vrot.lane.b32.xlu0 %v44, 8
  %v5441 = vpop.permute.xlu0 %5440
  %5442 = vrot.lane.b32.xlu0 %v45, 8
  %v5443 = vpop.permute.xlu0 %5442
  %5444 = vrot.lane.b32.xlu0 %v46, 8
  %v5445 = vpop.permute.xlu0 %5444
  %5446 = vrot.lane.b32.xlu0 %v47, 8
  %v5447 = vpop.permute.xlu0 %5446
  %5448 = vrot.lane.b32.xlu0 %v48, 8
  %v5449 = vpop.permute.xlu0 %5448
  %5450 = vrot.lane.b32.xlu0 %v49, 8
  %v5451 = vpop.permute.xlu0 %5450
  %5452 = vrot.lane.b32.xlu0 %v50, 8
  %v5453 = vpop.permute.xlu0 %5452
  %5454 = vrot.lane.b32.xlu0 %v51, 8
  %v5455 = vpop.permute.xlu0 %5454
  %5456 = vrot.lane.b32.xlu0 %v52, 8
  %v5457 = vpop.permute.xlu0 %5456
  %5458 = vrot.lane.b32.xlu0 %v53, 8
  %v5459 = vpop.permute.xlu0 %5458
  %5460 = vrot.lane.b32.xlu0 %v54, 8
  %v5461 = vpop.permute.xlu0 %5460
  %5462 = vrot.lane.b32.xlu0 %v55, 8
  %v5463 = vpop.permute.xlu0 %5462
  %5464 = vrot.lane.b32.xlu0 %v56, 8
  %v5465 = vpop.permute.xlu0 %5464
  %5466 = vrot.lane.b32.xlu0 %v57, 8
  %v5467 = vpop.permute.xlu0 %5466
  %5468 = vrot.lane.b32.xlu0 %v58, 8
  %v5469 = vpop.permute.xlu0 %5468
  %5470 = vrot.lane.b32.xlu0 %v59, 8
  %v5471 = vpop.permute.xlu0 %5470
  %5472 = vrot.lane.b32.xlu0 %v60, 8
  %v5473 = vpop.permute.xlu0 %5472
  %5474 = vrot.lane.b32.xlu0 %v61, 8
  %v5475 = vpop.permute.xlu0 %5474
  %5476 = vrot.lane.b32.xlu0 %v62, 8
  %v5477 = vpop.permute.xlu0 %5476
  %5478 = vrot.lane.b32.xlu0 %v63, 8
  %v5479 = vpop.permute.xlu0 %5478
  %5480 = vrot.lane.b32.xlu0 %v64, 8
  %v5481 = vpop.permute.xlu0 %5480
  %5482 = vrot.lane.b32.xlu0 %v65, 8
  %v5483 = vpop.permute.xlu0 %5482
  %5484 = vrot.lane.b32.xlu0 %v66, 8
  %v5485 = vpop.permute.xlu0 %5484
  %5486 = vrot.lane.b32.xlu0 %v67, 8
  %v5487 = vpop.permute.xlu0 %5486
  %5488 = vrot.lane.b32.xlu0 %v68, 8
  %v5489 = vpop.permute.xlu0 %5488
  %5490 = vrot.lane.b32.xlu0 %v69, 8
  %v5491 = vpop.permute.xlu0 %5490
  %5492 = vrot.lane.b32.xlu0 %v70, 8
  %v5493 = vpop.permute.xlu0 %5492
  %5494 = vrot.lane.b32.xlu0 %v71, 8
  %v5495 = vpop.permute.xlu0 %5494
  %5496 = vrot.lane.b32.xlu0 %v72, 8
  %v5497 = vpop.permute.xlu0 %5496
  %5498 = vrot.lane.b32.xlu0 %v73, 8
  %v5499 = vpop.permute.xlu0 %5498
  %5500 = vrot.lane.b32.xlu0 %v74, 8
  %v5501 = vpop.permute.xlu0 %5500
  %5502 = vrot.lane.b32.xlu0 %v75, 8
  %v5503 = vpop.permute.xlu0 %5502
  %5504 = vrot.lane.b32.xlu0 %v76, 8
  %v5505 = vpop.permute.xlu0 %5504
  %5506 = vrot.lane.b32.xlu0 %v77, 8
  %v5507 = vpop.permute.xlu0 %5506
  %5508 = vrot.lane.b32.xlu0 %v78, 8
  %v5509 = vpop.permute.xlu0 %5508
  %5510 = vrot.lane.b32.xlu0 %v79, 8
  %v5511 = vpop.permute.xlu0 %5510
  %5512 = vrot.lane.b32.xlu0 %v80, 8
  %v5513 = vpop.permute.xlu0 %5512
  %5514 = vrot.lane.b32.xlu0 %v81, 8
  %v5515 = vpop.permute.xlu0 %5514
  %5516 = vrot.lane.b32.xlu0 %v82, 8
  %v5517 = vpop.permute.xlu0 %5516
  %5518 = vrot.lane.b32.xlu0 %v83, 8
  %v5519 = vpop.permute.xlu0 %5518
  %5520 = vrot.lane.b32.xlu0 %v84, 8
  %v5521 = vpop.permute.xlu0 %5520
  %5522 = vrot.lane.b32.xlu0 %v85, 8
  %v5523 = vpop.permute.xlu0 %5522
  %5524 = vrot.lane.b32.xlu0 %v86, 8
  %v5525 = vpop.permute.xlu0 %5524
  %5526 = vrot.lane.b32.xlu0 %v87, 8
  %v5527 = vpop.permute.xlu0 %5526
  %5528 = vrot.lane.b32.xlu0 %v88, 8
  %v5529 = vpop.permute.xlu0 %5528
  %5530 = vrot.lane.b32.xlu0 %v89, 8
  %v5531 = vpop.permute.xlu0 %5530
  %vm5596 = vcmask 97344
  %5597 = vst.msk [vmem:[%s7] sm:$0xff] %vm5596, %v5405
  %5598 = vst.msk [vmem:[%s7 + $0x8] sm:$0xff] %vm5596, %v5407
  %5599 = vst.msk [vmem:[%s7 + $0x10] sm:$0xff] %vm5596, %v5409
  %5600 = vst.msk [vmem:[%s7 + $0x18] sm:$0xff] %vm5596, %v5411
  %5601 = vst.msk [vmem:[%s7 + $0x20] sm:$0xff] %vm5596, %v5413
  %5602 = vst.msk [vmem:[%s7 + $0x28] sm:$0xff] %vm5596, %v5415
  %5603 = vst.msk [vmem:[%s7 + $0x30] sm:$0xff] %vm5596, %v5417
  %5604 = vst.msk [vmem:[%s7 + $0x38] sm:$0xff] %vm5596, %v5419
  %5605 = vst.msk [vmem:[%s7 + $0x40] sm:$0xff] %vm5596, %v5421
  %5606 = vst.msk [vmem:[%s7 + $0x48] sm:$0xff] %vm5596, %v5423
  %5607 = vst.msk [vmem:[%s7 + $0x50] sm:$0xff] %vm5596, %v5425
  %5608 = vst.msk [vmem:[%s7 + $0x58] sm:$0xff] %vm5596, %v5427
  %5609 = vst.msk [vmem:[%s7 + $0x60] sm:$0xff] %vm5596, %v5429
  %5610 = vst.msk [vmem:[%s7 + $0x68] sm:$0xff] %vm5596, %v5431
  %5611 = vst.msk [vmem:[%s7 + $0x70] sm:$0xff] %vm5596, %v5433
  %5612 = vst.msk [vmem:[%s7 + $0x78] sm:$0xff] %vm5596, %v5435
  %5613 = vst.msk [vmem:[%s7 + $0x80] sm:$0xff] %vm5596, %v5437
  %5614 = vst.msk [vmem:[%s7 + $0x88] sm:$0xff] %vm5596, %v5439
  %5615 = vst.msk [vmem:[%s7 + $0x90] sm:$0xff] %vm5596, %v5441
  %5616 = vst.msk [vmem:[%s7 + $0x98] sm:$0xff] %vm5596, %v5443
  %5617 = vst.msk [vmem:[%s7 + $0xa0] sm:$0xff] %vm5596, %v5445
  %5618 = vst.msk [vmem:[%s7 + $0xa8] sm:$0xff] %vm5596, %v5447
  %5619 = vst.msk [vmem:[%s7 + $0xb0] sm:$0xff] %vm5596, %v5449
  %5620 = vst.msk [vmem:[%s7 + $0xb8] sm:$0xff] %vm5596, %v5451
  %5621 = vst.msk [vmem:[%s7 + $0xc0] sm:$0xff] %vm5596, %v5453
  %5622 = vst.msk [vmem:[%s7 + $0xc8] sm:$0xff] %vm5596, %v5455
  %5623 = vst.msk [vmem:[%s7 + $0xd0] sm:$0xff] %vm5596, %v5457
  %5624 = vst.msk [vmem:[%s7 + $0xd8] sm:$0xff] %vm5596, %v5459
  %5625 = vst.msk [vmem:[%s7 + $0xe0] sm:$0xff] %vm5596, %v5461
  %5626 = vst.msk [vmem:[%s7 + $0xe8] sm:$0xff] %vm5596, %v5463
  %5627 = vst.msk [vmem:[%s7 + $0xf0] sm:$0xff] %vm5596, %v5465
  %5628 = vst.msk [vmem:[%s7 + $0xf8] sm:$0xff] %vm5596, %v5467
  %5629 = vst.msk [vmem:[%s7 + $0x100] sm:$0xff] %vm5596, %v5469
  %5630 = vst.msk [vmem:[%s7 + $0x108] sm:$0xff] %vm5596, %v5471
  %5631 = vst.msk [vmem:[%s7 + $0x110] sm:$0xff] %vm5596, %v5473
  %5632 = vst.msk [vmem:[%s7 + $0x118] sm:$0xff] %vm5596, %v5475
  %5633 = vst.msk [vmem:[%s7 + $0x120] sm:$0xff] %vm5596, %v5477
  %5634 = vst.msk [vmem:[%s7 + $0x128] sm:$0xff] %vm5596, %v5479
  %5635 = vst.msk [vmem:[%s7 + $0x130] sm:$0xff] %vm5596, %v5481
  %5636 = vst.msk [vmem:[%s7 + $0x138] sm:$0xff] %vm5596, %v5483
  %5637 = vst.msk [vmem:[%s7 + $0x140] sm:$0xff] %vm5596, %v5485
  %5638 = vst.msk [vmem:[%s7 + $0x148] sm:$0xff] %vm5596, %v5487
  %5639 = vst.msk [vmem:[%s7 + $0x150] sm:$0xff] %vm5596, %v5489
  %5640 = vst.msk [vmem:[%s7 + $0x158] sm:$0xff] %vm5596, %v5491
  %5641 = vst.msk [vmem:[%s7 + $0x160] sm:$0xff] %vm5596, %v5493
  %5642 = vst.msk [vmem:[%s7 + $0x168] sm:$0xff] %vm5596, %v5495
  %5643 = vst.msk [vmem:[%s7 + $0x170] sm:$0xff] %vm5596, %v5497
  %5644 = vst.msk [vmem:[%s7 + $0x178] sm:$0xff] %vm5596, %v5499
  %5645 = vst.msk [vmem:[%s7 + $0x180] sm:$0xff] %vm5596, %v5501
  %5646 = vst.msk [vmem:[%s7 + $0x188] sm:$0xff] %vm5596, %v5503
  %5647 = vst.msk [vmem:[%s7 + $0x190] sm:$0xff] %vm5596, %v5505
  %5648 = vst.msk [vmem:[%s7 + $0x198] sm:$0xff] %vm5596, %v5507
  %5649 = vst.msk [vmem:[%s7 + $0x1a0] sm:$0xff] %vm5596, %v5509
  %5650 = vst.msk [vmem:[%s7 + $0x1a8] sm:$0xff] %vm5596, %v5511
  %5651 = vst.msk [vmem:[%s7 + $0x1b0] sm:$0xff] %vm5596, %v5513
  %5652 = vst.msk [vmem:[%s7 + $0x1b8] sm:$0xff] %vm5596, %v5515
  %5653 = vst.msk [vmem:[%s7 + $0x1c0] sm:$0xff] %vm5596, %v5517
  %5654 = vst.msk [vmem:[%s7 + $0x1c8] sm:$0xff] %vm5596, %v5519
  %5655 = vst.msk [vmem:[%s7 + $0x1d0] sm:$0xff] %vm5596, %v5521
  %5656 = vst.msk [vmem:[%s7 + $0x1d8] sm:$0xff] %vm5596, %v5523
  %5657 = vst.msk [vmem:[%s7 + $0x1e0] sm:$0xff] %vm5596, %v5525
  %5658 = vst.msk [vmem:[%s7 + $0x1e8] sm:$0xff] %vm5596, %v5527
  %5659 = vst.msk [vmem:[%s7 + $0x1f0] sm:$0xff] %vm5596, %v5529
  %5660 = vst.msk [vmem:[%s7 + $0x1f8] sm:$0xff] %vm5596, %v5531
  // Predicated region
  $region30: #{tpu_custom_call.1} parent=0 // pred_check
    _
  $region31: #{tpu_custom_call.1} parent=0 // pred_check_branch
    %5662 = sbr.rel (0) target = $region33
  $region32: #{tpu_custom_call.1} parent=0 // pred_region
    _
  $region33: #{tpu_custom_call.1} parent=0 // pred_fallthru
    _
  // Predicated region
  $region34: #{tpu_custom_call.1} parent=0 // pred_check
    _
  $region35: #{tpu_custom_call.1} parent=0 // pred_check_branch
    %5664 = sbr.rel (0) target = $region37
  $region36: #{tpu_custom_call.1} parent=0 // pred_region
    _
  $region37: #{tpu_custom_call.1} parent=0 // pred_fallthru
    _

</llo_original>
